<compile_context>
chip_gen: v6e
topology: v6e:2x2x1
jax: 0.10.0
libtpu: 0.0.40
codegen_flags: <defaults>
</compile_context>

<pallas_src>
import functools
import math

import jax
import jax.numpy as jnp
import numpy as np
from jax.experimental import pallas as pl
from jax.experimental.pallas import tpu as pltpu

NUM_HEADS = 4          # fixed by the module (nhead=4)
LN_EPS = 1e-5          # PyTorch LayerNorm default


def _layernorm(h, w, b):
    mu = jnp.mean(h, axis=-1, keepdims=True)
    var = jnp.mean((h - mu) ** 2, axis=-1, keepdims=True)
    return (h - mu) * jax.lax.rsqrt(var + LN_EPS) * w + b


def _encoder_kernel(x_ref, in_w_ref, out_w_ref, ff1_w_ref, ff2_w_ref,
                    vec_ref, fcwb_ref, o_ref,
                    *, num_layers, num_heads, seq_len, batch):
    B, S = batch, seq_len
    x2 = x_ref[...]                                  # (B*S, E), batch-major rows
    E = x2.shape[-1]
    F = ff1_w_ref.shape[-1]
    Dh = E // num_heads
    scale = 1.0 / math.sqrt(Dh)

    for l in range(num_layers):                      # static unroll over layers
        in_w = in_w_ref[l]                           # (E, 3E)  pre-transposed
        out_w = out_w_ref[l]                         # (E, E)
        vecs = vec_ref[l]                            # (8, P) packed vectors
        in_b = vecs[0:1, 0:3 * E]                    # (1, 3E)
        ff1_b = vecs[1:2, 0:F]                       # (1, F)
        out_b = vecs[2:3, 0:E]                       # (1, E)
        ln1_w = vecs[3:4, 0:E]
        ln1_b = vecs[4:5, 0:E]
        ln2_w = vecs[5:6, 0:E]
        ln2_b = vecs[6:7, 0:E]
        ff2_b = vecs[7:8, 0:E]

        # --- multi-head self-attention (batched over B, static head loop) ---
        qkv = jnp.dot(x2, in_w, preferred_element_type=jnp.float32) + in_b
        qkv3 = qkv.reshape(B, S, 3 * E)              # split leading dim only
        heads = []
        for h in range(num_heads):
            qh = qkv3[:, :, h * Dh:(h + 1) * Dh]                     # (B, S, Dh)
            kh = qkv3[:, :, E + h * Dh:E + (h + 1) * Dh]             # (B, S, Dh)
            vh = qkv3[:, :, 2 * E + h * Dh:2 * E + (h + 1) * Dh]     # (B, S, Dh)
            s = jnp.einsum('bsd,btd->bst', qh, kh,
                           preferred_element_type=jnp.float32) * scale
            m = jnp.max(s, axis=-1, keepdims=True)
            e = jnp.exp(s - m)
            p = e / jnp.sum(e, axis=-1, keepdims=True)
            heads.append(jnp.einsum('bst,btd->bsd', p, vh,
                                    preferred_element_type=jnp.float32))
        ctx = jnp.concatenate(heads, axis=-1).reshape(B * S, E)
        attn = jnp.dot(ctx, out_w, preferred_element_type=jnp.float32) + out_b

        # dropout1 / dropout / dropout2 are identity in eval mode
        h1 = _layernorm(x2 + attn, ln1_w, ln1_b)

        # --- feed-forward: linear1 -> relu -> linear2 ---
        ff = jnp.dot(h1, ff1_w_ref[l], preferred_element_type=jnp.float32) + ff1_b
        ff = jnp.maximum(ff, 0.0)
        ff = jnp.dot(ff, ff2_w_ref[l], preferred_element_type=jnp.float32) + ff2_b
        x2 = _layernorm(h1 + ff, ln2_w, ln2_b)

    # --- fc + AdaptiveAvgPool1d(1) over batch dim + sigmoid ---
    fc_w = fcwb_ref[0:E, :]                          # (E, C)
    fc_b = fcwb_ref[E:E + 1, :]                      # (1, C)
    logits = jnp.dot(x2, fc_w, preferred_element_type=jnp.float32) + fc_b
    # rows are batch-major: row b*S + s.  Pool over batch with aligned slices.
    acc = logits[0:S, :]
    for b in range(1, B):
        acc = acc + logits[b * S:(b + 1) * S, :]
    pooled = acc * (1.0 / B)                         # (S, C)
    o_ref[...] = 1.0 / (1.0 + jnp.exp(-pooled))


def speech_classifier_forward(x, params, *, num_layers):
    S, B, E = x.shape
    C = params["fc_w"].shape[0]
    F = params["lin1_w"].shape[1]
    P = max(3 * E, F)

    # Layout plumbing in the wrapper: batch-major, flattened to 2D.
    x2 = jnp.transpose(x, (1, 0, 2)).reshape(B * S, E)

    def pad_rows(v):                                  # (L, n) -> (L, P)
        return jnp.pad(v, ((0, 0), (0, P - v.shape[1])))

    # One packed operand for all tiny per-layer vectors: sublane row r holds
    # [in_b, ff1_b, out_b, ln1_w, ln1_b, ln2_w, ln2_b, ff2_b][r], zero padded.
    vecs = jnp.stack([pad_rows(params["in_proj_b"]),
                      pad_rows(params["lin1_b"]),
                      pad_rows(params["out_proj_b"]),
                      pad_rows(params["ln1_w"]),
                      pad_rows(params["ln1_b"]),
                      pad_rows(params["ln2_w"]),
                      pad_rows(params["ln2_b"]),
                      pad_rows(params["lin2_b"])], axis=1)        # (L, 8, P)

    fcwb = jnp.concatenate([params["fc_w"].T, params["fc_b"][None, :]],
                           axis=0)                                # (E+1, C)

    # Pre-transpose all weight matrices to (in, out) so the kernel does x @ W.
    ins = [
        x2,                                               # (B*S, E)
        jnp.transpose(params["in_proj_w"], (0, 2, 1)),    # (L, E, 3E)
        jnp.transpose(params["out_proj_w"], (0, 2, 1)),   # (L, E, E)
        jnp.transpose(params["lin1_w"], (0, 2, 1)),       # (L, E, F)
        jnp.transpose(params["lin2_w"], (0, 2, 1)),       # (L, F, E)
        vecs,                                             # (L, 8, P)
        fcwb,                                             # (E+1, C)
    ]
    kernel = functools.partial(_encoder_kernel, num_layers=num_layers,
                               num_heads=NUM_HEADS, seq_len=S, batch=B)
    vmem = pl.BlockSpec(memory_space=pltpu.MemorySpace.VMEM)
    out = pl.pallas_call(
        kernel,
        out_shape=jax.ShapeDtypeStruct((S, C), jnp.float32),
        in_specs=[vmem] * len(ins),
        out_specs=vmem,
    )(*ins)
    return out[:, :, None]                                # (S, num_classes, 1)


def reference_forward(x, params, *, num_layers):
    """Pure-JAX reference mirroring the PyTorch forward (eval mode)."""
    S, B, E = x.shape
    Dh = E // NUM_HEADS
    scale = 1.0 / math.sqrt(Dh)
    h = x
    for l in range(num_layers):
        qkv = jnp.einsum("sbe,fe->sbf", h, params["in_proj_w"][l]) + params["in_proj_b"][l]
        q = qkv[..., :E].reshape(S, B, NUM_HEADS, Dh)
        k = qkv[..., E:2 * E].reshape(S, B, NUM_HEADS, Dh)
        v = qkv[..., 2 * E:].reshape(S, B, NUM_HEADS, Dh)
        sc = jnp.einsum("sbhd,tbhd->bhst", q, k) * scale
        p = jax.nn.softmax(sc, axis=-1)
        a = jnp.einsum("bhst,tbhd->sbhd", p, v).reshape(S, B, E)
        a = jnp.einsum("sbe,fe->sbf", a, params["out_proj_w"][l]) + params["out_proj_b"][l]
        h1 = _layernorm(h + a, params["ln1_w"][l], params["ln1_b"][l])
        ff = jax.nn.relu(jnp.einsum("sbe,fe->sbf", h1, params["lin1_w"][l])
                         + params["lin1_b"][l])
        ff = jnp.einsum("sbf,ef->sbe", ff, params["lin2_w"][l]) + params["lin2_b"][l]
        h = _layernorm(h1 + ff, params["ln2_w"][l], params["ln2_b"][l])
    logits = jnp.einsum("sbe,ce->sbc", h, params["fc_w"]) + params["fc_b"]
    pooled = jnp.mean(logits, axis=1)
    return jax.nn.sigmoid(pooled)[:, :, None]


def init_params(key, num_layers, E, F, C):
    """Deterministic synthetic parameters (shapes follow the nn.Module)."""
    L = num_layers
    ks = jax.random.split(key, 10)

    def w(k, shape, fan_in):
        return jax.random.normal(k, shape, jnp.float32) * (1.0 / np.sqrt(fan_in))

    def b(k, shape):
        return jax.random.normal(k, shape, jnp.float32) * 0.01

    return dict(
        in_proj_w=w(ks[0], (L, 3 * E, E), E),
        in_proj_b=b(ks[1], (L, 3 * E)),
        out_proj_w=w(ks[2], (L, E, E), E),
        out_proj_b=b(ks[3], (L, E)),
        ln1_w=jnp.ones((L, E), jnp.float32),
        ln1_b=jnp.zeros((L, E), jnp.float32),
        ln2_w=jnp.ones((L, E), jnp.float32),
        ln2_b=jnp.zeros((L, E), jnp.float32),
        lin1_w=w(ks[4], (L, F, E), E),
        lin1_b=b(ks[5], (L, F)),
        lin2_w=w(ks[6], (L, E, F), F),
        lin2_b=b(ks[7], (L, E)),
        fc_w=w(ks[8], (C, E), E),
        fc_b=b(ks[9], (C,)),
    )


if __name__ == "__main__":
    # Shapes consistent with the module: fc expects hidden_size*2 == feature_size.
    num_classes = 4
    feature_size = 32      # d_model, divisible by nhead=4
    hidden_size = 16       # with bidirectional=True -> fc in_features = 32
    num_layers = 2
    dim_feedforward = 256  # fixed by the module
    S, B = 8, 2            # (seq_len, batch)

    key = jax.random.PRNGKey(0)
    kx, kp = jax.random.split(key)
    x = jax.random.normal(kx, (S, B, feature_size), jnp.float32)
    params = init_params(kp, num_layers, feature_size, dim_feedforward, num_classes)

    out = speech_classifier_forward(x, params, num_layers=num_layers)
    out = jax.block_until_ready(out)

    ref = reference_forward(x, params, num_layers=num_layers)
    assert out.shape == (S, num_classes, 1), out.shape
    np.testing.assert_allclose(np.asarray(out), np.asarray(ref), rtol=1e-4, atol=1e-5)
    print("KERNEL_OK")
</pallas_src>

<mosaic_0001>
module attributes {stable_mosaic.version = 11 : i64} {
  func.func @_encoder_kernel(%arg0: memref<16x32xf32, #tpu.memory_space<vmem>>, %arg1: memref<2x32x96xf32, #tpu.memory_space<vmem>>, %arg2: memref<2x32x32xf32, #tpu.memory_space<vmem>>, %arg3: memref<2x32x256xf32, #tpu.memory_space<vmem>>, %arg4: memref<2x256x32xf32, #tpu.memory_space<vmem>>, %arg5: memref<2x8x256xf32, #tpu.memory_space<vmem>>, %arg6: memref<33x4xf32, #tpu.memory_space<vmem>>, %arg7: memref<8x4xf32, #tpu.memory_space<vmem>>) attributes {dimension_semantics = [], scalar_prefetch = 0 : i64, scratch_operands = 0 : i64, tpu.core_type = #tpu.core_type<tc>} {
    %c0 = arith.constant 0 : index
    %c0_0 = arith.constant 0 : index
    %0 = vector.load %arg0[%c0, %c0_0] : memref<16x32xf32, #tpu.memory_space<vmem>>, vector<16x32xf32>
    %c0_1 = arith.constant 0 : index
    %c0_2 = arith.constant 0 : index
    %c0_3 = arith.constant 0 : index
    %1 = vector.load %arg1[%c0_1, %c0_2, %c0_3] : memref<2x32x96xf32, #tpu.memory_space<vmem>>, vector<1x32x96xf32>
    %2 = vector.shape_cast %1 : vector<1x32x96xf32> to vector<32x96xf32>
    %c0_4 = arith.constant 0 : index
    %c0_5 = arith.constant 0 : index
    %c0_6 = arith.constant 0 : index
    %3 = vector.load %arg2[%c0_4, %c0_5, %c0_6] : memref<2x32x32xf32, #tpu.memory_space<vmem>>, vector<1x32x32xf32>
    %4 = vector.shape_cast %3 : vector<1x32x32xf32> to vector<32x32xf32>
    %c0_7 = arith.constant 0 : index
    %c0_8 = arith.constant 0 : index
    %c0_9 = arith.constant 0 : index
    %5 = vector.load %arg5[%c0_7, %c0_8, %c0_9] : memref<2x8x256xf32, #tpu.memory_space<vmem>>, vector<1x8x256xf32>
    %6 = vector.shape_cast %5 : vector<1x8x256xf32> to vector<8x256xf32>
    %7 = vector.extract_strided_slice %6 {offsets = [0, 0], sizes = [1, 96], strides = [1, 1]} : vector<8x256xf32> to vector<1x96xf32>
    %8 = vector.extract_strided_slice %6 {offsets = [1, 0], sizes = [1, 256], strides = [1, 1]} : vector<8x256xf32> to vector<1x256xf32>
    %9 = vector.extract_strided_slice %6 {offsets = [2, 0], sizes = [1, 32], strides = [1, 1]} : vector<8x256xf32> to vector<1x32xf32>
    %10 = vector.extract_strided_slice %6 {offsets = [3, 0], sizes = [1, 32], strides = [1, 1]} : vector<8x256xf32> to vector<1x32xf32>
    %11 = vector.extract_strided_slice %6 {offsets = [4, 0], sizes = [1, 32], strides = [1, 1]} : vector<8x256xf32> to vector<1x32xf32>
    %12 = vector.extract_strided_slice %6 {offsets = [5, 0], sizes = [1, 32], strides = [1, 1]} : vector<8x256xf32> to vector<1x32xf32>
    %13 = vector.extract_strided_slice %6 {offsets = [6, 0], sizes = [1, 32], strides = [1, 1]} : vector<8x256xf32> to vector<1x32xf32>
    %14 = vector.extract_strided_slice %6 {offsets = [7, 0], sizes = [1, 32], strides = [1, 1]} : vector<8x256xf32> to vector<1x32xf32>
    %cst = arith.constant dense<0.000000e+00> : vector<16x96xf32>
    %15 = tpu.matmul %0, %2, %cst {dimension_numbers = #tpu.dot_dimension_numbers<[1], [0], [0], [1], [0, 0, 1, 1], [], []>} : vector<16x32xf32>, vector<32x96xf32>, vector<16x96xf32> -> vector<16x96xf32>
    %16 = vector.broadcast %7 : vector<1x96xf32> to vector<16x96xf32>
    %17 = arith.addf %15, %16 : vector<16x96xf32>
    %18 = vector.shape_cast %17 : vector<16x96xf32> to vector<2x8x96xf32>
    %19 = vector.extract_strided_slice %18 {offsets = [0, 0, 0], sizes = [2, 8, 8], strides = [1, 1, 1]} : vector<2x8x96xf32> to vector<2x8x8xf32>
    %20 = vector.extract_strided_slice %18 {offsets = [0, 0, 32], sizes = [2, 8, 8], strides = [1, 1, 1]} : vector<2x8x96xf32> to vector<2x8x8xf32>
    %21 = vector.extract_strided_slice %18 {offsets = [0, 0, 64], sizes = [2, 8, 8], strides = [1, 1, 1]} : vector<2x8x96xf32> to vector<2x8x8xf32>
    "tpu.trace_start"() <{level = 10 : i32, message = "bsd,btd->bst"}> : () -> ()
    %cst_10 = arith.constant dense<0.000000e+00> : vector<2x8x8xf32>
    %22 = tpu.matmul %19, %20, %cst_10 {dimension_numbers = #tpu.dot_dimension_numbers<[2], [2], [1], [1], [0, 0, 0, 1, 1, 1], [0], [0]>} : vector<2x8x8xf32>, vector<2x8x8xf32>, vector<2x8x8xf32> -> vector<2x8x8xf32>
    "tpu.trace_stop"() : () -> ()
    %cst_11 = arith.constant 0.353553385 : f32
    %23 = vector.broadcast %cst_11 : f32 to vector<2x8x8xf32>
    %24 = arith.mulf %22, %23 : vector<2x8x8xf32>
    %cst_12 = arith.constant dense<0xFF800000> : vector<2x8xf32>
    %25 = vector.multi_reduction <maximumf>, %24, %cst_12 [2] : vector<2x8x8xf32> to vector<2x8xf32>
    %26 = vector.shape_cast %25 : vector<2x8xf32> to vector<2x8x1xf32>
    %27 = vector.broadcast %26 : vector<2x8x1xf32> to vector<2x8x8xf32>
    %28 = arith.subf %24, %27 : vector<2x8x8xf32>
    %29 = math.exp %28 : vector<2x8x8xf32>
    %cst_13 = arith.constant dense<0.000000e+00> : vector<2x8xf32>
    %30 = vector.multi_reduction <add>, %29, %cst_13 [2] : vector<2x8x8xf32> to vector<2x8xf32>
    %31 = vector.shape_cast %30 : vector<2x8xf32> to vector<2x8x1xf32>
    %32 = vector.broadcast %31 : vector<2x8x1xf32> to vector<2x8x8xf32>
    %33 = arith.divf %29, %32 : vector<2x8x8xf32>
    "tpu.trace_start"() <{level = 10 : i32, message = "bst,btd->bsd"}> : () -> ()
    %cst_14 = arith.constant dense<0.000000e+00> : vector<2x8x8xf32>
    %34 = tpu.matmul %33, %21, %cst_14 {dimension_numbers = #tpu.dot_dimension_numbers<[2], [1], [1], [2], [0, 0, 0, 1, 1, 2], [0], [0]>} : vector<2x8x8xf32>, vector<2x8x8xf32>, vector<2x8x8xf32> -> vector<2x8x8xf32>
    "tpu.trace_stop"() : () -> ()
    %35 = vector.extract_strided_slice %18 {offsets = [0, 0, 8], sizes = [2, 8, 8], strides = [1, 1, 1]} : vector<2x8x96xf32> to vector<2x8x8xf32>
    %36 = vector.extract_strided_slice %18 {offsets = [0, 0, 40], sizes = [2, 8, 8], strides = [1, 1, 1]} : vector<2x8x96xf32> to vector<2x8x8xf32>
    %37 = vector.extract_strided_slice %18 {offsets = [0, 0, 72], sizes = [2, 8, 8], strides = [1, 1, 1]} : vector<2x8x96xf32> to vector<2x8x8xf32>
    "tpu.trace_start"() <{level = 10 : i32, message = "bsd,btd->bst"}> : () -> ()
    %cst_15 = arith.constant dense<0.000000e+00> : vector<2x8x8xf32>
    %38 = tpu.matmul %35, %36, %cst_15 {dimension_numbers = #tpu.dot_dimension_numbers<[2], [2], [1], [1], [0, 0, 0, 1, 1, 1], [0], [0]>} : vector<2x8x8xf32>, vector<2x8x8xf32>, vector<2x8x8xf32> -> vector<2x8x8xf32>
    "tpu.trace_stop"() : () -> ()
    %cst_16 = arith.constant 0.353553385 : f32
    %39 = vector.broadcast %cst_16 : f32 to vector<2x8x8xf32>
    %40 = arith.mulf %38, %39 : vector<2x8x8xf32>
    %cst_17 = arith.constant dense<0xFF800000> : vector<2x8xf32>
    %41 = vector.multi_reduction <maximumf>, %40, %cst_17 [2] : vector<2x8x8xf32> to vector<2x8xf32>
    %42 = vector.shape_cast %41 : vector<2x8xf32> to vector<2x8x1xf32>
    %43 = vector.broadcast %42 : vector<2x8x1xf32> to vector<2x8x8xf32>
    %44 = arith.subf %40, %43 : vector<2x8x8xf32>
    %45 = math.exp %44 : vector<2x8x8xf32>
    %cst_18 = arith.constant dense<0.000000e+00> : vector<2x8xf32>
    %46 = vector.multi_reduction <add>, %45, %cst_18 [2] : vector<2x8x8xf32> to vector<2x8xf32>
    %47 = vector.shape_cast %46 : vector<2x8xf32> to vector<2x8x1xf32>
    %48 = vector.broadcast %47 : vector<2x8x1xf32> to vector<2x8x8xf32>
    %49 = arith.divf %45, %48 : vector<2x8x8xf32>
    "tpu.trace_start"() <{level = 10 : i32, message = "bst,btd->bsd"}> : () -> ()
    %cst_19 = arith.constant dense<0.000000e+00> : vector<2x8x8xf32>
    %50 = tpu.matmul %49, %37, %cst_19 {dimension_numbers = #tpu.dot_dimension_numbers<[2], [1], [1], [2], [0, 0, 0, 1, 1, 2], [0], [0]>} : vector<2x8x8xf32>, vector<2x8x8xf32>, vector<2x8x8xf32> -> vector<2x8x8xf32>
    "tpu.trace_stop"() : () -> ()
    %51 = vector.extract_strided_slice %18 {offsets = [0, 0, 16], sizes = [2, 8, 8], strides = [1, 1, 1]} : vector<2x8x96xf32> to vector<2x8x8xf32>
    %52 = vector.extract_strided_slice %18 {offsets = [0, 0, 48], sizes = [2, 8, 8], strides = [1, 1, 1]} : vector<2x8x96xf32> to vector<2x8x8xf32>
    %53 = vector.extract_strided_slice %18 {offsets = [0, 0, 80], sizes = [2, 8, 8], strides = [1, 1, 1]} : vector<2x8x96xf32> to vector<2x8x8xf32>
    "tpu.trace_start"() <{level = 10 : i32, message = "bsd,btd->bst"}> : () -> ()
    %cst_20 = arith.constant dense<0.000000e+00> : vector<2x8x8xf32>
    %54 = tpu.matmul %51, %52, %cst_20 {dimension_numbers = #tpu.dot_dimension_numbers<[2], [2], [1], [1], [0, 0, 0, 1, 1, 1], [0], [0]>} : vector<2x8x8xf32>, vector<2x8x8xf32>, vector<2x8x8xf32> -> vector<2x8x8xf32>
    "tpu.trace_stop"() : () -> ()
    %cst_21 = arith.constant 0.353553385 : f32
    %55 = vector.broadcast %cst_21 : f32 to vector<2x8x8xf32>
    %56 = arith.mulf %54, %55 : vector<2x8x8xf32>
    %cst_22 = arith.constant dense<0xFF800000> : vector<2x8xf32>
    %57 = vector.multi_reduction <maximumf>, %56, %cst_22 [2] : vector<2x8x8xf32> to vector<2x8xf32>
    %58 = vector.shape_cast %57 : vector<2x8xf32> to vector<2x8x1xf32>
    %59 = vector.broadcast %58 : vector<2x8x1xf32> to vector<2x8x8xf32>
    %60 = arith.subf %56, %59 : vector<2x8x8xf32>
    %61 = math.exp %60 : vector<2x8x8xf32>
    %cst_23 = arith.constant dense<0.000000e+00> : vector<2x8xf32>
    %62 = vector.multi_reduction <add>, %61, %cst_23 [2] : vector<2x8x8xf32> to vector<2x8xf32>
    %63 = vector.shape_cast %62 : vector<2x8xf32> to vector<2x8x1xf32>
    %64 = vector.broadcast %63 : vector<2x8x1xf32> to vector<2x8x8xf32>
    %65 = arith.divf %61, %64 : vector<2x8x8xf32>
    "tpu.trace_start"() <{level = 10 : i32, message = "bst,btd->bsd"}> : () -> ()
    %cst_24 = arith.constant dense<0.000000e+00> : vector<2x8x8xf32>
    %66 = tpu.matmul %65, %53, %cst_24 {dimension_numbers = #tpu.dot_dimension_numbers<[2], [1], [1], [2], [0, 0, 0, 1, 1, 2], [0], [0]>} : vector<2x8x8xf32>, vector<2x8x8xf32>, vector<2x8x8xf32> -> vector<2x8x8xf32>
    "tpu.trace_stop"() : () -> ()
    %67 = vector.extract_strided_slice %18 {offsets = [0, 0, 24], sizes = [2, 8, 8], strides = [1, 1, 1]} : vector<2x8x96xf32> to vector<2x8x8xf32>
    %68 = vector.extract_strided_slice %18 {offsets = [0, 0, 56], sizes = [2, 8, 8], strides = [1, 1, 1]} : vector<2x8x96xf32> to vector<2x8x8xf32>
    %69 = vector.extract_strided_slice %18 {offsets = [0, 0, 88], sizes = [2, 8, 8], strides = [1, 1, 1]} : vector<2x8x96xf32> to vector<2x8x8xf32>
    "tpu.trace_start"() <{level = 10 : i32, message = "bsd,btd->bst"}> : () -> ()
    %cst_25 = arith.constant dense<0.000000e+00> : vector<2x8x8xf32>
    %70 = tpu.matmul %67, %68, %cst_25 {dimension_numbers = #tpu.dot_dimension_numbers<[2], [2], [1], [1], [0, 0, 0, 1, 1, 1], [0], [0]>} : vector<2x8x8xf32>, vector<2x8x8xf32>, vector<2x8x8xf32> -> vector<2x8x8xf32>
    "tpu.trace_stop"() : () -> ()
    %cst_26 = arith.constant 0.353553385 : f32
    %71 = vector.broadcast %cst_26 : f32 to vector<2x8x8xf32>
    %72 = arith.mulf %70, %71 : vector<2x8x8xf32>
    %cst_27 = arith.constant dense<0xFF800000> : vector<2x8xf32>
    %73 = vector.multi_reduction <maximumf>, %72, %cst_27 [2] : vector<2x8x8xf32> to vector<2x8xf32>
    %74 = vector.shape_cast %73 : vector<2x8xf32> to vector<2x8x1xf32>
    %75 = vector.broadcast %74 : vector<2x8x1xf32> to vector<2x8x8xf32>
    %76 = arith.subf %72, %75 : vector<2x8x8xf32>
    %77 = math.exp %76 : vector<2x8x8xf32>
    %cst_28 = arith.constant dense<0.000000e+00> : vector<2x8xf32>
    %78 = vector.multi_reduction <add>, %77, %cst_28 [2] : vector<2x8x8xf32> to vector<2x8xf32>
    %79 = vector.shape_cast %78 : vector<2x8xf32> to vector<2x8x1xf32>
    %80 = vector.broadcast %79 : vector<2x8x1xf32> to vector<2x8x8xf32>
    %81 = arith.divf %77, %80 : vector<2x8x8xf32>
    "tpu.trace_start"() <{level = 10 : i32, message = "bst,btd->bsd"}> : () -> ()
    %cst_29 = arith.constant dense<0.000000e+00> : vector<2x8x8xf32>
    %82 = tpu.matmul %81, %69, %cst_29 {dimension_numbers = #tpu.dot_dimension_numbers<[2], [1], [1], [2], [0, 0, 0, 1, 1, 2], [0], [0]>} : vector<2x8x8xf32>, vector<2x8x8xf32>, vector<2x8x8xf32> -> vector<2x8x8xf32>
    "tpu.trace_stop"() : () -> ()
    %83 = tpu.concatenate %34, %50, %66, %82 in 2 : vector<2x8x8xf32>, vector<2x8x8xf32>, vector<2x8x8xf32>, vector<2x8x8xf32> -> vector<2x8x32xf32>
    %84 = vector.shape_cast %83 : vector<2x8x32xf32> to vector<16x32xf32>
    %cst_30 = arith.constant dense<0.000000e+00> : vector<16x32xf32>
    %85 = tpu.matmul %84, %4, %cst_30 {dimension_numbers = #tpu.dot_dimension_numbers<[1], [0], [0], [1], [0, 0, 1, 1], [], []>} : vector<16x32xf32>, vector<32x32xf32>, vector<16x32xf32> -> vector<16x32xf32>
    %86 = vector.broadcast %9 : vector<1x32xf32> to vector<16x32xf32>
    %87 = arith.addf %85, %86 : vector<16x32xf32>
    %88 = arith.addf %0, %87 : vector<16x32xf32>
    %cst_31 = arith.constant dense<0.000000e+00> : vector<16xf32>
    %89 = vector.multi_reduction <add>, %88, %cst_31 [1] : vector<16x32xf32> to vector<16xf32>
    %90 = vector.shape_cast %89 : vector<16xf32> to vector<16x1xf32>
    %cst_32 = arith.constant 3.200000e+01 : f32
    %91 = vector.broadcast %cst_32 : f32 to vector<16x1xf32>
    %92 = arith.divf %90, %91 : vector<16x1xf32>
    %93 = vector.broadcast %92 : vector<16x1xf32> to vector<16x32xf32>
    %94 = arith.subf %88, %93 : vector<16x32xf32>
    %95 = arith.mulf %94, %94 : vector<16x32xf32>
    %cst_33 = arith.constant dense<0.000000e+00> : vector<16xf32>
    %96 = vector.multi_reduction <add>, %95, %cst_33 [1] : vector<16x32xf32> to vector<16xf32>
    %97 = vector.shape_cast %96 : vector<16xf32> to vector<16x1xf32>
    %cst_34 = arith.constant 3.200000e+01 : f32
    %98 = vector.broadcast %cst_34 : f32 to vector<16x1xf32>
    %99 = arith.divf %97, %98 : vector<16x1xf32>
    %100 = vector.broadcast %92 : vector<16x1xf32> to vector<16x32xf32>
    %101 = arith.subf %88, %100 : vector<16x32xf32>
    %cst_35 = arith.constant 9.99999974E-6 : f32
    %102 = vector.broadcast %cst_35 : f32 to vector<16x1xf32>
    %103 = arith.addf %99, %102 : vector<16x1xf32>
    %104 = math.rsqrt %103 : vector<16x1xf32>
    %105 = vector.broadcast %104 : vector<16x1xf32> to vector<16x32xf32>
    %106 = arith.mulf %101, %105 : vector<16x32xf32>
    %107 = vector.broadcast %10 : vector<1x32xf32> to vector<16x32xf32>
    %108 = arith.mulf %106, %107 : vector<16x32xf32>
    %109 = vector.broadcast %11 : vector<1x32xf32> to vector<16x32xf32>
    %110 = arith.addf %108, %109 : vector<16x32xf32>
    %c0_36 = arith.constant 0 : index
    %c0_37 = arith.constant 0 : index
    %c0_38 = arith.constant 0 : index
    %111 = vector.load %arg3[%c0_36, %c0_37, %c0_38] : memref<2x32x256xf32, #tpu.memory_space<vmem>>, vector<1x32x256xf32>
    %112 = vector.shape_cast %111 : vector<1x32x256xf32> to vector<32x256xf32>
    %cst_39 = arith.constant dense<0.000000e+00> : vector<16x256xf32>
    %113 = tpu.matmul %110, %112, %cst_39 {dimension_numbers = #tpu.dot_dimension_numbers<[1], [0], [0], [1], [0, 0, 1, 1], [], []>} : vector<16x32xf32>, vector<32x256xf32>, vector<16x256xf32> -> vector<16x256xf32>
    %114 = vector.broadcast %8 : vector<1x256xf32> to vector<16x256xf32>
    %115 = arith.addf %113, %114 : vector<16x256xf32>
    %cst_40 = arith.constant 0.000000e+00 : f32
    %116 = vector.broadcast %cst_40 : f32 to vector<16x256xf32>
    %117 = arith.maximumf %115, %116 : vector<16x256xf32>
    %c0_41 = arith.constant 0 : index
    %c0_42 = arith.constant 0 : index
    %c0_43 = arith.constant 0 : index
    %118 = vector.load %arg4[%c0_41, %c0_42, %c0_43] : memref<2x256x32xf32, #tpu.memory_space<vmem>>, vector<1x256x32xf32>
    %119 = vector.shape_cast %118 : vector<1x256x32xf32> to vector<256x32xf32>
    %cst_44 = arith.constant dense<0.000000e+00> : vector<16x32xf32>
    %120 = tpu.matmul %117, %119, %cst_44 {dimension_numbers = #tpu.dot_dimension_numbers<[1], [0], [0], [1], [0, 0, 1, 1], [], []>} : vector<16x256xf32>, vector<256x32xf32>, vector<16x32xf32> -> vector<16x32xf32>
    %121 = vector.broadcast %14 : vector<1x32xf32> to vector<16x32xf32>
    %122 = arith.addf %120, %121 : vector<16x32xf32>
    %123 = arith.addf %110, %122 : vector<16x32xf32>
    %cst_45 = arith.constant dense<0.000000e+00> : vector<16xf32>
    %124 = vector.multi_reduction <add>, %123, %cst_45 [1] : vector<16x32xf32> to vector<16xf32>
    %125 = vector.shape_cast %124 : vector<16xf32> to vector<16x1xf32>
    %cst_46 = arith.constant 3.200000e+01 : f32
    %126 = vector.broadcast %cst_46 : f32 to vector<16x1xf32>
    %127 = arith.divf %125, %126 : vector<16x1xf32>
    %128 = vector.broadcast %127 : vector<16x1xf32> to vector<16x32xf32>
    %129 = arith.subf %123, %128 : vector<16x32xf32>
    %130 = arith.mulf %129, %129 : vector<16x32xf32>
    %cst_47 = arith.constant dense<0.000000e+00> : vector<16xf32>
    %131 = vector.multi_reduction <add>, %130, %cst_47 [1] : vector<16x32xf32> to vector<16xf32>
    %132 = vector.shape_cast %131 : vector<16xf32> to vector<16x1xf32>
    %cst_48 = arith.constant 3.200000e+01 : f32
    %133 = vector.broadcast %cst_48 : f32 to vector<16x1xf32>
    %134 = arith.divf %132, %133 : vector<16x1xf32>
    %135 = vector.broadcast %127 : vector<16x1xf32> to vector<16x32xf32>
    %136 = arith.subf %123, %135 : vector<16x32xf32>
    %cst_49 = arith.constant 9.99999974E-6 : f32
    %137 = vector.broadcast %cst_49 : f32 to vector<16x1xf32>
    %138 = arith.addf %134, %137 : vector<16x1xf32>
    %139 = math.rsqrt %138 : vector<16x1xf32>
    %140 = vector.broadcast %139 : vector<16x1xf32> to vector<16x32xf32>
    %141 = arith.mulf %136, %140 : vector<16x32xf32>
    %142 = vector.broadcast %12 : vector<1x32xf32> to vector<16x32xf32>
    %143 = arith.mulf %141, %142 : vector<16x32xf32>
    %144 = vector.broadcast %13 : vector<1x32xf32> to vector<16x32xf32>
    %145 = arith.addf %143, %144 : vector<16x32xf32>
    %c1 = arith.constant 1 : index
    %c0_50 = arith.constant 0 : index
    %c0_51 = arith.constant 0 : index
    %146 = vector.load %arg1[%c1, %c0_50, %c0_51] : memref<2x32x96xf32, #tpu.memory_space<vmem>>, vector<1x32x96xf32>
    %147 = vector.shape_cast %146 : vector<1x32x96xf32> to vector<32x96xf32>
    %c1_52 = arith.constant 1 : index
    %c0_53 = arith.constant 0 : index
    %c0_54 = arith.constant 0 : index
    %148 = vector.load %arg2[%c1_52, %c0_53, %c0_54] : memref<2x32x32xf32, #tpu.memory_space<vmem>>, vector<1x32x32xf32>
    %149 = vector.shape_cast %148 : vector<1x32x32xf32> to vector<32x32xf32>
    %c1_55 = arith.constant 1 : index
    %c0_56 = arith.constant 0 : index
    %c0_57 = arith.constant 0 : index
    %150 = vector.load %arg5[%c1_55, %c0_56, %c0_57] : memref<2x8x256xf32, #tpu.memory_space<vmem>>, vector<1x8x256xf32>
    %151 = vector.shape_cast %150 : vector<1x8x256xf32> to vector<8x256xf32>
    %152 = vector.extract_strided_slice %151 {offsets = [0, 0], sizes = [1, 96], strides = [1, 1]} : vector<8x256xf32> to vector<1x96xf32>
    %153 = vector.extract_strided_slice %151 {offsets = [1, 0], sizes = [1, 256], strides = [1, 1]} : vector<8x256xf32> to vector<1x256xf32>
    %154 = vector.extract_strided_slice %151 {offsets = [2, 0], sizes = [1, 32], strides = [1, 1]} : vector<8x256xf32> to vector<1x32xf32>
    %155 = vector.extract_strided_slice %151 {offsets = [3, 0], sizes = [1, 32], strides = [1, 1]} : vector<8x256xf32> to vector<1x32xf32>
    %156 = vector.extract_strided_slice %151 {offsets = [4, 0], sizes = [1, 32], strides = [1, 1]} : vector<8x256xf32> to vector<1x32xf32>
    %157 = vector.extract_strided_slice %151 {offsets = [5, 0], sizes = [1, 32], strides = [1, 1]} : vector<8x256xf32> to vector<1x32xf32>
    %158 = vector.extract_strided_slice %151 {offsets = [6, 0], sizes = [1, 32], strides = [1, 1]} : vector<8x256xf32> to vector<1x32xf32>
    %159 = vector.extract_strided_slice %151 {offsets = [7, 0], sizes = [1, 32], strides = [1, 1]} : vector<8x256xf32> to vector<1x32xf32>
    %cst_58 = arith.constant dense<0.000000e+00> : vector<16x96xf32>
    %160 = tpu.matmul %145, %147, %cst_58 {dimension_numbers = #tpu.dot_dimension_numbers<[1], [0], [0], [1], [0, 0, 1, 1], [], []>} : vector<16x32xf32>, vector<32x96xf32>, vector<16x96xf32> -> vector<16x96xf32>
    %161 = vector.broadcast %152 : vector<1x96xf32> to vector<16x96xf32>
    %162 = arith.addf %160, %161 : vector<16x96xf32>
    %163 = vector.shape_cast %162 : vector<16x96xf32> to vector<2x8x96xf32>
    %164 = vector.extract_strided_slice %163 {offsets = [0, 0, 0], sizes = [2, 8, 8], strides = [1, 1, 1]} : vector<2x8x96xf32> to vector<2x8x8xf32>
    %165 = vector.extract_strided_slice %163 {offsets = [0, 0, 32], sizes = [2, 8, 8], strides = [1, 1, 1]} : vector<2x8x96xf32> to vector<2x8x8xf32>
    %166 = vector.extract_strided_slice %163 {offsets = [0, 0, 64], sizes = [2, 8, 8], strides = [1, 1, 1]} : vector<2x8x96xf32> to vector<2x8x8xf32>
    "tpu.trace_start"() <{level = 10 : i32, message = "bsd,btd->bst"}> : () -> ()
    %cst_59 = arith.constant dense<0.000000e+00> : vector<2x8x8xf32>
    %167 = tpu.matmul %164, %165, %cst_59 {dimension_numbers = #tpu.dot_dimension_numbers<[2], [2], [1], [1], [0, 0, 0, 1, 1, 1], [0], [0]>} : vector<2x8x8xf32>, vector<2x8x8xf32>, vector<2x8x8xf32> -> vector<2x8x8xf32>
    "tpu.trace_stop"() : () -> ()
    %cst_60 = arith.constant 0.353553385 : f32
    %168 = vector.broadcast %cst_60 : f32 to vector<2x8x8xf32>
    %169 = arith.mulf %167, %168 : vector<2x8x8xf32>
    %cst_61 = arith.constant dense<0xFF800000> : vector<2x8xf32>
    %170 = vector.multi_reduction <maximumf>, %169, %cst_61 [2] : vector<2x8x8xf32> to vector<2x8xf32>
    %171 = vector.shape_cast %170 : vector<2x8xf32> to vector<2x8x1xf32>
    %172 = vector.broadcast %171 : vector<2x8x1xf32> to vector<2x8x8xf32>
    %173 = arith.subf %169, %172 : vector<2x8x8xf32>
    %174 = math.exp %173 : vector<2x8x8xf32>
    %cst_62 = arith.constant dense<0.000000e+00> : vector<2x8xf32>
    %175 = vector.multi_reduction <add>, %174, %cst_62 [2] : vector<2x8x8xf32> to vector<2x8xf32>
    %176 = vector.shape_cast %175 : vector<2x8xf32> to vector<2x8x1xf32>
    %177 = vector.broadcast %176 : vector<2x8x1xf32> to vector<2x8x8xf32>
    %178 = arith.divf %174, %177 : vector<2x8x8xf32>
    "tpu.trace_start"() <{level = 10 : i32, message = "bst,btd->bsd"}> : () -> ()
    %cst_63 = arith.constant dense<0.000000e+00> : vector<2x8x8xf32>
    %179 = tpu.matmul %178, %166, %cst_63 {dimension_numbers = #tpu.dot_dimension_numbers<[2], [1], [1], [2], [0, 0, 0, 1, 1, 2], [0], [0]>} : vector<2x8x8xf32>, vector<2x8x8xf32>, vector<2x8x8xf32> -> vector<2x8x8xf32>
    "tpu.trace_stop"() : () -> ()
    %180 = vector.extract_strided_slice %163 {offsets = [0, 0, 8], sizes = [2, 8, 8], strides = [1, 1, 1]} : vector<2x8x96xf32> to vector<2x8x8xf32>
    %181 = vector.extract_strided_slice %163 {offsets = [0, 0, 40], sizes = [2, 8, 8], strides = [1, 1, 1]} : vector<2x8x96xf32> to vector<2x8x8xf32>
    %182 = vector.extract_strided_slice %163 {offsets = [0, 0, 72], sizes = [2, 8, 8], strides = [1, 1, 1]} : vector<2x8x96xf32> to vector<2x8x8xf32>
    "tpu.trace_start"() <{level = 10 : i32, message = "bsd,btd->bst"}> : () -> ()
    %cst_64 = arith.constant dense<0.000000e+00> : vector<2x8x8xf32>
    %183 = tpu.matmul %180, %181, %cst_64 {dimension_numbers = #tpu.dot_dimension_numbers<[2], [2], [1], [1], [0, 0, 0, 1, 1, 1], [0], [0]>} : vector<2x8x8xf32>, vector<2x8x8xf32>, vector<2x8x8xf32> -> vector<2x8x8xf32>
    "tpu.trace_stop"() : () -> ()
    %cst_65 = arith.constant 0.353553385 : f32
    %184 = vector.broadcast %cst_65 : f32 to vector<2x8x8xf32>
    %185 = arith.mulf %183, %184 : vector<2x8x8xf32>
    %cst_66 = arith.constant dense<0xFF800000> : vector<2x8xf32>
    %186 = vector.multi_reduction <maximumf>, %185, %cst_66 [2] : vector<2x8x8xf32> to vector<2x8xf32>
    %187 = vector.shape_cast %186 : vector<2x8xf32> to vector<2x8x1xf32>
    %188 = vector.broadcast %187 : vector<2x8x1xf32> to vector<2x8x8xf32>
    %189 = arith.subf %185, %188 : vector<2x8x8xf32>
    %190 = math.exp %189 : vector<2x8x8xf32>
    %cst_67 = arith.constant dense<0.000000e+00> : vector<2x8xf32>
    %191 = vector.multi_reduction <add>, %190, %cst_67 [2] : vector<2x8x8xf32> to vector<2x8xf32>
    %192 = vector.shape_cast %191 : vector<2x8xf32> to vector<2x8x1xf32>
    %193 = vector.broadcast %192 : vector<2x8x1xf32> to vector<2x8x8xf32>
    %194 = arith.divf %190, %193 : vector<2x8x8xf32>
    "tpu.trace_start"() <{level = 10 : i32, message = "bst,btd->bsd"}> : () -> ()
    %cst_68 = arith.constant dense<0.000000e+00> : vector<2x8x8xf32>
    %195 = tpu.matmul %194, %182, %cst_68 {dimension_numbers = #tpu.dot_dimension_numbers<[2], [1], [1], [2], [0, 0, 0, 1, 1, 2], [0], [0]>} : vector<2x8x8xf32>, vector<2x8x8xf32>, vector<2x8x8xf32> -> vector<2x8x8xf32>
    "tpu.trace_stop"() : () -> ()
    %196 = vector.extract_strided_slice %163 {offsets = [0, 0, 16], sizes = [2, 8, 8], strides = [1, 1, 1]} : vector<2x8x96xf32> to vector<2x8x8xf32>
    %197 = vector.extract_strided_slice %163 {offsets = [0, 0, 48], sizes = [2, 8, 8], strides = [1, 1, 1]} : vector<2x8x96xf32> to vector<2x8x8xf32>
    %198 = vector.extract_strided_slice %163 {offsets = [0, 0, 80], sizes = [2, 8, 8], strides = [1, 1, 1]} : vector<2x8x96xf32> to vector<2x8x8xf32>
    "tpu.trace_start"() <{level = 10 : i32, message = "bsd,btd->bst"}> : () -> ()
    %cst_69 = arith.constant dense<0.000000e+00> : vector<2x8x8xf32>
    %199 = tpu.matmul %196, %197, %cst_69 {dimension_numbers = #tpu.dot_dimension_numbers<[2], [2], [1], [1], [0, 0, 0, 1, 1, 1], [0], [0]>} : vector<2x8x8xf32>, vector<2x8x8xf32>, vector<2x8x8xf32> -> vector<2x8x8xf32>
    "tpu.trace_stop"() : () -> ()
    %cst_70 = arith.constant 0.353553385 : f32
    %200 = vector.broadcast %cst_70 : f32 to vector<2x8x8xf32>
    %201 = arith.mulf %199, %200 : vector<2x8x8xf32>
    %cst_71 = arith.constant dense<0xFF800000> : vector<2x8xf32>
    %202 = vector.multi_reduction <maximumf>, %201, %cst_71 [2] : vector<2x8x8xf32> to vector<2x8xf32>
    %203 = vector.shape_cast %202 : vector<2x8xf32> to vector<2x8x1xf32>
    %204 = vector.broadcast %203 : vector<2x8x1xf32> to vector<2x8x8xf32>
    %205 = arith.subf %201, %204 : vector<2x8x8xf32>
    %206 = math.exp %205 : vector<2x8x8xf32>
    %cst_72 = arith.constant dense<0.000000e+00> : vector<2x8xf32>
    %207 = vector.multi_reduction <add>, %206, %cst_72 [2] : vector<2x8x8xf32> to vector<2x8xf32>
    %208 = vector.shape_cast %207 : vector<2x8xf32> to vector<2x8x1xf32>
    %209 = vector.broadcast %208 : vector<2x8x1xf32> to vector<2x8x8xf32>
    %210 = arith.divf %206, %209 : vector<2x8x8xf32>
    "tpu.trace_start"() <{level = 10 : i32, message = "bst,btd->bsd"}> : () -> ()
    %cst_73 = arith.constant dense<0.000000e+00> : vector<2x8x8xf32>
    %211 = tpu.matmul %210, %198, %cst_73 {dimension_numbers = #tpu.dot_dimension_numbers<[2], [1], [1], [2], [0, 0, 0, 1, 1, 2], [0], [0]>} : vector<2x8x8xf32>, vector<2x8x8xf32>, vector<2x8x8xf32> -> vector<2x8x8xf32>
    "tpu.trace_stop"() : () -> ()
    %212 = vector.extract_strided_slice %163 {offsets = [0, 0, 24], sizes = [2, 8, 8], strides = [1, 1, 1]} : vector<2x8x96xf32> to vector<2x8x8xf32>
    %213 = vector.extract_strided_slice %163 {offsets = [0, 0, 56], sizes = [2, 8, 8], strides = [1, 1, 1]} : vector<2x8x96xf32> to vector<2x8x8xf32>
    %214 = vector.extract_strided_slice %163 {offsets = [0, 0, 88], sizes = [2, 8, 8], strides = [1, 1, 1]} : vector<2x8x96xf32> to vector<2x8x8xf32>
    "tpu.trace_start"() <{level = 10 : i32, message = "bsd,btd->bst"}> : () -> ()
    %cst_74 = arith.constant dense<0.000000e+00> : vector<2x8x8xf32>
    %215 = tpu.matmul %212, %213, %cst_74 {dimension_numbers = #tpu.dot_dimension_numbers<[2], [2], [1], [1], [0, 0, 0, 1, 1, 1], [0], [0]>} : vector<2x8x8xf32>, vector<2x8x8xf32>, vector<2x8x8xf32> -> vector<2x8x8xf32>
    "tpu.trace_stop"() : () -> ()
    %cst_75 = arith.constant 0.353553385 : f32
    %216 = vector.broadcast %cst_75 : f32 to vector<2x8x8xf32>
    %217 = arith.mulf %215, %216 : vector<2x8x8xf32>
    %cst_76 = arith.constant dense<0xFF800000> : vector<2x8xf32>
    %218 = vector.multi_reduction <maximumf>, %217, %cst_76 [2] : vector<2x8x8xf32> to vector<2x8xf32>
    %219 = vector.shape_cast %218 : vector<2x8xf32> to vector<2x8x1xf32>
    %220 = vector.broadcast %219 : vector<2x8x1xf32> to vector<2x8x8xf32>
    %221 = arith.subf %217, %220 : vector<2x8x8xf32>
    %222 = math.exp %221 : vector<2x8x8xf32>
    %cst_77 = arith.constant dense<0.000000e+00> : vector<2x8xf32>
    %223 = vector.multi_reduction <add>, %222, %cst_77 [2] : vector<2x8x8xf32> to vector<2x8xf32>
    %224 = vector.shape_cast %223 : vector<2x8xf32> to vector<2x8x1xf32>
    %225 = vector.broadcast %224 : vector<2x8x1xf32> to vector<2x8x8xf32>
    %226 = arith.divf %222, %225 : vector<2x8x8xf32>
    "tpu.trace_start"() <{level = 10 : i32, message = "bst,btd->bsd"}> : () -> ()
    %cst_78 = arith.constant dense<0.000000e+00> : vector<2x8x8xf32>
    %227 = tpu.matmul %226, %214, %cst_78 {dimension_numbers = #tpu.dot_dimension_numbers<[2], [1], [1], [2], [0, 0, 0, 1, 1, 2], [0], [0]>} : vector<2x8x8xf32>, vector<2x8x8xf32>, vector<2x8x8xf32> -> vector<2x8x8xf32>
    "tpu.trace_stop"() : () -> ()
    %228 = tpu.concatenate %179, %195, %211, %227 in 2 : vector<2x8x8xf32>, vector<2x8x8xf32>, vector<2x8x8xf32>, vector<2x8x8xf32> -> vector<2x8x32xf32>
    %229 = vector.shape_cast %228 : vector<2x8x32xf32> to vector<16x32xf32>
    %cst_79 = arith.constant dense<0.000000e+00> : vector<16x32xf32>
    %230 = tpu.matmul %229, %149, %cst_79 {dimension_numbers = #tpu.dot_dimension_numbers<[1], [0], [0], [1], [0, 0, 1, 1], [], []>} : vector<16x32xf32>, vector<32x32xf32>, vector<16x32xf32> -> vector<16x32xf32>
    %231 = vector.broadcast %154 : vector<1x32xf32> to vector<16x32xf32>
    %232 = arith.addf %230, %231 : vector<16x32xf32>
    %233 = arith.addf %145, %232 : vector<16x32xf32>
    %cst_80 = arith.constant dense<0.000000e+00> : vector<16xf32>
    %234 = vector.multi_reduction <add>, %233, %cst_80 [1] : vector<16x32xf32> to vector<16xf32>
    %235 = vector.shape_cast %234 : vector<16xf32> to vector<16x1xf32>
    %cst_81 = arith.constant 3.200000e+01 : f32
    %236 = vector.broadcast %cst_81 : f32 to vector<16x1xf32>
    %237 = arith.divf %235, %236 : vector<16x1xf32>
    %238 = vector.broadcast %237 : vector<16x1xf32> to vector<16x32xf32>
    %239 = arith.subf %233, %238 : vector<16x32xf32>
    %240 = arith.mulf %239, %239 : vector<16x32xf32>
    %cst_82 = arith.constant dense<0.000000e+00> : vector<16xf32>
    %241 = vector.multi_reduction <add>, %240, %cst_82 [1] : vector<16x32xf32> to vector<16xf32>
    %242 = vector.shape_cast %241 : vector<16xf32> to vector<16x1xf32>
    %cst_83 = arith.constant 3.200000e+01 : f32
    %243 = vector.broadcast %cst_83 : f32 to vector<16x1xf32>
    %244 = arith.divf %242, %243 : vector<16x1xf32>
    %245 = vector.broadcast %237 : vector<16x1xf32> to vector<16x32xf32>
    %246 = arith.subf %233, %245 : vector<16x32xf32>
    %cst_84 = arith.constant 9.99999974E-6 : f32
    %247 = vector.broadcast %cst_84 : f32 to vector<16x1xf32>
    %248 = arith.addf %244, %247 : vector<16x1xf32>
    %249 = math.rsqrt %248 : vector<16x1xf32>
    %250 = vector.broadcast %249 : vector<16x1xf32> to vector<16x32xf32>
    %251 = arith.mulf %246, %250 : vector<16x32xf32>
    %252 = vector.broadcast %155 : vector<1x32xf32> to vector<16x32xf32>
    %253 = arith.mulf %251, %252 : vector<16x32xf32>
    %254 = vector.broadcast %156 : vector<1x32xf32> to vector<16x32xf32>
    %255 = arith.addf %253, %254 : vector<16x32xf32>
    %c1_85 = arith.constant 1 : index
    %c0_86 = arith.constant 0 : index
    %c0_87 = arith.constant 0 : index
    %256 = vector.load %arg3[%c1_85, %c0_86, %c0_87] : memref<2x32x256xf32, #tpu.memory_space<vmem>>, vector<1x32x256xf32>
    %257 = vector.shape_cast %256 : vector<1x32x256xf32> to vector<32x256xf32>
    %cst_88 = arith.constant dense<0.000000e+00> : vector<16x256xf32>
    %258 = tpu.matmul %255, %257, %cst_88 {dimension_numbers = #tpu.dot_dimension_numbers<[1], [0], [0], [1], [0, 0, 1, 1], [], []>} : vector<16x32xf32>, vector<32x256xf32>, vector<16x256xf32> -> vector<16x256xf32>
    %259 = vector.broadcast %153 : vector<1x256xf32> to vector<16x256xf32>
    %260 = arith.addf %258, %259 : vector<16x256xf32>
    %cst_89 = arith.constant 0.000000e+00 : f32
    %261 = vector.broadcast %cst_89 : f32 to vector<16x256xf32>
    %262 = arith.maximumf %260, %261 : vector<16x256xf32>
    %c1_90 = arith.constant 1 : index
    %c0_91 = arith.constant 0 : index
    %c0_92 = arith.constant 0 : index
    %263 = vector.load %arg4[%c1_90, %c0_91, %c0_92] : memref<2x256x32xf32, #tpu.memory_space<vmem>>, vector<1x256x32xf32>
    %264 = vector.shape_cast %263 : vector<1x256x32xf32> to vector<256x32xf32>
    %cst_93 = arith.constant dense<0.000000e+00> : vector<16x32xf32>
    %265 = tpu.matmul %262, %264, %cst_93 {dimension_numbers = #tpu.dot_dimension_numbers<[1], [0], [0], [1], [0, 0, 1, 1], [], []>} : vector<16x256xf32>, vector<256x32xf32>, vector<16x32xf32> -> vector<16x32xf32>
    %266 = vector.broadcast %159 : vector<1x32xf32> to vector<16x32xf32>
    %267 = arith.addf %265, %266 : vector<16x32xf32>
    %268 = arith.addf %255, %267 : vector<16x32xf32>
    %cst_94 = arith.constant dense<0.000000e+00> : vector<16xf32>
    %269 = vector.multi_reduction <add>, %268, %cst_94 [1] : vector<16x32xf32> to vector<16xf32>
    %270 = vector.shape_cast %269 : vector<16xf32> to vector<16x1xf32>
    %cst_95 = arith.constant 3.200000e+01 : f32
    %271 = vector.broadcast %cst_95 : f32 to vector<16x1xf32>
    %272 = arith.divf %270, %271 : vector<16x1xf32>
    %273 = vector.broadcast %272 : vector<16x1xf32> to vector<16x32xf32>
    %274 = arith.subf %268, %273 : vector<16x32xf32>
    %275 = arith.mulf %274, %274 : vector<16x32xf32>
    %cst_96 = arith.constant dense<0.000000e+00> : vector<16xf32>
    %276 = vector.multi_reduction <add>, %275, %cst_96 [1] : vector<16x32xf32> to vector<16xf32>
    %277 = vector.shape_cast %276 : vector<16xf32> to vector<16x1xf32>
    %cst_97 = arith.constant 3.200000e+01 : f32
    %278 = vector.broadcast %cst_97 : f32 to vector<16x1xf32>
    %279 = arith.divf %277, %278 : vector<16x1xf32>
    %280 = vector.broadcast %272 : vector<16x1xf32> to vector<16x32xf32>
    %281 = arith.subf %268, %280 : vector<16x32xf32>
    %cst_98 = arith.constant 9.99999974E-6 : f32
    %282 = vector.broadcast %cst_98 : f32 to vector<16x1xf32>
    %283 = arith.addf %279, %282 : vector<16x1xf32>
    %284 = math.rsqrt %283 : vector<16x1xf32>
    %285 = vector.broadcast %284 : vector<16x1xf32> to vector<16x32xf32>
    %286 = arith.mulf %281, %285 : vector<16x32xf32>
    %287 = vector.broadcast %157 : vector<1x32xf32> to vector<16x32xf32>
    %288 = arith.mulf %286, %287 : vector<16x32xf32>
    %289 = vector.broadcast %158 : vector<1x32xf32> to vector<16x32xf32>
    %290 = arith.addf %288, %289 : vector<16x32xf32>
    %c0_99 = arith.constant 0 : index
    %c0_100 = arith.constant 0 : index
    %291 = vector.load %arg6[%c0_99, %c0_100] : memref<33x4xf32, #tpu.memory_space<vmem>>, vector<32x4xf32>
    %c32 = arith.constant 32 : index
    %c0_101 = arith.constant 0 : index
    %292 = vector.load %arg6[%c32, %c0_101] : memref<33x4xf32, #tpu.memory_space<vmem>>, vector<1x4xf32>
    %cst_102 = arith.constant dense<0.000000e+00> : vector<16x4xf32>
    %293 = tpu.matmul %290, %291, %cst_102 {dimension_numbers = #tpu.dot_dimension_numbers<[1], [0], [0], [1], [0, 0, 1, 1], [], []>} : vector<16x32xf32>, vector<32x4xf32>, vector<16x4xf32> -> vector<16x4xf32>
    %294 = vector.broadcast %292 : vector<1x4xf32> to vector<16x4xf32>
    %295 = arith.addf %293, %294 : vector<16x4xf32>
    %296 = vector.extract_strided_slice %295 {offsets = [0, 0], sizes = [8, 4], strides = [1, 1]} : vector<16x4xf32> to vector<8x4xf32>
    %297 = vector.extract_strided_slice %295 {offsets = [8, 0], sizes = [8, 4], strides = [1, 1]} : vector<16x4xf32> to vector<8x4xf32>
    %298 = arith.addf %296, %297 : vector<8x4xf32>
    %cst_103 = arith.constant 5.000000e-01 : f32
    %299 = vector.broadcast %cst_103 : f32 to vector<8x4xf32>
    %300 = arith.mulf %298, %299 : vector<8x4xf32>
    %cst_104 = arith.constant 0.000000e+00 : f32
    %301 = vector.broadcast %cst_104 : f32 to vector<8x4xf32>
    %302 = arith.subf %301, %300 : vector<8x4xf32>
    %303 = math.exp %302 : vector<8x4xf32>
    %cst_105 = arith.constant 1.000000e+00 : f32
    %304 = vector.broadcast %cst_105 : f32 to vector<8x4xf32>
    %305 = arith.addf %304, %303 : vector<8x4xf32>
    %cst_106 = arith.constant 1.000000e+00 : f32
    %306 = vector.broadcast %cst_106 : f32 to vector<8x4xf32>
    %307 = arith.divf %306, %305 : vector<8x4xf32>
    %c0_107 = arith.constant 0 : index
    %c0_108 = arith.constant 0 : index
    %308 = vector.load %arg7[%c0_107, %c0_108] : memref<8x4xf32, #tpu.memory_space<vmem>>, vector<8x4xf32>
    tpu.vector_store %arg7[%c0_107, %c0_108], %307 {strides = array<i32>} : memref<8x4xf32, #tpu.memory_space<vmem>>, vector<8x4xf32>,
    return
  }
}

</mosaic_0001>

<llo_original>
// kernel: tpu_custom_call.1
$region0: #{tpu_custom_call.1}
  #allocation0 [shape = 'u32[]', space=smem, size = 0x4, offset = 0x4, fixed_abs, tag = 'smem constant byte address 0x4 - core index']
  #allocation1 [shape = 'u32[144,128]{1,0:T(1,128)}', space=vmem, size = 0x12000, scoped, tag = 'internal scratch']
  %s0 = inlined_call_operand.vmem [shape: f32[16,32], index: 0, kind: input, shape index: {}]
  %s1 = inlined_call_operand.vmem [shape: f32[2,32,96], index: 1, kind: input, shape index: {}]
  %s2 = inlined_call_operand.vmem [shape: f32[2,32,32], index: 2, kind: input, shape index: {}]
  %s3 = inlined_call_operand.vmem [shape: f32[2,32,256], index: 3, kind: input, shape index: {}]
  %s4 = inlined_call_operand.vmem [shape: f32[2,256,32], index: 4, kind: input, shape index: {}]
  %s5 = inlined_call_operand.vmem [shape: f32[2,8,256], index: 5, kind: input, shape index: {}]
  %s6 = inlined_call_operand.vmem [shape: f32[33,4], index: 6, kind: input, shape index: {}]
  %s7 = inlined_call_operand.vmem [shape: f32[8,4], index: 7, kind: output, shape index: {}]
  %s8 = sld [smem:[#allocation0]]
  $region38: #{tpu_custom_call.1} parent=0
    _
  %s10 = ssub.s32 1, %s8
  %s11 = scalar_select 0, %s10, %s8
  // Predicated region
  $region2: #{tpu_custom_call.1} parent=0 // pred_check
    _
  $region3: #{tpu_custom_call.1} parent=0 // pred_check_branch
    %13 = sbr.rel (0) target = $region5
  $region4: #{tpu_custom_call.1} parent=0 // pred_region
    _
  $region5: #{tpu_custom_call.1} parent=0 // pred_fallthru
    _
  // Predicated region
  $region6: #{tpu_custom_call.1} parent=0 // pred_check
    _
  $region7: #{tpu_custom_call.1} parent=0 // pred_check_branch
    %15 = sbr.rel (0) target = $region9
  $region8: #{tpu_custom_call.1} parent=0 // pred_region
    _
  $region9: #{tpu_custom_call.1} parent=0 // pred_fallthru
    _
  // Predicated region
  $region10: #{tpu_custom_call.1} parent=0 // pred_check
    _
  $region11: #{tpu_custom_call.1} parent=0 // pred_check_branch
    %17 = sbr.rel (0) target = $region13
  $region12: #{tpu_custom_call.1} parent=0 // pred_region
    _
  $region13: #{tpu_custom_call.1} parent=0 // pred_fallthru
    _
  // Predicated region
  $region14: #{tpu_custom_call.1} parent=0 // pred_check
    _
  $region15: #{tpu_custom_call.1} parent=0 // pred_check_branch
    %19 = sbr.rel (0) target = $region17
  $region16: #{tpu_custom_call.1} parent=0 // pred_region
    _
  $region17: #{tpu_custom_call.1} parent=0 // pred_fallthru
    _
  // Predicated region
  $region18: #{tpu_custom_call.1} parent=0 // pred_check
    _
  $region19: #{tpu_custom_call.1} parent=0 // pred_check_branch
    %21 = sbr.rel (0) target = $region21
  $region20: #{tpu_custom_call.1} parent=0 // pred_region
    _
  $region21: #{tpu_custom_call.1} parent=0 // pred_fallthru
    _
  // Predicated region
  $region22: #{tpu_custom_call.1} parent=0 // pred_check
    _
  $region23: #{tpu_custom_call.1} parent=0 // pred_check_branch
    %23 = sbr.rel (0) target = $region25
  $region24: #{tpu_custom_call.1} parent=0 // pred_region
    _
  $region25: #{tpu_custom_call.1} parent=0 // pred_fallthru
    _
  // Predicated region
  $region26: #{tpu_custom_call.1} parent=0 // pred_check
    _
  $region27: #{tpu_custom_call.1} parent=0 // pred_check_branch
    %25 = sbr.rel (0) target = $region29
  $region28: #{tpu_custom_call.1} parent=0 // pred_region
    _
  $region29: #{tpu_custom_call.1} parent=0 // pred_fallthru
    _
  %v26 = vld [vmem:[%s0] sm:$0xff]
  %v27 = vld [vmem:[%s0 + $0x8] sm:$0xff]
  %v28 = vld [vmem:[%s1] sm:$0xff]
  %v29 = vld [vmem:[%s1 + $0x8] sm:$0xff]
  %v30 = vld [vmem:[%s1 + $0x10] sm:$0xff]
  %v31 = vld [vmem:[%s1 + $0x18] sm:$0xff]
  %v32 = vld [vmem:[%s2] sm:$0xff]
  %v33 = vld [vmem:[%s2 + $0x8] sm:$0xff]
  %v34 = vld [vmem:[%s2 + $0x10] sm:$0xff]
  %v35 = vld [vmem:[%s2 + $0x18] sm:$0xff]
  %v36 = vld [vmem:[%s5] sm:$0xff]
  %v37 = vld [vmem:[%s5 + $0x8] sm:$0xff]
  %v38 = vlaneseq
  %v39 = vshrl.u32 %v38, 7
  %v40 = vsub.s32 0, %v39
  %v41 = vrot.slane %v36, %v40
  %vm42 = vcmask 261120
  %v44 = vsel %vm42, %v26, 0
  %v47 = vsel %vm42, %v27, 0
  %49 = vmatprep.subr.mxu0 0.0
  %50 = vmatpush1.msra.mxu0 0.0
  %51 = vmatprep.subr.mxu0 0.0
  %52 = vmatpush1.msra.mxu0 0.0
  %53 = vmatprep.subr.mxu0 0.0
  %54 = vmatpush1.msra.mxu0 0.0
  %55 = vmatprep.subr.mxu0 0.0
  %56 = vmatpush1.msra.mxu0 0.0
  %57 = vmatprep.subr.mxu0 0.0
  %58 = vmatpush1.msra.mxu0 0.0
  %59 = vmatprep.subr.mxu0 0.0
  %60 = vmatpush1.msra.mxu0 0.0
  %61 = vmatprep.subr.mxu0 0.0
  %62 = vmatpush1.msra.mxu0 0.0
  %63 = vmatprep.subr.mxu0 0.0
  %64 = vmatpush1.msra.mxu0 0.0
  %65 = vmatprep.subr.mxu0 0.0
  %66 = vmatpush1.msra.mxu0 0.0
  %67 = vmatprep.subr.mxu0 0.0
  %68 = vmatpush1.msra.mxu0 0.0
  %69 = vmatprep.subr.mxu0 0.0
  %70 = vmatpush1.msra.mxu0 0.0
  %71 = vmatprep.subr.mxu0 0.0
  %72 = vmatpush1.msra.mxu0 0.0
  %73 = vmatprep.subr.mxu0 0.0
  %74 = vmatpush1.msra.mxu0 %v31
  %75 = vmatprep.subr.mxu0 0.0
  %76 = vmatpush1.msra.mxu0 %v30
  %77 = vmatprep.subr.mxu0 0.0
  %78 = vmatpush1.msra.mxu0 %v29
  %79 = vmatprep.subr.mxu0 0.0
  %80 = vmatpush1.msra.mxu0 %v28
  %81 = vmatprep.subr.mxu0 0.0
  %82 = vmatpush2.msra.mxu0 0.0
  %83 = vmatprep.subr.mxu0 0.0
  %84 = vmatpush2.msra.mxu0 0.0
  %85 = vmatprep.subr.mxu0 0.0
  %86 = vmatpush2.msra.mxu0 0.0
  %87 = vmatprep.subr.mxu0 0.0
  %88 = vmatpush2.msra.mxu0 0.0
  %89 = vmatprep.subr.mxu0 0.0
  %90 = vmatpush2.msra.mxu0 0.0
  %91 = vmatprep.subr.mxu0 0.0
  %92 = vmatpush2.msra.mxu0 0.0
  %93 = vmatprep.subr.mxu0 0.0
  %94 = vmatpush2.msra.mxu0 0.0
  %95 = vmatprep.subr.mxu0 0.0
  %96 = vmatpush2.msra.mxu0 0.0
  %97 = vmatprep.subr.mxu0 0.0
  %98 = vmatpush2.msra.mxu0 0.0
  %99 = vmatprep.subr.mxu0 0.0
  %100 = vmatpush2.msra.mxu0 0.0
  %101 = vmatprep.subr.mxu0 0.0
  %102 = vmatpush2.msra.mxu0 0.0
  %103 = vmatprep.subr.mxu0 0.0
  %104 = vmatpush2.msra.mxu0 0.0
  %105 = vmatprep.subr.mxu0 0.0
  %106 = vmatpush2.msra.mxu0 0.0
  %107 = vmatprep.subr.mxu0 0.0
  %108 = vmatpush2.msra.mxu0 0.0
  %109 = vmatprep.subr.mxu0 0.0
  %110 = vmatpush2.msra.mxu0 0.0
  %111 = vmatprep.subr.mxu0 0.0
  %112 = vmatpush2.msra.mxu0 0.0
  %113 = vmatprep.mubr.f32.mxu0 0.0
  %114 = vmatmul.mubr.f32.gmra.mxu0 %v44
  %v115 = vpop.f32.mrf.mxu0
  %v116 = vadd.f32 %v41, %v115
  %v117 = vpop.f32.mrf.mxu0
  %118 = vmatprep.mubr.f32.mxu0 0.0
  %119 = vmatmul.mubr.f32.gmra.mxu0 %v47
  %v120 = vpop.f32.mrf.mxu0
  %v121 = vadd.f32 %v41, %v120
  %v122 = vpop.f32.mrf.mxu0
  %123 = vdwg.mxu0
  %125 = vrot.lane.b32.xlu0 %v116, 96
  %v126 = vpop.permute.xlu0 %125
  %vm127 = vcmask 64512
  %v128 = vsel %vm127, %v116, 0
  %v130 = vsel %vm127, %v126, 0
  %132 = vmatprep.subr.mxu0 0.0
  %133 = vmatpush1.xpose.msra.mxu0 0.0
  %134 = vmatprep.subr.mxu0 0.0
  %135 = vmatpush1.xpose.msra.mxu0 0.0
  %136 = vmatprep.subr.mxu0 0.0
  %137 = vmatpush1.xpose.msra.mxu0 0.0
  %138 = vmatprep.subr.mxu0 0.0
  %139 = vmatpush1.xpose.msra.mxu0 0.0
  %140 = vmatprep.subr.mxu0 0.0
  %141 = vmatpush1.xpose.msra.mxu0 0.0
  %142 = vmatprep.subr.mxu0 0.0
  %143 = vmatpush1.xpose.msra.mxu0 0.0
  %144 = vmatprep.subr.mxu0 0.0
  %145 = vmatpush1.xpose.msra.mxu0 0.0
  %146 = vmatprep.subr.mxu0 0.0
  %147 = vmatpush1.xpose.msra.mxu0 0.0
  %148 = vmatprep.subr.mxu0 0.0
  %149 = vmatpush1.xpose.msra.mxu0 0.0
  %150 = vmatprep.subr.mxu0 0.0
  %151 = vmatpush1.xpose.msra.mxu0 0.0
  %152 = vmatprep.subr.mxu0 0.0
  %153 = vmatpush1.xpose.msra.mxu0 0.0
  %154 = vmatprep.subr.mxu0 0.0
  %155 = vmatpush1.xpose.msra.mxu0 0.0
  %156 = vmatprep.subr.mxu0 0.0
  %157 = vmatpush1.xpose.msra.mxu0 0.0
  %158 = vmatprep.subr.mxu0 0.0
  %159 = vmatpush1.xpose.msra.mxu0 0.0
  %160 = vmatprep.subr.mxu0 0.0
  %161 = vmatpush1.xpose.msra.mxu0 0.0
  %162 = vmatprep.subr.mxu0 0.0
  %163 = vmatpush1.xpose.msra.mxu0 %v130
  %164 = vmatprep.subr.mxu0 0.0
  %165 = vmatpush2.xpose.msra.mxu0 0.0
  %166 = vmatprep.subr.mxu0 0.0
  %167 = vmatpush2.xpose.msra.mxu0 0.0
  %168 = vmatprep.subr.mxu0 0.0
  %169 = vmatpush2.xpose.msra.mxu0 0.0
  %170 = vmatprep.subr.mxu0 0.0
  %171 = vmatpush2.xpose.msra.mxu0 0.0
  %172 = vmatprep.subr.mxu0 0.0
  %173 = vmatpush2.xpose.msra.mxu0 0.0
  %174 = vmatprep.subr.mxu0 0.0
  %175 = vmatpush2.xpose.msra.mxu0 0.0
  %176 = vmatprep.subr.mxu0 0.0
  %177 = vmatpush2.xpose.msra.mxu0 0.0
  %178 = vmatprep.subr.mxu0 0.0
  %179 = vmatpush2.xpose.msra.mxu0 0.0
  %180 = vmatprep.subr.mxu0 0.0
  %181 = vmatpush2.xpose.msra.mxu0 0.0
  %182 = vmatprep.subr.mxu0 0.0
  %183 = vmatpush2.xpose.msra.mxu0 0.0
  %184 = vmatprep.subr.mxu0 0.0
  %185 = vmatpush2.xpose.msra.mxu0 0.0
  %186 = vmatprep.subr.mxu0 0.0
  %187 = vmatpush2.xpose.msra.mxu0 0.0
  %188 = vmatprep.subr.mxu0 0.0
  %189 = vmatpush2.xpose.msra.mxu0 0.0
  %190 = vmatprep.subr.mxu0 0.0
  %191 = vmatpush2.xpose.msra.mxu0 0.0
  %192 = vmatprep.subr.mxu0 0.0
  %193 = vmatpush2.xpose.msra.mxu0 0.0
  %194 = vmatprep.subr.mxu0 0.0
  %195 = vmatpush2.xpose.msra.mxu0 0.0
  %196 = vmatprep.mubr.f32.mxu0 0.0
  %197 = vmatmul.mubr.f32.gmra.mxu0 %v128
  %v198 = vpop.f32.mrf.mxu0
  %v199 = vadd.f32 0.0, %v198
  %v200 = vpop.f32.mrf.mxu0
  %201 = vdwg.mxu0
  %203 = vrot.lane.b32.xlu0 %v121, 96
  %v204 = vpop.permute.xlu0 %203
  %v205 = vsel %vm127, %v121, 0
  %v207 = vsel %vm127, %v204, 0
  %209 = vmatprep.subr.mxu0 0.0
  %210 = vmatpush1.xpose.msra.mxu0 0.0
  %211 = vmatprep.subr.mxu0 0.0
  %212 = vmatpush1.xpose.msra.mxu0 0.0
  %213 = vmatprep.subr.mxu0 0.0
  %214 = vmatpush1.xpose.msra.mxu0 0.0
  %215 = vmatprep.subr.mxu0 0.0
  %216 = vmatpush1.xpose.msra.mxu0 0.0
  %217 = vmatprep.subr.mxu0 0.0
  %218 = vmatpush1.xpose.msra.mxu0 0.0
  %219 = vmatprep.subr.mxu0 0.0
  %220 = vmatpush1.xpose.msra.mxu0 0.0
  %221 = vmatprep.subr.mxu0 0.0
  %222 = vmatpush1.xpose.msra.mxu0 0.0
  %223 = vmatprep.subr.mxu0 0.0
  %224 = vmatpush1.xpose.msra.mxu0 0.0
  %225 = vmatprep.subr.mxu0 0.0
  %226 = vmatpush1.xpose.msra.mxu0 0.0
  %227 = vmatprep.subr.mxu0 0.0
  %228 = vmatpush1.xpose.msra.mxu0 0.0
  %229 = vmatprep.subr.mxu0 0.0
  %230 = vmatpush1.xpose.msra.mxu0 0.0
  %231 = vmatprep.subr.mxu0 0.0
  %232 = vmatpush1.xpose.msra.mxu0 0.0
  %233 = vmatprep.subr.mxu0 0.0
  %234 = vmatpush1.xpose.msra.mxu0 0.0
  %235 = vmatprep.subr.mxu0 0.0
  %236 = vmatpush1.xpose.msra.mxu0 0.0
  %237 = vmatprep.subr.mxu0 0.0
  %238 = vmatpush1.xpose.msra.mxu0 0.0
  %239 = vmatprep.subr.mxu0 0.0
  %240 = vmatpush1.xpose.msra.mxu0 %v207
  %241 = vmatprep.subr.mxu0 0.0
  %242 = vmatpush2.xpose.msra.mxu0 0.0
  %243 = vmatprep.subr.mxu0 0.0
  %244 = vmatpush2.xpose.msra.mxu0 0.0
  %245 = vmatprep.subr.mxu0 0.0
  %246 = vmatpush2.xpose.msra.mxu0 0.0
  %247 = vmatprep.subr.mxu0 0.0
  %248 = vmatpush2.xpose.msra.mxu0 0.0
  %249 = vmatprep.subr.mxu0 0.0
  %250 = vmatpush2.xpose.msra.mxu0 0.0
  %251 = vmatprep.subr.mxu0 0.0
  %252 = vmatpush2.xpose.msra.mxu0 0.0
  %253 = vmatprep.subr.mxu0 0.0
  %254 = vmatpush2.xpose.msra.mxu0 0.0
  %255 = vmatprep.subr.mxu0 0.0
  %256 = vmatpush2.xpose.msra.mxu0 0.0
  %257 = vmatprep.subr.mxu0 0.0
  %258 = vmatpush2.xpose.msra.mxu0 0.0
  %259 = vmatprep.subr.mxu0 0.0
  %260 = vmatpush2.xpose.msra.mxu0 0.0
  %261 = vmatprep.subr.mxu0 0.0
  %262 = vmatpush2.xpose.msra.mxu0 0.0
  %263 = vmatprep.subr.mxu0 0.0
  %264 = vmatpush2.xpose.msra.mxu0 0.0
  %265 = vmatprep.subr.mxu0 0.0
  %266 = vmatpush2.xpose.msra.mxu0 0.0
  %267 = vmatprep.subr.mxu0 0.0
  %268 = vmatpush2.xpose.msra.mxu0 0.0
  %269 = vmatprep.subr.mxu0 0.0
  %270 = vmatpush2.xpose.msra.mxu0 0.0
  %271 = vmatprep.subr.mxu0 0.0
  %272 = vmatpush2.xpose.msra.mxu0 0.0
  %273 = vmatprep.mubr.f32.mxu0 0.0
  %274 = vmatmul.mubr.f32.gmra.mxu0 %v205
  %v275 = vpop.f32.mrf.mxu0
  %v276 = vadd.f32 0.0, %v275
  %v277 = vpop.f32.mrf.mxu0
  %278 = vdwg.mxu0
  %v279 = vmul.f32 %v199, 0.35355338
  %v280 = vmul.f32 %v276, 0.35355338
  %v281 = vsel %vm127, %v279, -inf
  %282 = vmax.xlane.f32.xlu0 %v281
  %v283 = vpop.xlane.xlu0 %282
  %v284 = vsel %vm127, %v280, -inf
  %285 = vmax.xlane.f32.xlu0 %v284
  %v286 = vpop.xlane.xlu0 %285
  %v287 = vsub.f32 %v279, %v283
  %v288 = vsub.f32 %v280, %v286
  %v289 = vmul.f32 %v287, 1.442695
  %v290 = vpow.pop %v289
  %v291 = vmul.f32 %v288, 1.442695
  %v292 = vpow.pop %v291
  %v293 = vsel %vm127, %v290, 0.0
  %294 = vadd.xlane.f32.xlu0 %v293
  %v295 = vpop.xlane.xlu0 %294
  %v296 = vsel %vm127, %v292, 0.0
  %297 = vadd.xlane.f32.xlu0 %v296
  %v298 = vpop.xlane.xlu0 %297
  %v299 = vrcp.pop %v295
  %v300 = vmul.f32 %v290, %v299
  %v301 = vrcp.pop %v298
  %v302 = vmul.f32 %v292, %v301
  %303 = vrot.lane.b32.xlu0 %v116, 64
  %v304 = vpop.permute.xlu0 %303
  %v307 = vsel %vm127, %v300, 0
  %309 = vmatprep.subr.mxu0 0.0
  %310 = vmatpush1.msra.mxu0 0.0
  %311 = vmatprep.subr.mxu0 0.0
  %312 = vmatpush1.msra.mxu0 0.0
  %313 = vmatprep.subr.mxu0 0.0
  %314 = vmatpush1.msra.mxu0 0.0
  %315 = vmatprep.subr.mxu0 0.0
  %316 = vmatpush1.msra.mxu0 0.0
  %317 = vmatprep.subr.mxu0 0.0
  %318 = vmatpush1.msra.mxu0 0.0
  %319 = vmatprep.subr.mxu0 0.0
  %320 = vmatpush1.msra.mxu0 0.0
  %321 = vmatprep.subr.mxu0 0.0
  %322 = vmatpush1.msra.mxu0 0.0
  %323 = vmatprep.subr.mxu0 0.0
  %324 = vmatpush1.msra.mxu0 0.0
  %325 = vmatprep.subr.mxu0 0.0
  %326 = vmatpush1.msra.mxu0 0.0
  %327 = vmatprep.subr.mxu0 0.0
  %328 = vmatpush1.msra.mxu0 0.0
  %329 = vmatprep.subr.mxu0 0.0
  %330 = vmatpush1.msra.mxu0 0.0
  %331 = vmatprep.subr.mxu0 0.0
  %332 = vmatpush1.msra.mxu0 0.0
  %333 = vmatprep.subr.mxu0 0.0
  %334 = vmatpush1.msra.mxu0 0.0
  %335 = vmatprep.subr.mxu0 0.0
  %336 = vmatpush1.msra.mxu0 0.0
  %337 = vmatprep.subr.mxu0 0.0
  %338 = vmatpush1.msra.mxu0 0.0
  %339 = vmatprep.subr.mxu0 0.0
  %340 = vmatpush1.msra.mxu0 %v304
  %341 = vmatprep.subr.mxu0 0.0
  %342 = vmatpush2.msra.mxu0 0.0
  %343 = vmatprep.subr.mxu0 0.0
  %344 = vmatpush2.msra.mxu0 0.0
  %345 = vmatprep.subr.mxu0 0.0
  %346 = vmatpush2.msra.mxu0 0.0
  %347 = vmatprep.subr.mxu0 0.0
  %348 = vmatpush2.msra.mxu0 0.0
  %349 = vmatprep.subr.mxu0 0.0
  %350 = vmatpush2.msra.mxu0 0.0
  %351 = vmatprep.subr.mxu0 0.0
  %352 = vmatpush2.msra.mxu0 0.0
  %353 = vmatprep.subr.mxu0 0.0
  %354 = vmatpush2.msra.mxu0 0.0
  %355 = vmatprep.subr.mxu0 0.0
  %356 = vmatpush2.msra.mxu0 0.0
  %357 = vmatprep.subr.mxu0 0.0
  %358 = vmatpush2.msra.mxu0 0.0
  %359 = vmatprep.subr.mxu0 0.0
  %360 = vmatpush2.msra.mxu0 0.0
  %361 = vmatprep.subr.mxu0 0.0
  %362 = vmatpush2.msra.mxu0 0.0
  %363 = vmatprep.subr.mxu0 0.0
  %364 = vmatpush2.msra.mxu0 0.0
  %365 = vmatprep.subr.mxu0 0.0
  %366 = vmatpush2.msra.mxu0 0.0
  %367 = vmatprep.subr.mxu0 0.0
  %368 = vmatpush2.msra.mxu0 0.0
  %369 = vmatprep.subr.mxu0 0.0
  %370 = vmatpush2.msra.mxu0 0.0
  %371 = vmatprep.subr.mxu0 0.0
  %372 = vmatpush2.msra.mxu0 0.0
  %373 = vmatprep.mubr.f32.mxu0 0.0
  %374 = vmatmul.mubr.f32.gmra.mxu0 %v307
  %v375 = vpop.f32.mrf.mxu0
  %v376 = vadd.f32 0.0, %v375
  %v377 = vpop.f32.mrf.mxu0
  %378 = vdwg.mxu0
  %379 = vrot.lane.b32.xlu0 %v121, 64
  %v380 = vpop.permute.xlu0 %379
  %v383 = vsel %vm127, %v302, 0
  %385 = vmatprep.subr.mxu0 0.0
  %386 = vmatpush1.msra.mxu0 0.0
  %387 = vmatprep.subr.mxu0 0.0
  %388 = vmatpush1.msra.mxu0 0.0
  %389 = vmatprep.subr.mxu0 0.0
  %390 = vmatpush1.msra.mxu0 0.0
  %391 = vmatprep.subr.mxu0 0.0
  %392 = vmatpush1.msra.mxu0 0.0
  %393 = vmatprep.subr.mxu0 0.0
  %394 = vmatpush1.msra.mxu0 0.0
  %395 = vmatprep.subr.mxu0 0.0
  %396 = vmatpush1.msra.mxu0 0.0
  %397 = vmatprep.subr.mxu0 0.0
  %398 = vmatpush1.msra.mxu0 0.0
  %399 = vmatprep.subr.mxu0 0.0
  %400 = vmatpush1.msra.mxu0 0.0
  %401 = vmatprep.subr.mxu0 0.0
  %402 = vmatpush1.msra.mxu0 0.0
  %403 = vmatprep.subr.mxu0 0.0
  %404 = vmatpush1.msra.mxu0 0.0
  %405 = vmatprep.subr.mxu0 0.0
  %406 = vmatpush1.msra.mxu0 0.0
  %407 = vmatprep.subr.mxu0 0.0
  %408 = vmatpush1.msra.mxu0 0.0
  %409 = vmatprep.subr.mxu0 0.0
  %410 = vmatpush1.msra.mxu0 0.0
  %411 = vmatprep.subr.mxu0 0.0
  %412 = vmatpush1.msra.mxu0 0.0
  %413 = vmatprep.subr.mxu0 0.0
  %414 = vmatpush1.msra.mxu0 0.0
  %415 = vmatprep.subr.mxu0 0.0
  %416 = vmatpush1.msra.mxu0 %v380
  %417 = vmatprep.subr.mxu0 0.0
  %418 = vmatpush2.msra.mxu0 0.0
  %419 = vmatprep.subr.mxu0 0.0
  %420 = vmatpush2.msra.mxu0 0.0
  %421 = vmatprep.subr.mxu0 0.0
  %422 = vmatpush2.msra.mxu0 0.0
  %423 = vmatprep.subr.mxu0 0.0
  %424 = vmatpush2.msra.mxu0 0.0
  %425 = vmatprep.subr.mxu0 0.0
  %426 = vmatpush2.msra.mxu0 0.0
  %427 = vmatprep.subr.mxu0 0.0
  %428 = vmatpush2.msra.mxu0 0.0
  %429 = vmatprep.subr.mxu0 0.0
  %430 = vmatpush2.msra.mxu0 0.0
  %431 = vmatprep.subr.mxu0 0.0
  %432 = vmatpush2.msra.mxu0 0.0
  %433 = vmatprep.subr.mxu0 0.0
  %434 = vmatpush2.msra.mxu0 0.0
  %435 = vmatprep.subr.mxu0 0.0
  %436 = vmatpush2.msra.mxu0 0.0
  %437 = vmatprep.subr.mxu0 0.0
  %438 = vmatpush2.msra.mxu0 0.0
  %439 = vmatprep.subr.mxu0 0.0
  %440 = vmatpush2.msra.mxu0 0.0
  %441 = vmatprep.subr.mxu0 0.0
  %442 = vmatpush2.msra.mxu0 0.0
  %443 = vmatprep.subr.mxu0 0.0
  %444 = vmatpush2.msra.mxu0 0.0
  %445 = vmatprep.subr.mxu0 0.0
  %446 = vmatpush2.msra.mxu0 0.0
  %447 = vmatprep.subr.mxu0 0.0
  %448 = vmatpush2.msra.mxu0 0.0
  %449 = vmatprep.mubr.f32.mxu0 0.0
  %450 = vmatmul.mubr.f32.gmra.mxu0 %v383
  %v451 = vpop.f32.mrf.mxu0
  %v452 = vadd.f32 0.0, %v451
  %v453 = vpop.f32.mrf.mxu0
  %454 = vdwg.mxu0
  %455 = vrot.lane.b32.xlu0 %v116, 120
  %v456 = vpop.permute.xlu0 %455
  %457 = vrot.lane.b32.xlu0 %v116, 88
  %v458 = vpop.permute.xlu0 %457
  %v459 = vsel %vm127, %v456, 0
  %v461 = vsel %vm127, %v458, 0
  %463 = vmatprep.subr.mxu0 0.0
  %464 = vmatpush1.xpose.msra.mxu0 0.0
  %465 = vmatprep.subr.mxu0 0.0
  %466 = vmatpush1.xpose.msra.mxu0 0.0
  %467 = vmatprep.subr.mxu0 0.0
  %468 = vmatpush1.xpose.msra.mxu0 0.0
  %469 = vmatprep.subr.mxu0 0.0
  %470 = vmatpush1.xpose.msra.mxu0 0.0
  %471 = vmatprep.subr.mxu0 0.0
  %472 = vmatpush1.xpose.msra.mxu0 0.0
  %473 = vmatprep.subr.mxu0 0.0
  %474 = vmatpush1.xpose.msra.mxu0 0.0
  %475 = vmatprep.subr.mxu0 0.0
  %476 = vmatpush1.xpose.msra.mxu0 0.0
  %477 = vmatprep.subr.mxu0 0.0
  %478 = vmatpush1.xpose.msra.mxu0 0.0
  %479 = vmatprep.subr.mxu0 0.0
  %480 = vmatpush1.xpose.msra.mxu0 0.0
  %481 = vmatprep.subr.mxu0 0.0
  %482 = vmatpush1.xpose.msra.mxu0 0.0
  %483 = vmatprep.subr.mxu0 0.0
  %484 = vmatpush1.xpose.msra.mxu0 0.0
  %485 = vmatprep.subr.mxu0 0.0
  %486 = vmatpush1.xpose.msra.mxu0 0.0
  %487 = vmatprep.subr.mxu0 0.0
  %488 = vmatpush1.xpose.msra.mxu0 0.0
  %489 = vmatprep.subr.mxu0 0.0
  %490 = vmatpush1.xpose.msra.mxu0 0.0
  %491 = vmatprep.subr.mxu0 0.0
  %492 = vmatpush1.xpose.msra.mxu0 0.0
  %493 = vmatprep.subr.mxu0 0.0
  %494 = vmatpush1.xpose.msra.mxu0 %v461
  %495 = vmatprep.subr.mxu0 0.0
  %496 = vmatpush2.xpose.msra.mxu0 0.0
  %497 = vmatprep.subr.mxu0 0.0
  %498 = vmatpush2.xpose.msra.mxu0 0.0
  %499 = vmatprep.subr.mxu0 0.0
  %500 = vmatpush2.xpose.msra.mxu0 0.0
  %501 = vmatprep.subr.mxu0 0.0
  %502 = vmatpush2.xpose.msra.mxu0 0.0
  %503 = vmatprep.subr.mxu0 0.0
  %504 = vmatpush2.xpose.msra.mxu0 0.0
  %505 = vmatprep.subr.mxu0 0.0
  %506 = vmatpush2.xpose.msra.mxu0 0.0
  %507 = vmatprep.subr.mxu0 0.0
  %508 = vmatpush2.xpose.msra.mxu0 0.0
  %509 = vmatprep.subr.mxu0 0.0
  %510 = vmatpush2.xpose.msra.mxu0 0.0
  %511 = vmatprep.subr.mxu0 0.0
  %512 = vmatpush2.xpose.msra.mxu0 0.0
  %513 = vmatprep.subr.mxu0 0.0
  %514 = vmatpush2.xpose.msra.mxu0 0.0
  %515 = vmatprep.subr.mxu0 0.0
  %516 = vmatpush2.xpose.msra.mxu0 0.0
  %517 = vmatprep.subr.mxu0 0.0
  %518 = vmatpush2.xpose.msra.mxu0 0.0
  %519 = vmatprep.subr.mxu0 0.0
  %520 = vmatpush2.xpose.msra.mxu0 0.0
  %521 = vmatprep.subr.mxu0 0.0
  %522 = vmatpush2.xpose.msra.mxu0 0.0
  %523 = vmatprep.subr.mxu0 0.0
  %524 = vmatpush2.xpose.msra.mxu0 0.0
  %525 = vmatprep.subr.mxu0 0.0
  %526 = vmatpush2.xpose.msra.mxu0 0.0
  %527 = vmatprep.mubr.f32.mxu0 0.0
  %528 = vmatmul.mubr.f32.gmra.mxu0 %v459
  %v529 = vpop.f32.mrf.mxu0
  %v530 = vadd.f32 0.0, %v529
  %v531 = vpop.f32.mrf.mxu0
  %532 = vdwg.mxu0
  %533 = vrot.lane.b32.xlu0 %v121, 120
  %v534 = vpop.permute.xlu0 %533
  %535 = vrot.lane.b32.xlu0 %v121, 88
  %v536 = vpop.permute.xlu0 %535
  %v537 = vsel %vm127, %v534, 0
  %v539 = vsel %vm127, %v536, 0
  %541 = vmatprep.subr.mxu0 0.0
  %542 = vmatpush1.xpose.msra.mxu0 0.0
  %543 = vmatprep.subr.mxu0 0.0
  %544 = vmatpush1.xpose.msra.mxu0 0.0
  %545 = vmatprep.subr.mxu0 0.0
  %546 = vmatpush1.xpose.msra.mxu0 0.0
  %547 = vmatprep.subr.mxu0 0.0
  %548 = vmatpush1.xpose.msra.mxu0 0.0
  %549 = vmatprep.subr.mxu0 0.0
  %550 = vmatpush1.xpose.msra.mxu0 0.0
  %551 = vmatprep.subr.mxu0 0.0
  %552 = vmatpush1.xpose.msra.mxu0 0.0
  %553 = vmatprep.subr.mxu0 0.0
  %554 = vmatpush1.xpose.msra.mxu0 0.0
  %555 = vmatprep.subr.mxu0 0.0
  %556 = vmatpush1.xpose.msra.mxu0 0.0
  %557 = vmatprep.subr.mxu0 0.0
  %558 = vmatpush1.xpose.msra.mxu0 0.0
  %559 = vmatprep.subr.mxu0 0.0
  %560 = vmatpush1.xpose.msra.mxu0 0.0
  %561 = vmatprep.subr.mxu0 0.0
  %562 = vmatpush1.xpose.msra.mxu0 0.0
  %563 = vmatprep.subr.mxu0 0.0
  %564 = vmatpush1.xpose.msra.mxu0 0.0
  %565 = vmatprep.subr.mxu0 0.0
  %566 = vmatpush1.xpose.msra.mxu0 0.0
  %567 = vmatprep.subr.mxu0 0.0
  %568 = vmatpush1.xpose.msra.mxu0 0.0
  %569 = vmatprep.subr.mxu0 0.0
  %570 = vmatpush1.xpose.msra.mxu0 0.0
  %571 = vmatprep.subr.mxu0 0.0
  %572 = vmatpush1.xpose.msra.mxu0 %v539
  %573 = vmatprep.subr.mxu0 0.0
  %574 = vmatpush2.xpose.msra.mxu0 0.0
  %575 = vmatprep.subr.mxu0 0.0
  %576 = vmatpush2.xpose.msra.mxu0 0.0
  %577 = vmatprep.subr.mxu0 0.0
  %578 = vmatpush2.xpose.msra.mxu0 0.0
  %579 = vmatprep.subr.mxu0 0.0
  %580 = vmatpush2.xpose.msra.mxu0 0.0
  %581 = vmatprep.subr.mxu0 0.0
  %582 = vmatpush2.xpose.msra.mxu0 0.0
  %583 = vmatprep.subr.mxu0 0.0
  %584 = vmatpush2.xpose.msra.mxu0 0.0
  %585 = vmatprep.subr.mxu0 0.0
  %586 = vmatpush2.xpose.msra.mxu0 0.0
  %587 = vmatprep.subr.mxu0 0.0
  %588 = vmatpush2.xpose.msra.mxu0 0.0
  %589 = vmatprep.subr.mxu0 0.0
  %590 = vmatpush2.xpose.msra.mxu0 0.0
  %591 = vmatprep.subr.mxu0 0.0
  %592 = vmatpush2.xpose.msra.mxu0 0.0
  %593 = vmatprep.subr.mxu0 0.0
  %594 = vmatpush2.xpose.msra.mxu0 0.0
  %595 = vmatprep.subr.mxu0 0.0
  %596 = vmatpush2.xpose.msra.mxu0 0.0
  %597 = vmatprep.subr.mxu0 0.0
  %598 = vmatpush2.xpose.msra.mxu0 0.0
  %599 = vmatprep.subr.mxu0 0.0
  %600 = vmatpush2.xpose.msra.mxu0 0.0
  %601 = vmatprep.subr.mxu0 0.0
  %602 = vmatpush2.xpose.msra.mxu0 0.0
  %603 = vmatprep.subr.mxu0 0.0
  %604 = vmatpush2.xpose.msra.mxu0 0.0
  %605 = vmatprep.mubr.f32.mxu0 0.0
  %606 = vmatmul.mubr.f32.gmra.mxu0 %v537
  %v607 = vpop.f32.mrf.mxu0
  %v608 = vadd.f32 0.0, %v607
  %v609 = vpop.f32.mrf.mxu0
  %610 = vdwg.mxu0
  %v611 = vmul.f32 %v530, 0.35355338
  %v612 = vmul.f32 %v608, 0.35355338
  %v613 = vsel %vm127, %v611, -inf
  %614 = vmax.xlane.f32.xlu0 %v613
  %v615 = vpop.xlane.xlu0 %614
  %v616 = vsel %vm127, %v612, -inf
  %617 = vmax.xlane.f32.xlu0 %v616
  %v618 = vpop.xlane.xlu0 %617
  %v619 = vsub.f32 %v611, %v615
  %v620 = vsub.f32 %v612, %v618
  %v621 = vmul.f32 %v619, 1.442695
  %v622 = vpow.pop %v621
  %v623 = vmul.f32 %v620, 1.442695
  %v624 = vpow.pop %v623
  %v625 = vsel %vm127, %v622, 0.0
  %626 = vadd.xlane.f32.xlu0 %v625
  %v627 = vpop.xlane.xlu0 %626
  %v628 = vsel %vm127, %v624, 0.0
  %629 = vadd.xlane.f32.xlu0 %v628
  %v630 = vpop.xlane.xlu0 %629
  %v631 = vrcp.pop %v627
  %v632 = vmul.f32 %v622, %v631
  %v633 = vrcp.pop %v630
  %v634 = vmul.f32 %v624, %v633
  %635 = vrot.lane.b32.xlu0 %v116, 56
  %v636 = vpop.permute.xlu0 %635
  %v639 = vsel %vm127, %v632, 0
  %641 = vmatprep.subr.mxu0 0.0
  %642 = vmatpush1.msra.mxu0 0.0
  %643 = vmatprep.subr.mxu0 0.0
  %644 = vmatpush1.msra.mxu0 0.0
  %645 = vmatprep.subr.mxu0 0.0
  %646 = vmatpush1.msra.mxu0 0.0
  %647 = vmatprep.subr.mxu0 0.0
  %648 = vmatpush1.msra.mxu0 0.0
  %649 = vmatprep.subr.mxu0 0.0
  %650 = vmatpush1.msra.mxu0 0.0
  %651 = vmatprep.subr.mxu0 0.0
  %652 = vmatpush1.msra.mxu0 0.0
  %653 = vmatprep.subr.mxu0 0.0
  %654 = vmatpush1.msra.mxu0 0.0
  %655 = vmatprep.subr.mxu0 0.0
  %656 = vmatpush1.msra.mxu0 0.0
  %657 = vmatprep.subr.mxu0 0.0
  %658 = vmatpush1.msra.mxu0 0.0
  %659 = vmatprep.subr.mxu0 0.0
  %660 = vmatpush1.msra.mxu0 0.0
  %661 = vmatprep.subr.mxu0 0.0
  %662 = vmatpush1.msra.mxu0 0.0
  %663 = vmatprep.subr.mxu0 0.0
  %664 = vmatpush1.msra.mxu0 0.0
  %665 = vmatprep.subr.mxu0 0.0
  %666 = vmatpush1.msra.mxu0 0.0
  %667 = vmatprep.subr.mxu0 0.0
  %668 = vmatpush1.msra.mxu0 0.0
  %669 = vmatprep.subr.mxu0 0.0
  %670 = vmatpush1.msra.mxu0 0.0
  %671 = vmatprep.subr.mxu0 0.0
  %672 = vmatpush1.msra.mxu0 %v636
  %673 = vmatprep.subr.mxu0 0.0
  %674 = vmatpush2.msra.mxu0 0.0
  %675 = vmatprep.subr.mxu0 0.0
  %676 = vmatpush2.msra.mxu0 0.0
  %677 = vmatprep.subr.mxu0 0.0
  %678 = vmatpush2.msra.mxu0 0.0
  %679 = vmatprep.subr.mxu0 0.0
  %680 = vmatpush2.msra.mxu0 0.0
  %681 = vmatprep.subr.mxu0 0.0
  %682 = vmatpush2.msra.mxu0 0.0
  %683 = vmatprep.subr.mxu0 0.0
  %684 = vmatpush2.msra.mxu0 0.0
  %685 = vmatprep.subr.mxu0 0.0
  %686 = vmatpush2.msra.mxu0 0.0
  %687 = vmatprep.subr.mxu0 0.0
  %688 = vmatpush2.msra.mxu0 0.0
  %689 = vmatprep.subr.mxu0 0.0
  %690 = vmatpush2.msra.mxu0 0.0
  %691 = vmatprep.subr.mxu0 0.0
  %692 = vmatpush2.msra.mxu0 0.0
  %693 = vmatprep.subr.mxu0 0.0
  %694 = vmatpush2.msra.mxu0 0.0
  %695 = vmatprep.subr.mxu0 0.0
  %696 = vmatpush2.msra.mxu0 0.0
  %697 = vmatprep.subr.mxu0 0.0
  %698 = vmatpush2.msra.mxu0 0.0
  %699 = vmatprep.subr.mxu0 0.0
  %700 = vmatpush2.msra.mxu0 0.0
  %701 = vmatprep.subr.mxu0 0.0
  %702 = vmatpush2.msra.mxu0 0.0
  %703 = vmatprep.subr.mxu0 0.0
  %704 = vmatpush2.msra.mxu0 0.0
  %705 = vmatprep.mubr.f32.mxu0 0.0
  %706 = vmatmul.mubr.f32.gmra.mxu0 %v639
  %v707 = vpop.f32.mrf.mxu0
  %v708 = vadd.f32 0.0, %v707
  %v709 = vpop.f32.mrf.mxu0
  %710 = vdwg.mxu0
  %711 = vrot.lane.b32.xlu0 %v121, 56
  %v712 = vpop.permute.xlu0 %711
  %v715 = vsel %vm127, %v634, 0
  %717 = vmatprep.subr.mxu0 0.0
  %718 = vmatpush1.msra.mxu0 0.0
  %719 = vmatprep.subr.mxu0 0.0
  %720 = vmatpush1.msra.mxu0 0.0
  %721 = vmatprep.subr.mxu0 0.0
  %722 = vmatpush1.msra.mxu0 0.0
  %723 = vmatprep.subr.mxu0 0.0
  %724 = vmatpush1.msra.mxu0 0.0
  %725 = vmatprep.subr.mxu0 0.0
  %726 = vmatpush1.msra.mxu0 0.0
  %727 = vmatprep.subr.mxu0 0.0
  %728 = vmatpush1.msra.mxu0 0.0
  %729 = vmatprep.subr.mxu0 0.0
  %730 = vmatpush1.msra.mxu0 0.0
  %731 = vmatprep.subr.mxu0 0.0
  %732 = vmatpush1.msra.mxu0 0.0
  %733 = vmatprep.subr.mxu0 0.0
  %734 = vmatpush1.msra.mxu0 0.0
  %735 = vmatprep.subr.mxu0 0.0
  %736 = vmatpush1.msra.mxu0 0.0
  %737 = vmatprep.subr.mxu0 0.0
  %738 = vmatpush1.msra.mxu0 0.0
  %739 = vmatprep.subr.mxu0 0.0
  %740 = vmatpush1.msra.mxu0 0.0
  %741 = vmatprep.subr.mxu0 0.0
  %742 = vmatpush1.msra.mxu0 0.0
  %743 = vmatprep.subr.mxu0 0.0
  %744 = vmatpush1.msra.mxu0 0.0
  %745 = vmatprep.subr.mxu0 0.0
  %746 = vmatpush1.msra.mxu0 0.0
  %747 = vmatprep.subr.mxu0 0.0
  %748 = vmatpush1.msra.mxu0 %v712
  %749 = vmatprep.subr.mxu0 0.0
  %750 = vmatpush2.msra.mxu0 0.0
  %751 = vmatprep.subr.mxu0 0.0
  %752 = vmatpush2.msra.mxu0 0.0
  %753 = vmatprep.subr.mxu0 0.0
  %754 = vmatpush2.msra.mxu0 0.0
  %755 = vmatprep.subr.mxu0 0.0
  %756 = vmatpush2.msra.mxu0 0.0
  %757 = vmatprep.subr.mxu0 0.0
  %758 = vmatpush2.msra.mxu0 0.0
  %759 = vmatprep.subr.mxu0 0.0
  %760 = vmatpush2.msra.mxu0 0.0
  %761 = vmatprep.subr.mxu0 0.0
  %762 = vmatpush2.msra.mxu0 0.0
  %763 = vmatprep.subr.mxu0 0.0
  %764 = vmatpush2.msra.mxu0 0.0
  %765 = vmatprep.subr.mxu0 0.0
  %766 = vmatpush2.msra.mxu0 0.0
  %767 = vmatprep.subr.mxu0 0.0
  %768 = vmatpush2.msra.mxu0 0.0
  %769 = vmatprep.subr.mxu0 0.0
  %770 = vmatpush2.msra.mxu0 0.0
  %771 = vmatprep.subr.mxu0 0.0
  %772 = vmatpush2.msra.mxu0 0.0
  %773 = vmatprep.subr.mxu0 0.0
  %774 = vmatpush2.msra.mxu0 0.0
  %775 = vmatprep.subr.mxu0 0.0
  %776 = vmatpush2.msra.mxu0 0.0
  %777 = vmatprep.subr.mxu0 0.0
  %778 = vmatpush2.msra.mxu0 0.0
  %779 = vmatprep.subr.mxu0 0.0
  %780 = vmatpush2.msra.mxu0 0.0
  %781 = vmatprep.mubr.f32.mxu0 0.0
  %782 = vmatmul.mubr.f32.gmra.mxu0 %v715
  %v783 = vpop.f32.mrf.mxu0
  %v784 = vadd.f32 0.0, %v783
  %v785 = vpop.f32.mrf.mxu0
  %786 = vdwg.mxu0
  %787 = vrot.lane.b32.xlu0 %v116, 112
  %v788 = vpop.permute.xlu0 %787
  %789 = vrot.lane.b32.xlu0 %v116, 80
  %v790 = vpop.permute.xlu0 %789
  %v791 = vsel %vm127, %v788, 0
  %v793 = vsel %vm127, %v790, 0
  %795 = vmatprep.subr.mxu0 0.0
  %796 = vmatpush1.xpose.msra.mxu0 0.0
  %797 = vmatprep.subr.mxu0 0.0
  %798 = vmatpush1.xpose.msra.mxu0 0.0
  %799 = vmatprep.subr.mxu0 0.0
  %800 = vmatpush1.xpose.msra.mxu0 0.0
  %801 = vmatprep.subr.mxu0 0.0
  %802 = vmatpush1.xpose.msra.mxu0 0.0
  %803 = vmatprep.subr.mxu0 0.0
  %804 = vmatpush1.xpose.msra.mxu0 0.0
  %805 = vmatprep.subr.mxu0 0.0
  %806 = vmatpush1.xpose.msra.mxu0 0.0
  %807 = vmatprep.subr.mxu0 0.0
  %808 = vmatpush1.xpose.msra.mxu0 0.0
  %809 = vmatprep.subr.mxu0 0.0
  %810 = vmatpush1.xpose.msra.mxu0 0.0
  %811 = vmatprep.subr.mxu0 0.0
  %812 = vmatpush1.xpose.msra.mxu0 0.0
  %813 = vmatprep.subr.mxu0 0.0
  %814 = vmatpush1.xpose.msra.mxu0 0.0
  %815 = vmatprep.subr.mxu0 0.0
  %816 = vmatpush1.xpose.msra.mxu0 0.0
  %817 = vmatprep.subr.mxu0 0.0
  %818 = vmatpush1.xpose.msra.mxu0 0.0
  %819 = vmatprep.subr.mxu0 0.0
  %820 = vmatpush1.xpose.msra.mxu0 0.0
  %821 = vmatprep.subr.mxu0 0.0
  %822 = vmatpush1.xpose.msra.mxu0 0.0
  %823 = vmatprep.subr.mxu0 0.0
  %824 = vmatpush1.xpose.msra.mxu0 0.0
  %825 = vmatprep.subr.mxu0 0.0
  %826 = vmatpush1.xpose.msra.mxu0 %v793
  %827 = vmatprep.subr.mxu0 0.0
  %828 = vmatpush2.xpose.msra.mxu0 0.0
  %829 = vmatprep.subr.mxu0 0.0
  %830 = vmatpush2.xpose.msra.mxu0 0.0
  %831 = vmatprep.subr.mxu0 0.0
  %832 = vmatpush2.xpose.msra.mxu0 0.0
  %833 = vmatprep.subr.mxu0 0.0
  %834 = vmatpush2.xpose.msra.mxu0 0.0
  %835 = vmatprep.subr.mxu0 0.0
  %836 = vmatpush2.xpose.msra.mxu0 0.0
  %837 = vmatprep.subr.mxu0 0.0
  %838 = vmatpush2.xpose.msra.mxu0 0.0
  %839 = vmatprep.subr.mxu0 0.0
  %840 = vmatpush2.xpose.msra.mxu0 0.0
  %841 = vmatprep.subr.mxu0 0.0
  %842 = vmatpush2.xpose.msra.mxu0 0.0
  %843 = vmatprep.subr.mxu0 0.0
  %844 = vmatpush2.xpose.msra.mxu0 0.0
  %845 = vmatprep.subr.mxu0 0.0
  %846 = vmatpush2.xpose.msra.mxu0 0.0
  %847 = vmatprep.subr.mxu0 0.0
  %848 = vmatpush2.xpose.msra.mxu0 0.0
  %849 = vmatprep.subr.mxu0 0.0
  %850 = vmatpush2.xpose.msra.mxu0 0.0
  %851 = vmatprep.subr.mxu0 0.0
  %852 = vmatpush2.xpose.msra.mxu0 0.0
  %853 = vmatprep.subr.mxu0 0.0
  %854 = vmatpush2.xpose.msra.mxu0 0.0
  %855 = vmatprep.subr.mxu0 0.0
  %856 = vmatpush2.xpose.msra.mxu0 0.0
  %857 = vmatprep.subr.mxu0 0.0
  %858 = vmatpush2.xpose.msra.mxu0 0.0
  %859 = vmatprep.mubr.f32.mxu0 0.0
  %860 = vmatmul.mubr.f32.gmra.mxu0 %v791
  %v861 = vpop.f32.mrf.mxu0
  %v862 = vadd.f32 0.0, %v861
  %v863 = vpop.f32.mrf.mxu0
  %864 = vdwg.mxu0
  %865 = vrot.lane.b32.xlu0 %v121, 112
  %v866 = vpop.permute.xlu0 %865
  %867 = vrot.lane.b32.xlu0 %v121, 80
  %v868 = vpop.permute.xlu0 %867
  %v869 = vsel %vm127, %v866, 0
  %v871 = vsel %vm127, %v868, 0
  %873 = vmatprep.subr.mxu0 0.0
  %874 = vmatpush1.xpose.msra.mxu0 0.0
  %875 = vmatprep.subr.mxu0 0.0
  %876 = vmatpush1.xpose.msra.mxu0 0.0
  %877 = vmatprep.subr.mxu0 0.0
  %878 = vmatpush1.xpose.msra.mxu0 0.0
  %879 = vmatprep.subr.mxu0 0.0
  %880 = vmatpush1.xpose.msra.mxu0 0.0
  %881 = vmatprep.subr.mxu0 0.0
  %882 = vmatpush1.xpose.msra.mxu0 0.0
  %883 = vmatprep.subr.mxu0 0.0
  %884 = vmatpush1.xpose.msra.mxu0 0.0
  %885 = vmatprep.subr.mxu0 0.0
  %886 = vmatpush1.xpose.msra.mxu0 0.0
  %887 = vmatprep.subr.mxu0 0.0
  %888 = vmatpush1.xpose.msra.mxu0 0.0
  %889 = vmatprep.subr.mxu0 0.0
  %890 = vmatpush1.xpose.msra.mxu0 0.0
  %891 = vmatprep.subr.mxu0 0.0
  %892 = vmatpush1.xpose.msra.mxu0 0.0
  %893 = vmatprep.subr.mxu0 0.0
  %894 = vmatpush1.xpose.msra.mxu0 0.0
  %895 = vmatprep.subr.mxu0 0.0
  %896 = vmatpush1.xpose.msra.mxu0 0.0
  %897 = vmatprep.subr.mxu0 0.0
  %898 = vmatpush1.xpose.msra.mxu0 0.0
  %899 = vmatprep.subr.mxu0 0.0
  %900 = vmatpush1.xpose.msra.mxu0 0.0
  %901 = vmatprep.subr.mxu0 0.0
  %902 = vmatpush1.xpose.msra.mxu0 0.0
  %903 = vmatprep.subr.mxu0 0.0
  %904 = vmatpush1.xpose.msra.mxu0 %v871
  %905 = vmatprep.subr.mxu0 0.0
  %906 = vmatpush2.xpose.msra.mxu0 0.0
  %907 = vmatprep.subr.mxu0 0.0
  %908 = vmatpush2.xpose.msra.mxu0 0.0
  %909 = vmatprep.subr.mxu0 0.0
  %910 = vmatpush2.xpose.msra.mxu0 0.0
  %911 = vmatprep.subr.mxu0 0.0
  %912 = vmatpush2.xpose.msra.mxu0 0.0
  %913 = vmatprep.subr.mxu0 0.0
  %914 = vmatpush2.xpose.msra.mxu0 0.0
  %915 = vmatprep.subr.mxu0 0.0
  %916 = vmatpush2.xpose.msra.mxu0 0.0
  %917 = vmatprep.subr.mxu0 0.0
  %918 = vmatpush2.xpose.msra.mxu0 0.0
  %919 = vmatprep.subr.mxu0 0.0
  %920 = vmatpush2.xpose.msra.mxu0 0.0
  %921 = vmatprep.subr.mxu0 0.0
  %922 = vmatpush2.xpose.msra.mxu0 0.0
  %923 = vmatprep.subr.mxu0 0.0
  %924 = vmatpush2.xpose.msra.mxu0 0.0
  %925 = vmatprep.subr.mxu0 0.0
  %926 = vmatpush2.xpose.msra.mxu0 0.0
  %927 = vmatprep.subr.mxu0 0.0
  %928 = vmatpush2.xpose.msra.mxu0 0.0
  %929 = vmatprep.subr.mxu0 0.0
  %930 = vmatpush2.xpose.msra.mxu0 0.0
  %931 = vmatprep.subr.mxu0 0.0
  %932 = vmatpush2.xpose.msra.mxu0 0.0
  %933 = vmatprep.subr.mxu0 0.0
  %934 = vmatpush2.xpose.msra.mxu0 0.0
  %935 = vmatprep.subr.mxu0 0.0
  %936 = vmatpush2.xpose.msra.mxu0 0.0
  %937 = vmatprep.mubr.f32.mxu0 0.0
  %938 = vmatmul.mubr.f32.gmra.mxu0 %v869
  %v939 = vpop.f32.mrf.mxu0
  %v940 = vadd.f32 0.0, %v939
  %v941 = vpop.f32.mrf.mxu0
  %942 = vdwg.mxu0
  %v943 = vmul.f32 %v862, 0.35355338
  %v944 = vmul.f32 %v940, 0.35355338
  %v945 = vsel %vm127, %v943, -inf
  %946 = vmax.xlane.f32.xlu0 %v945
  %v947 = vpop.xlane.xlu0 %946
  %v948 = vsel %vm127, %v944, -inf
  %949 = vmax.xlane.f32.xlu0 %v948
  %v950 = vpop.xlane.xlu0 %949
  %v951 = vsub.f32 %v943, %v947
  %v952 = vsub.f32 %v944, %v950
  %v953 = vmul.f32 %v951, 1.442695
  %v954 = vpow.pop %v953
  %v955 = vmul.f32 %v952, 1.442695
  %v956 = vpow.pop %v955
  %v957 = vsel %vm127, %v954, 0.0
  %958 = vadd.xlane.f32.xlu0 %v957
  %v959 = vpop.xlane.xlu0 %958
  %v960 = vsel %vm127, %v956, 0.0
  %961 = vadd.xlane.f32.xlu0 %v960
  %v962 = vpop.xlane.xlu0 %961
  %v963 = vrcp.pop %v959
  %v964 = vmul.f32 %v954, %v963
  %v965 = vrcp.pop %v962
  %v966 = vmul.f32 %v956, %v965
  %967 = vrot.lane.b32.xlu0 %v116, 48
  %v968 = vpop.permute.xlu0 %967
  %v971 = vsel %vm127, %v964, 0
  %973 = vmatprep.subr.mxu0 0.0
  %974 = vmatpush1.msra.mxu0 0.0
  %975 = vmatprep.subr.mxu0 0.0
  %976 = vmatpush1.msra.mxu0 0.0
  %977 = vmatprep.subr.mxu0 0.0
  %978 = vmatpush1.msra.mxu0 0.0
  %979 = vmatprep.subr.mxu0 0.0
  %980 = vmatpush1.msra.mxu0 0.0
  %981 = vmatprep.subr.mxu0 0.0
  %982 = vmatpush1.msra.mxu0 0.0
  %983 = vmatprep.subr.mxu0 0.0
  %984 = vmatpush1.msra.mxu0 0.0
  %985 = vmatprep.subr.mxu0 0.0
  %986 = vmatpush1.msra.mxu0 0.0
  %987 = vmatprep.subr.mxu0 0.0
  %988 = vmatpush1.msra.mxu0 0.0
  %989 = vmatprep.subr.mxu0 0.0
  %990 = vmatpush1.msra.mxu0 0.0
  %991 = vmatprep.subr.mxu0 0.0
  %992 = vmatpush1.msra.mxu0 0.0
  %993 = vmatprep.subr.mxu0 0.0
  %994 = vmatpush1.msra.mxu0 0.0
  %995 = vmatprep.subr.mxu0 0.0
  %996 = vmatpush1.msra.mxu0 0.0
  %997 = vmatprep.subr.mxu0 0.0
  %998 = vmatpush1.msra.mxu0 0.0
  %999 = vmatprep.subr.mxu0 0.0
  %1000 = vmatpush1.msra.mxu0 0.0
  %1001 = vmatprep.subr.mxu0 0.0
  %1002 = vmatpush1.msra.mxu0 0.0
  %1003 = vmatprep.subr.mxu0 0.0
  %1004 = vmatpush1.msra.mxu0 %v968
  %1005 = vmatprep.subr.mxu0 0.0
  %1006 = vmatpush2.msra.mxu0 0.0
  %1007 = vmatprep.subr.mxu0 0.0
  %1008 = vmatpush2.msra.mxu0 0.0
  %1009 = vmatprep.subr.mxu0 0.0
  %1010 = vmatpush2.msra.mxu0 0.0
  %1011 = vmatprep.subr.mxu0 0.0
  %1012 = vmatpush2.msra.mxu0 0.0
  %1013 = vmatprep.subr.mxu0 0.0
  %1014 = vmatpush2.msra.mxu0 0.0
  %1015 = vmatprep.subr.mxu0 0.0
  %1016 = vmatpush2.msra.mxu0 0.0
  %1017 = vmatprep.subr.mxu0 0.0
  %1018 = vmatpush2.msra.mxu0 0.0
  %1019 = vmatprep.subr.mxu0 0.0
  %1020 = vmatpush2.msra.mxu0 0.0
  %1021 = vmatprep.subr.mxu0 0.0
  %1022 = vmatpush2.msra.mxu0 0.0
  %1023 = vmatprep.subr.mxu0 0.0
  %1024 = vmatpush2.msra.mxu0 0.0
  %1025 = vmatprep.subr.mxu0 0.0
  %1026 = vmatpush2.msra.mxu0 0.0
  %1027 = vmatprep.subr.mxu0 0.0
  %1028 = vmatpush2.msra.mxu0 0.0
  %1029 = vmatprep.subr.mxu0 0.0
  %1030 = vmatpush2.msra.mxu0 0.0
  %1031 = vmatprep.subr.mxu0 0.0
  %1032 = vmatpush2.msra.mxu0 0.0
  %1033 = vmatprep.subr.mxu0 0.0
  %1034 = vmatpush2.msra.mxu0 0.0
  %1035 = vmatprep.subr.mxu0 0.0
  %1036 = vmatpush2.msra.mxu0 0.0
  %1037 = vmatprep.mubr.f32.mxu0 0.0
  %1038 = vmatmul.mubr.f32.gmra.mxu0 %v971
  %v1039 = vpop.f32.mrf.mxu0
  %v1040 = vadd.f32 0.0, %v1039
  %v1041 = vpop.f32.mrf.mxu0
  %1042 = vdwg.mxu0
  %1043 = vrot.lane.b32.xlu0 %v121, 48
  %v1044 = vpop.permute.xlu0 %1043
  %v1047 = vsel %vm127, %v966, 0
  %1049 = vmatprep.subr.mxu0 0.0
  %1050 = vmatpush1.msra.mxu0 0.0
  %1051 = vmatprep.subr.mxu0 0.0
  %1052 = vmatpush1.msra.mxu0 0.0
  %1053 = vmatprep.subr.mxu0 0.0
  %1054 = vmatpush1.msra.mxu0 0.0
  %1055 = vmatprep.subr.mxu0 0.0
  %1056 = vmatpush1.msra.mxu0 0.0
  %1057 = vmatprep.subr.mxu0 0.0
  %1058 = vmatpush1.msra.mxu0 0.0
  %1059 = vmatprep.subr.mxu0 0.0
  %1060 = vmatpush1.msra.mxu0 0.0
  %1061 = vmatprep.subr.mxu0 0.0
  %1062 = vmatpush1.msra.mxu0 0.0
  %1063 = vmatprep.subr.mxu0 0.0
  %1064 = vmatpush1.msra.mxu0 0.0
  %1065 = vmatprep.subr.mxu0 0.0
  %1066 = vmatpush1.msra.mxu0 0.0
  %1067 = vmatprep.subr.mxu0 0.0
  %1068 = vmatpush1.msra.mxu0 0.0
  %1069 = vmatprep.subr.mxu0 0.0
  %1070 = vmatpush1.msra.mxu0 0.0
  %1071 = vmatprep.subr.mxu0 0.0
  %1072 = vmatpush1.msra.mxu0 0.0
  %1073 = vmatprep.subr.mxu0 0.0
  %1074 = vmatpush1.msra.mxu0 0.0
  %1075 = vmatprep.subr.mxu0 0.0
  %1076 = vmatpush1.msra.mxu0 0.0
  %1077 = vmatprep.subr.mxu0 0.0
  %1078 = vmatpush1.msra.mxu0 0.0
  %1079 = vmatprep.subr.mxu0 0.0
  %1080 = vmatpush1.msra.mxu0 %v1044
  %1081 = vmatprep.subr.mxu0 0.0
  %1082 = vmatpush2.msra.mxu0 0.0
  %1083 = vmatprep.subr.mxu0 0.0
  %1084 = vmatpush2.msra.mxu0 0.0
  %1085 = vmatprep.subr.mxu0 0.0
  %1086 = vmatpush2.msra.mxu0 0.0
  %1087 = vmatprep.subr.mxu0 0.0
  %1088 = vmatpush2.msra.mxu0 0.0
  %1089 = vmatprep.subr.mxu0 0.0
  %1090 = vmatpush2.msra.mxu0 0.0
  %1091 = vmatprep.subr.mxu0 0.0
  %1092 = vmatpush2.msra.mxu0 0.0
  %1093 = vmatprep.subr.mxu0 0.0
  %1094 = vmatpush2.msra.mxu0 0.0
  %1095 = vmatprep.subr.mxu0 0.0
  %1096 = vmatpush2.msra.mxu0 0.0
  %1097 = vmatprep.subr.mxu0 0.0
  %1098 = vmatpush2.msra.mxu0 0.0
  %1099 = vmatprep.subr.mxu0 0.0
  %1100 = vmatpush2.msra.mxu0 0.0
  %1101 = vmatprep.subr.mxu0 0.0
  %1102 = vmatpush2.msra.mxu0 0.0
  %1103 = vmatprep.subr.mxu0 0.0
  %1104 = vmatpush2.msra.mxu0 0.0
  %1105 = vmatprep.subr.mxu0 0.0
  %1106 = vmatpush2.msra.mxu0 0.0
  %1107 = vmatprep.subr.mxu0 0.0
  %1108 = vmatpush2.msra.mxu0 0.0
  %1109 = vmatprep.subr.mxu0 0.0
  %1110 = vmatpush2.msra.mxu0 0.0
  %1111 = vmatprep.subr.mxu0 0.0
  %1112 = vmatpush2.msra.mxu0 0.0
  %1113 = vmatprep.mubr.f32.mxu0 0.0
  %1114 = vmatmul.mubr.f32.gmra.mxu0 %v1047
  %v1115 = vpop.f32.mrf.mxu0
  %v1116 = vadd.f32 0.0, %v1115
  %v1117 = vpop.f32.mrf.mxu0
  %1118 = vdwg.mxu0
  %1119 = vrot.lane.b32.xlu0 %v116, 104
  %v1120 = vpop.permute.xlu0 %1119
  %1121 = vrot.lane.b32.xlu0 %v116, 72
  %v1122 = vpop.permute.xlu0 %1121
  %v1123 = vsel %vm127, %v1120, 0
  %v1125 = vsel %vm127, %v1122, 0
  %1127 = vmatprep.subr.mxu0 0.0
  %1128 = vmatpush1.xpose.msra.mxu0 0.0
  %1129 = vmatprep.subr.mxu0 0.0
  %1130 = vmatpush1.xpose.msra.mxu0 0.0
  %1131 = vmatprep.subr.mxu0 0.0
  %1132 = vmatpush1.xpose.msra.mxu0 0.0
  %1133 = vmatprep.subr.mxu0 0.0
  %1134 = vmatpush1.xpose.msra.mxu0 0.0
  %1135 = vmatprep.subr.mxu0 0.0
  %1136 = vmatpush1.xpose.msra.mxu0 0.0
  %1137 = vmatprep.subr.mxu0 0.0
  %1138 = vmatpush1.xpose.msra.mxu0 0.0
  %1139 = vmatprep.subr.mxu0 0.0
  %1140 = vmatpush1.xpose.msra.mxu0 0.0
  %1141 = vmatprep.subr.mxu0 0.0
  %1142 = vmatpush1.xpose.msra.mxu0 0.0
  %1143 = vmatprep.subr.mxu0 0.0
  %1144 = vmatpush1.xpose.msra.mxu0 0.0
  %1145 = vmatprep.subr.mxu0 0.0
  %1146 = vmatpush1.xpose.msra.mxu0 0.0
  %1147 = vmatprep.subr.mxu0 0.0
  %1148 = vmatpush1.xpose.msra.mxu0 0.0
  %1149 = vmatprep.subr.mxu0 0.0
  %1150 = vmatpush1.xpose.msra.mxu0 0.0
  %1151 = vmatprep.subr.mxu0 0.0
  %1152 = vmatpush1.xpose.msra.mxu0 0.0
  %1153 = vmatprep.subr.mxu0 0.0
  %1154 = vmatpush1.xpose.msra.mxu0 0.0
  %1155 = vmatprep.subr.mxu0 0.0
  %1156 = vmatpush1.xpose.msra.mxu0 0.0
  %1157 = vmatprep.subr.mxu0 0.0
  %1158 = vmatpush1.xpose.msra.mxu0 %v1125
  %1159 = vmatprep.subr.mxu0 0.0
  %1160 = vmatpush2.xpose.msra.mxu0 0.0
  %1161 = vmatprep.subr.mxu0 0.0
  %1162 = vmatpush2.xpose.msra.mxu0 0.0
  %1163 = vmatprep.subr.mxu0 0.0
  %1164 = vmatpush2.xpose.msra.mxu0 0.0
  %1165 = vmatprep.subr.mxu0 0.0
  %1166 = vmatpush2.xpose.msra.mxu0 0.0
  %1167 = vmatprep.subr.mxu0 0.0
  %1168 = vmatpush2.xpose.msra.mxu0 0.0
  %1169 = vmatprep.subr.mxu0 0.0
  %1170 = vmatpush2.xpose.msra.mxu0 0.0
  %1171 = vmatprep.subr.mxu0 0.0
  %1172 = vmatpush2.xpose.msra.mxu0 0.0
  %1173 = vmatprep.subr.mxu0 0.0
  %1174 = vmatpush2.xpose.msra.mxu0 0.0
  %1175 = vmatprep.subr.mxu0 0.0
  %1176 = vmatpush2.xpose.msra.mxu0 0.0
  %1177 = vmatprep.subr.mxu0 0.0
  %1178 = vmatpush2.xpose.msra.mxu0 0.0
  %1179 = vmatprep.subr.mxu0 0.0
  %1180 = vmatpush2.xpose.msra.mxu0 0.0
  %1181 = vmatprep.subr.mxu0 0.0
  %1182 = vmatpush2.xpose.msra.mxu0 0.0
  %1183 = vmatprep.subr.mxu0 0.0
  %1184 = vmatpush2.xpose.msra.mxu0 0.0
  %1185 = vmatprep.subr.mxu0 0.0
  %1186 = vmatpush2.xpose.msra.mxu0 0.0
  %1187 = vmatprep.subr.mxu0 0.0
  %1188 = vmatpush2.xpose.msra.mxu0 0.0
  %1189 = vmatprep.subr.mxu0 0.0
  %1190 = vmatpush2.xpose.msra.mxu0 0.0
  %1191 = vmatprep.mubr.f32.mxu0 0.0
  %1192 = vmatmul.mubr.f32.gmra.mxu0 %v1123
  %v1193 = vpop.f32.mrf.mxu0
  %v1194 = vadd.f32 0.0, %v1193
  %v1195 = vpop.f32.mrf.mxu0
  %1196 = vdwg.mxu0
  %1197 = vrot.lane.b32.xlu0 %v121, 104
  %v1198 = vpop.permute.xlu0 %1197
  %1199 = vrot.lane.b32.xlu0 %v121, 72
  %v1200 = vpop.permute.xlu0 %1199
  %v1201 = vsel %vm127, %v1198, 0
  %v1203 = vsel %vm127, %v1200, 0
  %1205 = vmatprep.subr.mxu0 0.0
  %1206 = vmatpush1.xpose.msra.mxu0 0.0
  %1207 = vmatprep.subr.mxu0 0.0
  %1208 = vmatpush1.xpose.msra.mxu0 0.0
  %1209 = vmatprep.subr.mxu0 0.0
  %1210 = vmatpush1.xpose.msra.mxu0 0.0
  %1211 = vmatprep.subr.mxu0 0.0
  %1212 = vmatpush1.xpose.msra.mxu0 0.0
  %1213 = vmatprep.subr.mxu0 0.0
  %1214 = vmatpush1.xpose.msra.mxu0 0.0
  %1215 = vmatprep.subr.mxu0 0.0
  %1216 = vmatpush1.xpose.msra.mxu0 0.0
  %1217 = vmatprep.subr.mxu0 0.0
  %1218 = vmatpush1.xpose.msra.mxu0 0.0
  %1219 = vmatprep.subr.mxu0 0.0
  %1220 = vmatpush1.xpose.msra.mxu0 0.0
  %1221 = vmatprep.subr.mxu0 0.0
  %1222 = vmatpush1.xpose.msra.mxu0 0.0
  %1223 = vmatprep.subr.mxu0 0.0
  %1224 = vmatpush1.xpose.msra.mxu0 0.0
  %1225 = vmatprep.subr.mxu0 0.0
  %1226 = vmatpush1.xpose.msra.mxu0 0.0
  %1227 = vmatprep.subr.mxu0 0.0
  %1228 = vmatpush1.xpose.msra.mxu0 0.0
  %1229 = vmatprep.subr.mxu0 0.0
  %1230 = vmatpush1.xpose.msra.mxu0 0.0
  %1231 = vmatprep.subr.mxu0 0.0
  %1232 = vmatpush1.xpose.msra.mxu0 0.0
  %1233 = vmatprep.subr.mxu0 0.0
  %1234 = vmatpush1.xpose.msra.mxu0 0.0
  %1235 = vmatprep.subr.mxu0 0.0
  %1236 = vmatpush1.xpose.msra.mxu0 %v1203
  %1237 = vmatprep.subr.mxu0 0.0
  %1238 = vmatpush2.xpose.msra.mxu0 0.0
  %1239 = vmatprep.subr.mxu0 0.0
  %1240 = vmatpush2.xpose.msra.mxu0 0.0
  %1241 = vmatprep.subr.mxu0 0.0
  %1242 = vmatpush2.xpose.msra.mxu0 0.0
  %1243 = vmatprep.subr.mxu0 0.0
  %1244 = vmatpush2.xpose.msra.mxu0 0.0
  %1245 = vmatprep.subr.mxu0 0.0
  %1246 = vmatpush2.xpose.msra.mxu0 0.0
  %1247 = vmatprep.subr.mxu0 0.0
  %1248 = vmatpush2.xpose.msra.mxu0 0.0
  %1249 = vmatprep.subr.mxu0 0.0
  %1250 = vmatpush2.xpose.msra.mxu0 0.0
  %1251 = vmatprep.subr.mxu0 0.0
  %1252 = vmatpush2.xpose.msra.mxu0 0.0
  %1253 = vmatprep.subr.mxu0 0.0
  %1254 = vmatpush2.xpose.msra.mxu0 0.0
  %1255 = vmatprep.subr.mxu0 0.0
  %1256 = vmatpush2.xpose.msra.mxu0 0.0
  %1257 = vmatprep.subr.mxu0 0.0
  %1258 = vmatpush2.xpose.msra.mxu0 0.0
  %1259 = vmatprep.subr.mxu0 0.0
  %1260 = vmatpush2.xpose.msra.mxu0 0.0
  %1261 = vmatprep.subr.mxu0 0.0
  %1262 = vmatpush2.xpose.msra.mxu0 0.0
  %1263 = vmatprep.subr.mxu0 0.0
  %1264 = vmatpush2.xpose.msra.mxu0 0.0
  %1265 = vmatprep.subr.mxu0 0.0
  %1266 = vmatpush2.xpose.msra.mxu0 0.0
  %1267 = vmatprep.subr.mxu0 0.0
  %1268 = vmatpush2.xpose.msra.mxu0 0.0
  %1269 = vmatprep.mubr.f32.mxu0 0.0
  %1270 = vmatmul.mubr.f32.gmra.mxu0 %v1201
  %v1271 = vpop.f32.mrf.mxu0
  %v1272 = vadd.f32 0.0, %v1271
  %v1273 = vpop.f32.mrf.mxu0
  %1274 = vdwg.mxu0
  %v1275 = vmul.f32 %v1194, 0.35355338
  %v1276 = vmul.f32 %v1272, 0.35355338
  %v1277 = vsel %vm127, %v1275, -inf
  %1278 = vmax.xlane.f32.xlu0 %v1277
  %v1279 = vpop.xlane.xlu0 %1278
  %v1280 = vsel %vm127, %v1276, -inf
  %1281 = vmax.xlane.f32.xlu0 %v1280
  %v1282 = vpop.xlane.xlu0 %1281
  %v1283 = vsub.f32 %v1275, %v1279
  %v1284 = vsub.f32 %v1276, %v1282
  %v1285 = vmul.f32 %v1283, 1.442695
  %v1286 = vpow.pop %v1285
  %v1287 = vmul.f32 %v1284, 1.442695
  %v1288 = vpow.pop %v1287
  %v1289 = vsel %vm127, %v1286, 0.0
  %1290 = vadd.xlane.f32.xlu0 %v1289
  %v1291 = vpop.xlane.xlu0 %1290
  %v1292 = vsel %vm127, %v1288, 0.0
  %1293 = vadd.xlane.f32.xlu0 %v1292
  %v1294 = vpop.xlane.xlu0 %1293
  %v1295 = vrcp.pop %v1291
  %v1296 = vmul.f32 %v1286, %v1295
  %v1297 = vrcp.pop %v1294
  %v1298 = vmul.f32 %v1288, %v1297
  %1299 = vrot.lane.b32.xlu0 %v116, 40
  %v1300 = vpop.permute.xlu0 %1299
  %v1303 = vsel %vm127, %v1296, 0
  %1305 = vmatprep.subr.mxu0 0.0
  %1306 = vmatpush1.msra.mxu0 0.0
  %1307 = vmatprep.subr.mxu0 0.0
  %1308 = vmatpush1.msra.mxu0 0.0
  %1309 = vmatprep.subr.mxu0 0.0
  %1310 = vmatpush1.msra.mxu0 0.0
  %1311 = vmatprep.subr.mxu0 0.0
  %1312 = vmatpush1.msra.mxu0 0.0
  %1313 = vmatprep.subr.mxu0 0.0
  %1314 = vmatpush1.msra.mxu0 0.0
  %1315 = vmatprep.subr.mxu0 0.0
  %1316 = vmatpush1.msra.mxu0 0.0
  %1317 = vmatprep.subr.mxu0 0.0
  %1318 = vmatpush1.msra.mxu0 0.0
  %1319 = vmatprep.subr.mxu0 0.0
  %1320 = vmatpush1.msra.mxu0 0.0
  %1321 = vmatprep.subr.mxu0 0.0
  %1322 = vmatpush1.msra.mxu0 0.0
  %1323 = vmatprep.subr.mxu0 0.0
  %1324 = vmatpush1.msra.mxu0 0.0
  %1325 = vmatprep.subr.mxu0 0.0
  %1326 = vmatpush1.msra.mxu0 0.0
  %1327 = vmatprep.subr.mxu0 0.0
  %1328 = vmatpush1.msra.mxu0 0.0
  %1329 = vmatprep.subr.mxu0 0.0
  %1330 = vmatpush1.msra.mxu0 0.0
  %1331 = vmatprep.subr.mxu0 0.0
  %1332 = vmatpush1.msra.mxu0 0.0
  %1333 = vmatprep.subr.mxu0 0.0
  %1334 = vmatpush1.msra.mxu0 0.0
  %1335 = vmatprep.subr.mxu0 0.0
  %1336 = vmatpush1.msra.mxu0 %v1300
  %1337 = vmatprep.subr.mxu0 0.0
  %1338 = vmatpush2.msra.mxu0 0.0
  %1339 = vmatprep.subr.mxu0 0.0
  %1340 = vmatpush2.msra.mxu0 0.0
  %1341 = vmatprep.subr.mxu0 0.0
  %1342 = vmatpush2.msra.mxu0 0.0
  %1343 = vmatprep.subr.mxu0 0.0
  %1344 = vmatpush2.msra.mxu0 0.0
  %1345 = vmatprep.subr.mxu0 0.0
  %1346 = vmatpush2.msra.mxu0 0.0
  %1347 = vmatprep.subr.mxu0 0.0
  %1348 = vmatpush2.msra.mxu0 0.0
  %1349 = vmatprep.subr.mxu0 0.0
  %1350 = vmatpush2.msra.mxu0 0.0
  %1351 = vmatprep.subr.mxu0 0.0
  %1352 = vmatpush2.msra.mxu0 0.0
  %1353 = vmatprep.subr.mxu0 0.0
  %1354 = vmatpush2.msra.mxu0 0.0
  %1355 = vmatprep.subr.mxu0 0.0
  %1356 = vmatpush2.msra.mxu0 0.0
  %1357 = vmatprep.subr.mxu0 0.0
  %1358 = vmatpush2.msra.mxu0 0.0
  %1359 = vmatprep.subr.mxu0 0.0
  %1360 = vmatpush2.msra.mxu0 0.0
  %1361 = vmatprep.subr.mxu0 0.0
  %1362 = vmatpush2.msra.mxu0 0.0
  %1363 = vmatprep.subr.mxu0 0.0
  %1364 = vmatpush2.msra.mxu0 0.0
  %1365 = vmatprep.subr.mxu0 0.0
  %1366 = vmatpush2.msra.mxu0 0.0
  %1367 = vmatprep.subr.mxu0 0.0
  %1368 = vmatpush2.msra.mxu0 0.0
  %1369 = vmatprep.mubr.f32.mxu0 0.0
  %1370 = vmatmul.mubr.f32.gmra.mxu0 %v1303
  %v1371 = vpop.f32.mrf.mxu0
  %v1372 = vadd.f32 0.0, %v1371
  %v1373 = vpop.f32.mrf.mxu0
  %1374 = vdwg.mxu0
  %1375 = vrot.lane.b32.xlu0 %v121, 40
  %v1376 = vpop.permute.xlu0 %1375
  %v1379 = vsel %vm127, %v1298, 0
  %1381 = vmatprep.subr.mxu0 0.0
  %1382 = vmatpush1.msra.mxu0 0.0
  %1383 = vmatprep.subr.mxu0 0.0
  %1384 = vmatpush1.msra.mxu0 0.0
  %1385 = vmatprep.subr.mxu0 0.0
  %1386 = vmatpush1.msra.mxu0 0.0
  %1387 = vmatprep.subr.mxu0 0.0
  %1388 = vmatpush1.msra.mxu0 0.0
  %1389 = vmatprep.subr.mxu0 0.0
  %1390 = vmatpush1.msra.mxu0 0.0
  %1391 = vmatprep.subr.mxu0 0.0
  %1392 = vmatpush1.msra.mxu0 0.0
  %1393 = vmatprep.subr.mxu0 0.0
  %1394 = vmatpush1.msra.mxu0 0.0
  %1395 = vmatprep.subr.mxu0 0.0
  %1396 = vmatpush1.msra.mxu0 0.0
  %1397 = vmatprep.subr.mxu0 0.0
  %1398 = vmatpush1.msra.mxu0 0.0
  %1399 = vmatprep.subr.mxu0 0.0
  %1400 = vmatpush1.msra.mxu0 0.0
  %1401 = vmatprep.subr.mxu0 0.0
  %1402 = vmatpush1.msra.mxu0 0.0
  %1403 = vmatprep.subr.mxu0 0.0
  %1404 = vmatpush1.msra.mxu0 0.0
  %1405 = vmatprep.subr.mxu0 0.0
  %1406 = vmatpush1.msra.mxu0 0.0
  %1407 = vmatprep.subr.mxu0 0.0
  %1408 = vmatpush1.msra.mxu0 0.0
  %1409 = vmatprep.subr.mxu0 0.0
  %1410 = vmatpush1.msra.mxu0 0.0
  %1411 = vmatprep.subr.mxu0 0.0
  %1412 = vmatpush1.msra.mxu0 %v1376
  %1413 = vmatprep.subr.mxu0 0.0
  %1414 = vmatpush2.msra.mxu0 0.0
  %1415 = vmatprep.subr.mxu0 0.0
  %1416 = vmatpush2.msra.mxu0 0.0
  %1417 = vmatprep.subr.mxu0 0.0
  %1418 = vmatpush2.msra.mxu0 0.0
  %1419 = vmatprep.subr.mxu0 0.0
  %1420 = vmatpush2.msra.mxu0 0.0
  %1421 = vmatprep.subr.mxu0 0.0
  %1422 = vmatpush2.msra.mxu0 0.0
  %1423 = vmatprep.subr.mxu0 0.0
  %1424 = vmatpush2.msra.mxu0 0.0
  %1425 = vmatprep.subr.mxu0 0.0
  %1426 = vmatpush2.msra.mxu0 0.0
  %1427 = vmatprep.subr.mxu0 0.0
  %1428 = vmatpush2.msra.mxu0 0.0
  %1429 = vmatprep.subr.mxu0 0.0
  %1430 = vmatpush2.msra.mxu0 0.0
  %1431 = vmatprep.subr.mxu0 0.0
  %1432 = vmatpush2.msra.mxu0 0.0
  %1433 = vmatprep.subr.mxu0 0.0
  %1434 = vmatpush2.msra.mxu0 0.0
  %1435 = vmatprep.subr.mxu0 0.0
  %1436 = vmatpush2.msra.mxu0 0.0
  %1437 = vmatprep.subr.mxu0 0.0
  %1438 = vmatpush2.msra.mxu0 0.0
  %1439 = vmatprep.subr.mxu0 0.0
  %1440 = vmatpush2.msra.mxu0 0.0
  %1441 = vmatprep.subr.mxu0 0.0
  %1442 = vmatpush2.msra.mxu0 0.0
  %1443 = vmatprep.subr.mxu0 0.0
  %1444 = vmatpush2.msra.mxu0 0.0
  %1445 = vmatprep.mubr.f32.mxu0 0.0
  %1446 = vmatmul.mubr.f32.gmra.mxu0 %v1379
  %v1447 = vpop.f32.mrf.mxu0
  %v1448 = vadd.f32 0.0, %v1447
  %v1449 = vpop.f32.mrf.mxu0
  %1450 = vdwg.mxu0
  %1453 = vrot.lane.b32.xlu0 %v708, 8
  %v1454 = vpop.permute.xlu0 %1453
  %1455 = vrot.lane.b32.xlu0 %v784, 8
  %v1456 = vpop.permute.xlu0 %1455
  %1461 = vrot.lane.b32.xlu0 %v1040, 16
  %v1462 = vpop.permute.xlu0 %1461
  %1463 = vrot.lane.b32.xlu0 %v1116, 16
  %v1464 = vpop.permute.xlu0 %1463
  %1469 = vrot.lane.b32.xlu0 %v1372, 24
  %v1470 = vpop.permute.xlu0 %1469
  %1471 = vrot.lane.b32.xlu0 %v1448, 24
  %v1472 = vpop.permute.xlu0 %1471
  %v1475 = vsel %vm127, %v376, %v1454
  %v1476 = vsel %vm127, %v452, %v1456
  %vm1477 = vcmask 130048
  %v1478 = vsel %vm1477, %v1475, %v1462
  %v1479 = vsel %vm1477, %v1476, %v1464
  %vm1480 = vcmask 195584
  %v1481 = vsel %vm1480, %v1478, %v1470
  %v1482 = vsel %vm1480, %v1479, %v1472
  %v1483 = vlaneseq
  %v1484 = vshrl.u32 %v1483, 7
  %v1485 = vsub.s32 2, %v1484
  %v1486 = vrot.slane %v36, %v1485
  %v1488 = vsel %vm42, %v1481, 0
  %v1491 = vsel %vm42, %v1482, 0
  %1493 = vmatprep.subr.mxu0 0.0
  %1494 = vmatpush1.msra.mxu0 0.0
  %1495 = vmatprep.subr.mxu0 0.0
  %1496 = vmatpush1.msra.mxu0 0.0
  %1497 = vmatprep.subr.mxu0 0.0
  %1498 = vmatpush1.msra.mxu0 0.0
  %1499 = vmatprep.subr.mxu0 0.0
  %1500 = vmatpush1.msra.mxu0 0.0
  %1501 = vmatprep.subr.mxu0 0.0
  %1502 = vmatpush1.msra.mxu0 0.0
  %1503 = vmatprep.subr.mxu0 0.0
  %1504 = vmatpush1.msra.mxu0 0.0
  %1505 = vmatprep.subr.mxu0 0.0
  %1506 = vmatpush1.msra.mxu0 0.0
  %1507 = vmatprep.subr.mxu0 0.0
  %1508 = vmatpush1.msra.mxu0 0.0
  %1509 = vmatprep.subr.mxu0 0.0
  %1510 = vmatpush1.msra.mxu0 0.0
  %1511 = vmatprep.subr.mxu0 0.0
  %1512 = vmatpush1.msra.mxu0 0.0
  %1513 = vmatprep.subr.mxu0 0.0
  %1514 = vmatpush1.msra.mxu0 0.0
  %1515 = vmatprep.subr.mxu0 0.0
  %1516 = vmatpush1.msra.mxu0 0.0
  %1517 = vmatprep.subr.mxu0 0.0
  %1518 = vmatpush1.msra.mxu0 %v35
  %1519 = vmatprep.subr.mxu0 0.0
  %1520 = vmatpush1.msra.mxu0 %v34
  %1521 = vmatprep.subr.mxu0 0.0
  %1522 = vmatpush1.msra.mxu0 %v33
  %1523 = vmatprep.subr.mxu0 0.0
  %1524 = vmatpush1.msra.mxu0 %v32
  %1525 = vmatprep.subr.mxu0 0.0
  %1526 = vmatpush2.msra.mxu0 0.0
  %1527 = vmatprep.subr.mxu0 0.0
  %1528 = vmatpush2.msra.mxu0 0.0
  %1529 = vmatprep.subr.mxu0 0.0
  %1530 = vmatpush2.msra.mxu0 0.0
  %1531 = vmatprep.subr.mxu0 0.0
  %1532 = vmatpush2.msra.mxu0 0.0
  %1533 = vmatprep.subr.mxu0 0.0
  %1534 = vmatpush2.msra.mxu0 0.0
  %1535 = vmatprep.subr.mxu0 0.0
  %1536 = vmatpush2.msra.mxu0 0.0
  %1537 = vmatprep.subr.mxu0 0.0
  %1538 = vmatpush2.msra.mxu0 0.0
  %1539 = vmatprep.subr.mxu0 0.0
  %1540 = vmatpush2.msra.mxu0 0.0
  %1541 = vmatprep.subr.mxu0 0.0
  %1542 = vmatpush2.msra.mxu0 0.0
  %1543 = vmatprep.subr.mxu0 0.0
  %1544 = vmatpush2.msra.mxu0 0.0
  %1545 = vmatprep.subr.mxu0 0.0
  %1546 = vmatpush2.msra.mxu0 0.0
  %1547 = vmatprep.subr.mxu0 0.0
  %1548 = vmatpush2.msra.mxu0 0.0
  %1549 = vmatprep.subr.mxu0 0.0
  %1550 = vmatpush2.msra.mxu0 0.0
  %1551 = vmatprep.subr.mxu0 0.0
  %1552 = vmatpush2.msra.mxu0 0.0
  %1553 = vmatprep.subr.mxu0 0.0
  %1554 = vmatpush2.msra.mxu0 0.0
  %1555 = vmatprep.subr.mxu0 0.0
  %1556 = vmatpush2.msra.mxu0 0.0
  %1557 = vmatprep.mubr.f32.mxu0 0.0
  %1558 = vmatmul.mubr.f32.gmra.mxu0 %v1488
  %v1559 = vpop.f32.mrf.mxu0
  %v1560 = vadd.f32 %v1486, %v1559
  %v1561 = vpop.f32.mrf.mxu0
  %1562 = vmatprep.mubr.f32.mxu0 0.0
  %1563 = vmatmul.mubr.f32.gmra.mxu0 %v1491
  %v1564 = vpop.f32.mrf.mxu0
  %v1565 = vadd.f32 %v1486, %v1564
  %v1566 = vpop.f32.mrf.mxu0
  %1567 = vdwg.mxu0
  %v1568 = vadd.f32 %v26, %v1560
  %v1569 = vadd.f32 %v27, %v1565
  %v1570 = vsel %vm42, %v1568, 0.0
  %1571 = vadd.xlane.f32.xlu0 %v1570
  %v1572 = vpop.xlane.xlu0 %1571
  %v1573 = vsel %vm42, %v1569, 0.0
  %1574 = vadd.xlane.f32.xlu0 %v1573
  %v1575 = vpop.xlane.xlu0 %1574
  %v1576 = vrcp.pop 32.0
  %v1577 = vmul.f32 %v1572, %v1576
  %v1578 = vmul.f32 %v1575, %v1576
  %v1579 = vsub.f32 %v1568, %v1577
  %v1580 = vsub.f32 %v1569, %v1578
  %v1581 = vmul.f32 %v1579, %v1579
  %v1582 = vmul.f32 %v1580, %v1580
  %v1583 = vsel %vm42, %v1581, 0.0
  %1584 = vadd.xlane.f32.xlu0 %v1583
  %v1585 = vpop.xlane.xlu0 %1584
  %v1586 = vsel %vm42, %v1582, 0.0
  %1587 = vadd.xlane.f32.xlu0 %v1586
  %v1588 = vpop.xlane.xlu0 %1587
  %v1589 = vmul.f32 %v1585, %v1576
  %v1590 = vmul.f32 %v1588, %v1576
  %v1591 = vadd.f32 %v1589, 1e-05
  %v1592 = vadd.f32 %v1590, 1e-05
  %v1593 = vrsqrt.pop %v1591
  %v1594 = vrsqrt.pop %v1592
  %v1595 = vmul.f32 %v1579, %v1593
  %v1596 = vmul.f32 %v1580, %v1594
  %v1597 = vlaneseq
  %v1598 = vshrl.u32 %v1597, 7
  %v1599 = vsub.s32 3, %v1598
  %v1600 = vrot.slane %v36, %v1599
  %v1601 = vmul.f32 %v1595, %v1600
  %v1602 = vmul.f32 %v1596, %v1600
  %v1603 = vlaneseq
  %v1604 = vshrl.u32 %v1603, 7
  %v1605 = vsub.s32 4, %v1604
  %v1606 = vrot.slane %v36, %v1605
  %v1607 = vadd.f32 %v1601, %v1606
  %v1608 = vadd.f32 %v1602, %v1606
  %v1609 = vld [vmem:[%s3] sm:$0xff]
  %v1610 = vld [vmem:[%s3 + $0x8] sm:$0xff]
  %v1611 = vld [vmem:[%s3 + $0x10] sm:$0xff]
  %v1612 = vld [vmem:[%s3 + $0x18] sm:$0xff]
  %v1613 = vld [vmem:[%s3 + $0x20] sm:$0xff]
  %v1614 = vld [vmem:[%s3 + $0x28] sm:$0xff]
  %v1615 = vld [vmem:[%s3 + $0x30] sm:$0xff]
  %v1616 = vld [vmem:[%s3 + $0x38] sm:$0xff]
  %v1617 = vlaneseq
  %v1618 = vshrl.u32 %v1617, 7
  %v1619 = vsub.s32 1, %v1618
  %v1620 = vrot.slane %v36, %v1619
  %v1621 = vlaneseq
  %v1622 = vshrl.u32 %v1621, 7
  %v1623 = vsub.s32 1, %v1622
  %v1624 = vrot.slane %v37, %v1623
  %v1626 = vsel %vm42, %v1607, 0
  %v1629 = vsel %vm42, %v1608, 0
  %1631 = vmatprep.subr.mxu0 0.0
  %1632 = vmatpush1.msra.mxu0 0.0
  %1633 = vmatprep.subr.mxu0 0.0
  %1634 = vmatpush1.msra.mxu0 0.0
  %1635 = vmatprep.subr.mxu0 0.0
  %1636 = vmatpush1.msra.mxu0 0.0
  %1637 = vmatprep.subr.mxu0 0.0
  %1638 = vmatpush1.msra.mxu0 0.0
  %1639 = vmatprep.subr.mxu0 0.0
  %1640 = vmatpush1.msra.mxu0 0.0
  %1641 = vmatprep.subr.mxu0 0.0
  %1642 = vmatpush1.msra.mxu0 0.0
  %1643 = vmatprep.subr.mxu0 0.0
  %1644 = vmatpush1.msra.mxu0 0.0
  %1645 = vmatprep.subr.mxu0 0.0
  %1646 = vmatpush1.msra.mxu0 0.0
  %1647 = vmatprep.subr.mxu0 0.0
  %1648 = vmatpush1.msra.mxu0 0.0
  %1649 = vmatprep.subr.mxu0 0.0
  %1650 = vmatpush1.msra.mxu0 0.0
  %1651 = vmatprep.subr.mxu0 0.0
  %1652 = vmatpush1.msra.mxu0 0.0
  %1653 = vmatprep.subr.mxu0 0.0
  %1654 = vmatpush1.msra.mxu0 0.0
  %1655 = vmatprep.subr.mxu0 %v1616
  %1656 = vmatpush1.msra.mxu0 %v1615
  %1657 = vmatprep.subr.mxu0 %v1614
  %1658 = vmatpush1.msra.mxu0 %v1613
  %1659 = vmatprep.subr.mxu0 %v1612
  %1660 = vmatpush1.msra.mxu0 %v1611
  %1661 = vmatprep.subr.mxu0 %v1610
  %1662 = vmatpush1.msra.mxu0 %v1609
  %1663 = vmatprep.subr.mxu0 0.0
  %1664 = vmatpush2.msra.mxu0 0.0
  %1665 = vmatprep.subr.mxu0 0.0
  %1666 = vmatpush2.msra.mxu0 0.0
  %1667 = vmatprep.subr.mxu0 0.0
  %1668 = vmatpush2.msra.mxu0 0.0
  %1669 = vmatprep.subr.mxu0 0.0
  %1670 = vmatpush2.msra.mxu0 0.0
  %1671 = vmatprep.subr.mxu0 0.0
  %1672 = vmatpush2.msra.mxu0 0.0
  %1673 = vmatprep.subr.mxu0 0.0
  %1674 = vmatpush2.msra.mxu0 0.0
  %1675 = vmatprep.subr.mxu0 0.0
  %1676 = vmatpush2.msra.mxu0 0.0
  %1677 = vmatprep.subr.mxu0 0.0
  %1678 = vmatpush2.msra.mxu0 0.0
  %1679 = vmatprep.subr.mxu0 0.0
  %1680 = vmatpush2.msra.mxu0 0.0
  %1681 = vmatprep.subr.mxu0 0.0
  %1682 = vmatpush2.msra.mxu0 0.0
  %1683 = vmatprep.subr.mxu0 0.0
  %1684 = vmatpush2.msra.mxu0 0.0
  %1685 = vmatprep.subr.mxu0 0.0
  %1686 = vmatpush2.msra.mxu0 0.0
  %1687 = vmatprep.subr.mxu0 0.0
  %1688 = vmatpush2.msra.mxu0 0.0
  %1689 = vmatprep.subr.mxu0 0.0
  %1690 = vmatpush2.msra.mxu0 0.0
  %1691 = vmatprep.subr.mxu0 0.0
  %1692 = vmatpush2.msra.mxu0 0.0
  %1693 = vmatprep.subr.mxu0 0.0
  %1694 = vmatpush2.msra.mxu0 0.0
  %1695 = vmatprep.mubr.f32.mxu0 0.0
  %1696 = vmatmul.mubr.f32.gmra.mxu0 %v1626
  %v1697 = vpop.f32.mrf.mxu0
  %v1698 = vadd.f32 %v1620, %v1697
  %v1699 = vpop.f32.mrf.mxu0
  %v1700 = vadd.f32 %v1624, %v1699
  %1701 = vmatprep.mubr.f32.mxu0 0.0
  %1702 = vmatmul.mubr.f32.gmra.mxu0 %v1629
  %v1703 = vpop.f32.mrf.mxu0
  %v1704 = vadd.f32 %v1620, %v1703
  %v1705 = vpop.f32.mrf.mxu0
  %v1706 = vadd.f32 %v1624, %v1705
  %1707 = vdwg.mxu0
  %v1708 = vmax.f32 %v1698, 0.0
  %v1709 = vmax.f32 %v1700, 0.0
  %v1710 = vmax.f32 %v1704, 0.0
  %v1711 = vmax.f32 %v1706, 0.0
  %v1712 = vld [vmem:[%s4] sm:$0xff]
  %v1713 = vld [vmem:[%s4 + $0x8] sm:$0xff]
  %v1714 = vld [vmem:[%s4 + $0x10] sm:$0xff]
  %v1715 = vld [vmem:[%s4 + $0x18] sm:$0xff]
  %v1716 = vld [vmem:[%s4 + $0x20] sm:$0xff]
  %v1717 = vld [vmem:[%s4 + $0x28] sm:$0xff]
  %v1718 = vld [vmem:[%s4 + $0x30] sm:$0xff]
  %v1719 = vld [vmem:[%s4 + $0x38] sm:$0xff]
  %v1720 = vld [vmem:[%s4 + $0x40] sm:$0xff]
  %v1721 = vld [vmem:[%s4 + $0x48] sm:$0xff]
  %v1722 = vld [vmem:[%s4 + $0x50] sm:$0xff]
  %v1723 = vld [vmem:[%s4 + $0x58] sm:$0xff]
  %v1724 = vld [vmem:[%s4 + $0x60] sm:$0xff]
  %v1725 = vld [vmem:[%s4 + $0x68] sm:$0xff]
  %v1726 = vld [vmem:[%s4 + $0x70] sm:$0xff]
  %v1727 = vld [vmem:[%s4 + $0x78] sm:$0xff]
  %v1728 = vld [vmem:[%s4 + $0x80] sm:$0xff]
  %v1729 = vld [vmem:[%s4 + $0x88] sm:$0xff]
  %v1730 = vld [vmem:[%s4 + $0x90] sm:$0xff]
  %v1731 = vld [vmem:[%s4 + $0x98] sm:$0xff]
  %v1732 = vld [vmem:[%s4 + $0xa0] sm:$0xff]
  %v1733 = vld [vmem:[%s4 + $0xa8] sm:$0xff]
  %v1734 = vld [vmem:[%s4 + $0xb0] sm:$0xff]
  %v1735 = vld [vmem:[%s4 + $0xb8] sm:$0xff]
  %v1736 = vld [vmem:[%s4 + $0xc0] sm:$0xff]
  %v1737 = vld [vmem:[%s4 + $0xc8] sm:$0xff]
  %v1738 = vld [vmem:[%s4 + $0xd0] sm:$0xff]
  %v1739 = vld [vmem:[%s4 + $0xd8] sm:$0xff]
  %v1740 = vld [vmem:[%s4 + $0xe0] sm:$0xff]
  %v1741 = vld [vmem:[%s4 + $0xe8] sm:$0xff]
  %v1742 = vld [vmem:[%s4 + $0xf0] sm:$0xff]
  %v1743 = vld [vmem:[%s4 + $0xf8] sm:$0xff]
  %v1744 = vlaneseq
  %v1745 = vshrl.u32 %v1744, 7
  %v1746 = vsub.s32 7, %v1745
  %v1747 = vrot.slane %v36, %v1746
  %1748 = vmatprep.subr.mxu0 0.0
  %1749 = vmatpush1.msra.mxu0 %v1727
  %1750 = vmatprep.subr.mxu0 0.0
  %1751 = vmatpush1.msra.mxu0 %v1726
  %1752 = vmatprep.subr.mxu0 0.0
  %1753 = vmatpush1.msra.mxu0 %v1725
  %1754 = vmatprep.subr.mxu0 0.0
  %1755 = vmatpush1.msra.mxu0 %v1724
  %1756 = vmatprep.subr.mxu0 0.0
  %1757 = vmatpush1.msra.mxu0 %v1723
  %1758 = vmatprep.subr.mxu0 0.0
  %1759 = vmatpush1.msra.mxu0 %v1722
  %1760 = vmatprep.subr.mxu0 0.0
  %1761 = vmatpush1.msra.mxu0 %v1721
  %1762 = vmatprep.subr.mxu0 0.0
  %1763 = vmatpush1.msra.mxu0 %v1720
  %1764 = vmatprep.subr.mxu0 0.0
  %1765 = vmatpush1.msra.mxu0 %v1719
  %1766 = vmatprep.subr.mxu0 0.0
  %1767 = vmatpush1.msra.mxu0 %v1718
  %1768 = vmatprep.subr.mxu0 0.0
  %1769 = vmatpush1.msra.mxu0 %v1717
  %1770 = vmatprep.subr.mxu0 0.0
  %1771 = vmatpush1.msra.mxu0 %v1716
  %1772 = vmatprep.subr.mxu0 0.0
  %1773 = vmatpush1.msra.mxu0 %v1715
  %1774 = vmatprep.subr.mxu0 0.0
  %1775 = vmatpush1.msra.mxu0 %v1714
  %1776 = vmatprep.subr.mxu0 0.0
  %1777 = vmatpush1.msra.mxu0 %v1713
  %1778 = vmatprep.subr.mxu0 0.0
  %1779 = vmatpush1.msra.mxu0 %v1712
  %1780 = vmatprep.subr.mxu0 0.0
  %1781 = vmatpush2.msra.mxu0 %v1743
  %1782 = vmatprep.subr.mxu0 0.0
  %1783 = vmatpush2.msra.mxu0 %v1742
  %1784 = vmatprep.subr.mxu0 0.0
  %1785 = vmatpush2.msra.mxu0 %v1741
  %1786 = vmatprep.subr.mxu0 0.0
  %1787 = vmatpush2.msra.mxu0 %v1740
  %1788 = vmatprep.subr.mxu0 0.0
  %1789 = vmatpush2.msra.mxu0 %v1739
  %1790 = vmatprep.subr.mxu0 0.0
  %1791 = vmatpush2.msra.mxu0 %v1738
  %1792 = vmatprep.subr.mxu0 0.0
  %1793 = vmatpush2.msra.mxu0 %v1737
  %1794 = vmatprep.subr.mxu0 0.0
  %1795 = vmatpush2.msra.mxu0 %v1736
  %1796 = vmatprep.subr.mxu0 0.0
  %1797 = vmatpush2.msra.mxu0 %v1735
  %1798 = vmatprep.subr.mxu0 0.0
  %1799 = vmatpush2.msra.mxu0 %v1734
  %1800 = vmatprep.subr.mxu0 0.0
  %1801 = vmatpush2.msra.mxu0 %v1733
  %1802 = vmatprep.subr.mxu0 0.0
  %1803 = vmatpush2.msra.mxu0 %v1732
  %1804 = vmatprep.subr.mxu0 0.0
  %1805 = vmatpush2.msra.mxu0 %v1731
  %1806 = vmatprep.subr.mxu0 0.0
  %1807 = vmatpush2.msra.mxu0 %v1730
  %1808 = vmatprep.subr.mxu0 0.0
  %1809 = vmatpush2.msra.mxu0 %v1729
  %1810 = vmatprep.subr.mxu0 0.0
  %1811 = vmatpush2.msra.mxu0 %v1728
  %1812 = vmatprep.mubr.f32.mxu0 %v1709
  %1813 = vmatmul.mubr.f32.gmra.mxu0 %v1708
  %v1814 = vpop.f32.mrf.mxu0
  %v1815 = vadd.f32 %v1747, %v1814
  %v1816 = vpop.f32.mrf.mxu0
  %1817 = vmatprep.mubr.f32.mxu0 %v1711
  %1818 = vmatmul.mubr.f32.gmra.mxu0 %v1710
  %v1819 = vpop.f32.mrf.mxu0
  %v1820 = vadd.f32 %v1747, %v1819
  %v1821 = vpop.f32.mrf.mxu0
  %1822 = vdwg.mxu0
  %v1823 = vadd.f32 %v1607, %v1815
  %v1824 = vadd.f32 %v1608, %v1820
  %v1825 = vsel %vm42, %v1823, 0.0
  %1826 = vadd.xlane.f32.xlu0 %v1825
  %v1827 = vpop.xlane.xlu0 %1826
  %v1828 = vsel %vm42, %v1824, 0.0
  %1829 = vadd.xlane.f32.xlu0 %v1828
  %v1830 = vpop.xlane.xlu0 %1829
  %v1831 = vmul.f32 %v1827, %v1576
  %v1832 = vmul.f32 %v1830, %v1576
  %v1833 = vsub.f32 %v1823, %v1831
  %v1834 = vsub.f32 %v1824, %v1832
  %v1835 = vmul.f32 %v1833, %v1833
  %v1836 = vmul.f32 %v1834, %v1834
  %v1837 = vsel %vm42, %v1835, 0.0
  %1838 = vadd.xlane.f32.xlu0 %v1837
  %v1839 = vpop.xlane.xlu0 %1838
  %v1840 = vsel %vm42, %v1836, 0.0
  %1841 = vadd.xlane.f32.xlu0 %v1840
  %v1842 = vpop.xlane.xlu0 %1841
  %v1843 = vmul.f32 %v1839, %v1576
  %v1844 = vmul.f32 %v1842, %v1576
  %v1845 = vadd.f32 %v1843, 1e-05
  %v1846 = vadd.f32 %v1844, 1e-05
  %v1847 = vrsqrt.pop %v1845
  %v1848 = vrsqrt.pop %v1846
  %v1849 = vmul.f32 %v1833, %v1847
  %v1850 = vmul.f32 %v1834, %v1848
  %v1851 = vlaneseq
  %v1852 = vshrl.u32 %v1851, 7
  %v1853 = vsub.s32 5, %v1852
  %v1854 = vrot.slane %v36, %v1853
  %v1855 = vmul.f32 %v1849, %v1854
  %v1856 = vmul.f32 %v1850, %v1854
  %v1857 = vlaneseq
  %v1858 = vshrl.u32 %v1857, 7
  %v1859 = vsub.s32 6, %v1858
  %v1860 = vrot.slane %v36, %v1859
  %v1861 = vadd.f32 %v1855, %v1860
  %v1862 = vadd.f32 %v1856, %v1860
  %s1863 = scalar_lea.vmem %s1, 32
  %v1864 = vld [vmem:[%s1863] sm:$0xff]
  %v1865 = vld [vmem:[%s1863 + $0x8] sm:$0xff]
  %v1866 = vld [vmem:[%s1863 + $0x10] sm:$0xff]
  %v1867 = vld [vmem:[%s1863 + $0x18] sm:$0xff]
  %s1868 = scalar_lea.vmem %s2, 32
  %v1869 = vld [vmem:[%s1868] sm:$0xff]
  %v1870 = vld [vmem:[%s1868 + $0x8] sm:$0xff]
  %v1871 = vld [vmem:[%s1868 + $0x10] sm:$0xff]
  %v1872 = vld [vmem:[%s1868 + $0x18] sm:$0xff]
  %s1873 = scalar_lea.vmem %s5, 16
  %v1874 = vld [vmem:[%s1873] sm:$0xff]
  %v1875 = vld [vmem:[%s1873 + $0x8] sm:$0xff]
  %v1876 = vlaneseq
  %v1877 = vshrl.u32 %v1876, 7
  %v1878 = vsub.s32 0, %v1877
  %v1879 = vrot.slane %v1874, %v1878
  %v1881 = vsel %vm42, %v1861, 0
  %v1884 = vsel %vm42, %v1862, 0
  %1886 = vmatprep.subr.mxu0 0.0
  %1887 = vmatpush1.msra.mxu0 0.0
  %1888 = vmatprep.subr.mxu0 0.0
  %1889 = vmatpush1.msra.mxu0 0.0
  %1890 = vmatprep.subr.mxu0 0.0
  %1891 = vmatpush1.msra.mxu0 0.0
  %1892 = vmatprep.subr.mxu0 0.0
  %1893 = vmatpush1.msra.mxu0 0.0
  %1894 = vmatprep.subr.mxu0 0.0
  %1895 = vmatpush1.msra.mxu0 0.0
  %1896 = vmatprep.subr.mxu0 0.0
  %1897 = vmatpush1.msra.mxu0 0.0
  %1898 = vmatprep.subr.mxu0 0.0
  %1899 = vmatpush1.msra.mxu0 0.0
  %1900 = vmatprep.subr.mxu0 0.0
  %1901 = vmatpush1.msra.mxu0 0.0
  %1902 = vmatprep.subr.mxu0 0.0
  %1903 = vmatpush1.msra.mxu0 0.0
  %1904 = vmatprep.subr.mxu0 0.0
  %1905 = vmatpush1.msra.mxu0 0.0
  %1906 = vmatprep.subr.mxu0 0.0
  %1907 = vmatpush1.msra.mxu0 0.0
  %1908 = vmatprep.subr.mxu0 0.0
  %1909 = vmatpush1.msra.mxu0 0.0
  %1910 = vmatprep.subr.mxu0 0.0
  %1911 = vmatpush1.msra.mxu0 %v1867
  %1912 = vmatprep.subr.mxu0 0.0
  %1913 = vmatpush1.msra.mxu0 %v1866
  %1914 = vmatprep.subr.mxu0 0.0
  %1915 = vmatpush1.msra.mxu0 %v1865
  %1916 = vmatprep.subr.mxu0 0.0
  %1917 = vmatpush1.msra.mxu0 %v1864
  %1918 = vmatprep.subr.mxu0 0.0
  %1919 = vmatpush2.msra.mxu0 0.0
  %1920 = vmatprep.subr.mxu0 0.0
  %1921 = vmatpush2.msra.mxu0 0.0
  %1922 = vmatprep.subr.mxu0 0.0
  %1923 = vmatpush2.msra.mxu0 0.0
  %1924 = vmatprep.subr.mxu0 0.0
  %1925 = vmatpush2.msra.mxu0 0.0
  %1926 = vmatprep.subr.mxu0 0.0
  %1927 = vmatpush2.msra.mxu0 0.0
  %1928 = vmatprep.subr.mxu0 0.0
  %1929 = vmatpush2.msra.mxu0 0.0
  %1930 = vmatprep.subr.mxu0 0.0
  %1931 = vmatpush2.msra.mxu0 0.0
  %1932 = vmatprep.subr.mxu0 0.0
  %1933 = vmatpush2.msra.mxu0 0.0
  %1934 = vmatprep.subr.mxu0 0.0
  %1935 = vmatpush2.msra.mxu0 0.0
  %1936 = vmatprep.subr.mxu0 0.0
  %1937 = vmatpush2.msra.mxu0 0.0
  %1938 = vmatprep.subr.mxu0 0.0
  %1939 = vmatpush2.msra.mxu0 0.0
  %1940 = vmatprep.subr.mxu0 0.0
  %1941 = vmatpush2.msra.mxu0 0.0
  %1942 = vmatprep.subr.mxu0 0.0
  %1943 = vmatpush2.msra.mxu0 0.0
  %1944 = vmatprep.subr.mxu0 0.0
  %1945 = vmatpush2.msra.mxu0 0.0
  %1946 = vmatprep.subr.mxu0 0.0
  %1947 = vmatpush2.msra.mxu0 0.0
  %1948 = vmatprep.subr.mxu0 0.0
  %1949 = vmatpush2.msra.mxu0 0.0
  %1950 = vmatprep.mubr.f32.mxu0 0.0
  %1951 = vmatmul.mubr.f32.gmra.mxu0 %v1881
  %v1952 = vpop.f32.mrf.mxu0
  %v1953 = vadd.f32 %v1879, %v1952
  %v1954 = vpop.f32.mrf.mxu0
  %1955 = vmatprep.mubr.f32.mxu0 0.0
  %1956 = vmatmul.mubr.f32.gmra.mxu0 %v1884
  %v1957 = vpop.f32.mrf.mxu0
  %v1958 = vadd.f32 %v1879, %v1957
  %v1959 = vpop.f32.mrf.mxu0
  %1960 = vdwg.mxu0
  %1962 = vrot.lane.b32.xlu0 %v1953, 96
  %v1963 = vpop.permute.xlu0 %1962
  %v1964 = vsel %vm127, %v1953, 0
  %v1966 = vsel %vm127, %v1963, 0
  %1968 = vmatprep.subr.mxu0 0.0
  %1969 = vmatpush1.xpose.msra.mxu0 0.0
  %1970 = vmatprep.subr.mxu0 0.0
  %1971 = vmatpush1.xpose.msra.mxu0 0.0
  %1972 = vmatprep.subr.mxu0 0.0
  %1973 = vmatpush1.xpose.msra.mxu0 0.0
  %1974 = vmatprep.subr.mxu0 0.0
  %1975 = vmatpush1.xpose.msra.mxu0 0.0
  %1976 = vmatprep.subr.mxu0 0.0
  %1977 = vmatpush1.xpose.msra.mxu0 0.0
  %1978 = vmatprep.subr.mxu0 0.0
  %1979 = vmatpush1.xpose.msra.mxu0 0.0
  %1980 = vmatprep.subr.mxu0 0.0
  %1981 = vmatpush1.xpose.msra.mxu0 0.0
  %1982 = vmatprep.subr.mxu0 0.0
  %1983 = vmatpush1.xpose.msra.mxu0 0.0
  %1984 = vmatprep.subr.mxu0 0.0
  %1985 = vmatpush1.xpose.msra.mxu0 0.0
  %1986 = vmatprep.subr.mxu0 0.0
  %1987 = vmatpush1.xpose.msra.mxu0 0.0
  %1988 = vmatprep.subr.mxu0 0.0
  %1989 = vmatpush1.xpose.msra.mxu0 0.0
  %1990 = vmatprep.subr.mxu0 0.0
  %1991 = vmatpush1.xpose.msra.mxu0 0.0
  %1992 = vmatprep.subr.mxu0 0.0
  %1993 = vmatpush1.xpose.msra.mxu0 0.0
  %1994 = vmatprep.subr.mxu0 0.0
  %1995 = vmatpush1.xpose.msra.mxu0 0.0
  %1996 = vmatprep.subr.mxu0 0.0
  %1997 = vmatpush1.xpose.msra.mxu0 0.0
  %1998 = vmatprep.subr.mxu0 0.0
  %1999 = vmatpush1.xpose.msra.mxu0 %v1966
  %2000 = vmatprep.subr.mxu0 0.0
  %2001 = vmatpush2.xpose.msra.mxu0 0.0
  %2002 = vmatprep.subr.mxu0 0.0
  %2003 = vmatpush2.xpose.msra.mxu0 0.0
  %2004 = vmatprep.subr.mxu0 0.0
  %2005 = vmatpush2.xpose.msra.mxu0 0.0
  %2006 = vmatprep.subr.mxu0 0.0
  %2007 = vmatpush2.xpose.msra.mxu0 0.0
  %2008 = vmatprep.subr.mxu0 0.0
  %2009 = vmatpush2.xpose.msra.mxu0 0.0
  %2010 = vmatprep.subr.mxu0 0.0
  %2011 = vmatpush2.xpose.msra.mxu0 0.0
  %2012 = vmatprep.subr.mxu0 0.0
  %2013 = vmatpush2.xpose.msra.mxu0 0.0
  %2014 = vmatprep.subr.mxu0 0.0
  %2015 = vmatpush2.xpose.msra.mxu0 0.0
  %2016 = vmatprep.subr.mxu0 0.0
  %2017 = vmatpush2.xpose.msra.mxu0 0.0
  %2018 = vmatprep.subr.mxu0 0.0
  %2019 = vmatpush2.xpose.msra.mxu0 0.0
  %2020 = vmatprep.subr.mxu0 0.0
  %2021 = vmatpush2.xpose.msra.mxu0 0.0
  %2022 = vmatprep.subr.mxu0 0.0
  %2023 = vmatpush2.xpose.msra.mxu0 0.0
  %2024 = vmatprep.subr.mxu0 0.0
  %2025 = vmatpush2.xpose.msra.mxu0 0.0
  %2026 = vmatprep.subr.mxu0 0.0
  %2027 = vmatpush2.xpose.msra.mxu0 0.0
  %2028 = vmatprep.subr.mxu0 0.0
  %2029 = vmatpush2.xpose.msra.mxu0 0.0
  %2030 = vmatprep.subr.mxu0 0.0
  %2031 = vmatpush2.xpose.msra.mxu0 0.0
  %2032 = vmatprep.mubr.f32.mxu0 0.0
  %2033 = vmatmul.mubr.f32.gmra.mxu0 %v1964
  %v2034 = vpop.f32.mrf.mxu0
  %v2035 = vadd.f32 0.0, %v2034
  %v2036 = vpop.f32.mrf.mxu0
  %2037 = vdwg.mxu0
  %2039 = vrot.lane.b32.xlu0 %v1958, 96
  %v2040 = vpop.permute.xlu0 %2039
  %v2041 = vsel %vm127, %v1958, 0
  %v2043 = vsel %vm127, %v2040, 0
  %2045 = vmatprep.subr.mxu0 0.0
  %2046 = vmatpush1.xpose.msra.mxu0 0.0
  %2047 = vmatprep.subr.mxu0 0.0
  %2048 = vmatpush1.xpose.msra.mxu0 0.0
  %2049 = vmatprep.subr.mxu0 0.0
  %2050 = vmatpush1.xpose.msra.mxu0 0.0
  %2051 = vmatprep.subr.mxu0 0.0
  %2052 = vmatpush1.xpose.msra.mxu0 0.0
  %2053 = vmatprep.subr.mxu0 0.0
  %2054 = vmatpush1.xpose.msra.mxu0 0.0
  %2055 = vmatprep.subr.mxu0 0.0
  %2056 = vmatpush1.xpose.msra.mxu0 0.0
  %2057 = vmatprep.subr.mxu0 0.0
  %2058 = vmatpush1.xpose.msra.mxu0 0.0
  %2059 = vmatprep.subr.mxu0 0.0
  %2060 = vmatpush1.xpose.msra.mxu0 0.0
  %2061 = vmatprep.subr.mxu0 0.0
  %2062 = vmatpush1.xpose.msra.mxu0 0.0
  %2063 = vmatprep.subr.mxu0 0.0
  %2064 = vmatpush1.xpose.msra.mxu0 0.0
  %2065 = vmatprep.subr.mxu0 0.0
  %2066 = vmatpush1.xpose.msra.mxu0 0.0
  %2067 = vmatprep.subr.mxu0 0.0
  %2068 = vmatpush1.xpose.msra.mxu0 0.0
  %2069 = vmatprep.subr.mxu0 0.0
  %2070 = vmatpush1.xpose.msra.mxu0 0.0
  %2071 = vmatprep.subr.mxu0 0.0
  %2072 = vmatpush1.xpose.msra.mxu0 0.0
  %2073 = vmatprep.subr.mxu0 0.0
  %2074 = vmatpush1.xpose.msra.mxu0 0.0
  %2075 = vmatprep.subr.mxu0 0.0
  %2076 = vmatpush1.xpose.msra.mxu0 %v2043
  %2077 = vmatprep.subr.mxu0 0.0
  %2078 = vmatpush2.xpose.msra.mxu0 0.0
  %2079 = vmatprep.subr.mxu0 0.0
  %2080 = vmatpush2.xpose.msra.mxu0 0.0
  %2081 = vmatprep.subr.mxu0 0.0
  %2082 = vmatpush2.xpose.msra.mxu0 0.0
  %2083 = vmatprep.subr.mxu0 0.0
  %2084 = vmatpush2.xpose.msra.mxu0 0.0
  %2085 = vmatprep.subr.mxu0 0.0
  %2086 = vmatpush2.xpose.msra.mxu0 0.0
  %2087 = vmatprep.subr.mxu0 0.0
  %2088 = vmatpush2.xpose.msra.mxu0 0.0
  %2089 = vmatprep.subr.mxu0 0.0
  %2090 = vmatpush2.xpose.msra.mxu0 0.0
  %2091 = vmatprep.subr.mxu0 0.0
  %2092 = vmatpush2.xpose.msra.mxu0 0.0
  %2093 = vmatprep.subr.mxu0 0.0
  %2094 = vmatpush2.xpose.msra.mxu0 0.0
  %2095 = vmatprep.subr.mxu0 0.0
  %2096 = vmatpush2.xpose.msra.mxu0 0.0
  %2097 = vmatprep.subr.mxu0 0.0
  %2098 = vmatpush2.xpose.msra.mxu0 0.0
  %2099 = vmatprep.subr.mxu0 0.0
  %2100 = vmatpush2.xpose.msra.mxu0 0.0
  %2101 = vmatprep.subr.mxu0 0.0
  %2102 = vmatpush2.xpose.msra.mxu0 0.0
  %2103 = vmatprep.subr.mxu0 0.0
  %2104 = vmatpush2.xpose.msra.mxu0 0.0
  %2105 = vmatprep.subr.mxu0 0.0
  %2106 = vmatpush2.xpose.msra.mxu0 0.0
  %2107 = vmatprep.subr.mxu0 0.0
  %2108 = vmatpush2.xpose.msra.mxu0 0.0
  %2109 = vmatprep.mubr.f32.mxu0 0.0
  %2110 = vmatmul.mubr.f32.gmra.mxu0 %v2041
  %v2111 = vpop.f32.mrf.mxu0
  %v2112 = vadd.f32 0.0, %v2111
  %v2113 = vpop.f32.mrf.mxu0
  %2114 = vdwg.mxu0
  %v2115 = vmul.f32 %v2035, 0.35355338
  %v2116 = vmul.f32 %v2112, 0.35355338
  %v2117 = vsel %vm127, %v2115, -inf
  %2118 = vmax.xlane.f32.xlu0 %v2117
  %v2119 = vpop.xlane.xlu0 %2118
  %v2120 = vsel %vm127, %v2116, -inf
  %2121 = vmax.xlane.f32.xlu0 %v2120
  %v2122 = vpop.xlane.xlu0 %2121
  %v2123 = vsub.f32 %v2115, %v2119
  %v2124 = vsub.f32 %v2116, %v2122
  %v2125 = vmul.f32 %v2123, 1.442695
  %v2126 = vpow.pop %v2125
  %v2127 = vmul.f32 %v2124, 1.442695
  %v2128 = vpow.pop %v2127
  %v2129 = vsel %vm127, %v2126, 0.0
  %2130 = vadd.xlane.f32.xlu0 %v2129
  %v2131 = vpop.xlane.xlu0 %2130
  %v2132 = vsel %vm127, %v2128, 0.0
  %2133 = vadd.xlane.f32.xlu0 %v2132
  %v2134 = vpop.xlane.xlu0 %2133
  %v2135 = vrcp.pop %v2131
  %v2136 = vmul.f32 %v2126, %v2135
  %v2137 = vrcp.pop %v2134
  %v2138 = vmul.f32 %v2128, %v2137
  %2139 = vrot.lane.b32.xlu0 %v1953, 64
  %v2140 = vpop.permute.xlu0 %2139
  %v2143 = vsel %vm127, %v2136, 0
  %2145 = vmatprep.subr.mxu0 0.0
  %2146 = vmatpush1.msra.mxu0 0.0
  %2147 = vmatprep.subr.mxu0 0.0
  %2148 = vmatpush1.msra.mxu0 0.0
  %2149 = vmatprep.subr.mxu0 0.0
  %2150 = vmatpush1.msra.mxu0 0.0
  %2151 = vmatprep.subr.mxu0 0.0
  %2152 = vmatpush1.msra.mxu0 0.0
  %2153 = vmatprep.subr.mxu0 0.0
  %2154 = vmatpush1.msra.mxu0 0.0
  %2155 = vmatprep.subr.mxu0 0.0
  %2156 = vmatpush1.msra.mxu0 0.0
  %2157 = vmatprep.subr.mxu0 0.0
  %2158 = vmatpush1.msra.mxu0 0.0
  %2159 = vmatprep.subr.mxu0 0.0
  %2160 = vmatpush1.msra.mxu0 0.0
  %2161 = vmatprep.subr.mxu0 0.0
  %2162 = vmatpush1.msra.mxu0 0.0
  %2163 = vmatprep.subr.mxu0 0.0
  %2164 = vmatpush1.msra.mxu0 0.0
  %2165 = vmatprep.subr.mxu0 0.0
  %2166 = vmatpush1.msra.mxu0 0.0
  %2167 = vmatprep.subr.mxu0 0.0
  %2168 = vmatpush1.msra.mxu0 0.0
  %2169 = vmatprep.subr.mxu0 0.0
  %2170 = vmatpush1.msra.mxu0 0.0
  %2171 = vmatprep.subr.mxu0 0.0
  %2172 = vmatpush1.msra.mxu0 0.0
  %2173 = vmatprep.subr.mxu0 0.0
  %2174 = vmatpush1.msra.mxu0 0.0
  %2175 = vmatprep.subr.mxu0 0.0
  %2176 = vmatpush1.msra.mxu0 %v2140
  %2177 = vmatprep.subr.mxu0 0.0
  %2178 = vmatpush2.msra.mxu0 0.0
  %2179 = vmatprep.subr.mxu0 0.0
  %2180 = vmatpush2.msra.mxu0 0.0
  %2181 = vmatprep.subr.mxu0 0.0
  %2182 = vmatpush2.msra.mxu0 0.0
  %2183 = vmatprep.subr.mxu0 0.0
  %2184 = vmatpush2.msra.mxu0 0.0
  %2185 = vmatprep.subr.mxu0 0.0
  %2186 = vmatpush2.msra.mxu0 0.0
  %2187 = vmatprep.subr.mxu0 0.0
  %2188 = vmatpush2.msra.mxu0 0.0
  %2189 = vmatprep.subr.mxu0 0.0
  %2190 = vmatpush2.msra.mxu0 0.0
  %2191 = vmatprep.subr.mxu0 0.0
  %2192 = vmatpush2.msra.mxu0 0.0
  %2193 = vmatprep.subr.mxu0 0.0
  %2194 = vmatpush2.msra.mxu0 0.0
  %2195 = vmatprep.subr.mxu0 0.0
  %2196 = vmatpush2.msra.mxu0 0.0
  %2197 = vmatprep.subr.mxu0 0.0
  %2198 = vmatpush2.msra.mxu0 0.0
  %2199 = vmatprep.subr.mxu0 0.0
  %2200 = vmatpush2.msra.mxu0 0.0
  %2201 = vmatprep.subr.mxu0 0.0
  %2202 = vmatpush2.msra.mxu0 0.0
  %2203 = vmatprep.subr.mxu0 0.0
  %2204 = vmatpush2.msra.mxu0 0.0
  %2205 = vmatprep.subr.mxu0 0.0
  %2206 = vmatpush2.msra.mxu0 0.0
  %2207 = vmatprep.subr.mxu0 0.0
  %2208 = vmatpush2.msra.mxu0 0.0
  %2209 = vmatprep.mubr.f32.mxu0 0.0
  %2210 = vmatmul.mubr.f32.gmra.mxu0 %v2143
  %v2211 = vpop.f32.mrf.mxu0
  %v2212 = vadd.f32 0.0, %v2211
  %v2213 = vpop.f32.mrf.mxu0
  %2214 = vdwg.mxu0
  %2215 = vrot.lane.b32.xlu0 %v1958, 64
  %v2216 = vpop.permute.xlu0 %2215
  %v2219 = vsel %vm127, %v2138, 0
  %2221 = vmatprep.subr.mxu0 0.0
  %2222 = vmatpush1.msra.mxu0 0.0
  %2223 = vmatprep.subr.mxu0 0.0
  %2224 = vmatpush1.msra.mxu0 0.0
  %2225 = vmatprep.subr.mxu0 0.0
  %2226 = vmatpush1.msra.mxu0 0.0
  %2227 = vmatprep.subr.mxu0 0.0
  %2228 = vmatpush1.msra.mxu0 0.0
  %2229 = vmatprep.subr.mxu0 0.0
  %2230 = vmatpush1.msra.mxu0 0.0
  %2231 = vmatprep.subr.mxu0 0.0
  %2232 = vmatpush1.msra.mxu0 0.0
  %2233 = vmatprep.subr.mxu0 0.0
  %2234 = vmatpush1.msra.mxu0 0.0
  %2235 = vmatprep.subr.mxu0 0.0
  %2236 = vmatpush1.msra.mxu0 0.0
  %2237 = vmatprep.subr.mxu0 0.0
  %2238 = vmatpush1.msra.mxu0 0.0
  %2239 = vmatprep.subr.mxu0 0.0
  %2240 = vmatpush1.msra.mxu0 0.0
  %2241 = vmatprep.subr.mxu0 0.0
  %2242 = vmatpush1.msra.mxu0 0.0
  %2243 = vmatprep.subr.mxu0 0.0
  %2244 = vmatpush1.msra.mxu0 0.0
  %2245 = vmatprep.subr.mxu0 0.0
  %2246 = vmatpush1.msra.mxu0 0.0
  %2247 = vmatprep.subr.mxu0 0.0
  %2248 = vmatpush1.msra.mxu0 0.0
  %2249 = vmatprep.subr.mxu0 0.0
  %2250 = vmatpush1.msra.mxu0 0.0
  %2251 = vmatprep.subr.mxu0 0.0
  %2252 = vmatpush1.msra.mxu0 %v2216
  %2253 = vmatprep.subr.mxu0 0.0
  %2254 = vmatpush2.msra.mxu0 0.0
  %2255 = vmatprep.subr.mxu0 0.0
  %2256 = vmatpush2.msra.mxu0 0.0
  %2257 = vmatprep.subr.mxu0 0.0
  %2258 = vmatpush2.msra.mxu0 0.0
  %2259 = vmatprep.subr.mxu0 0.0
  %2260 = vmatpush2.msra.mxu0 0.0
  %2261 = vmatprep.subr.mxu0 0.0
  %2262 = vmatpush2.msra.mxu0 0.0
  %2263 = vmatprep.subr.mxu0 0.0
  %2264 = vmatpush2.msra.mxu0 0.0
  %2265 = vmatprep.subr.mxu0 0.0
  %2266 = vmatpush2.msra.mxu0 0.0
  %2267 = vmatprep.subr.mxu0 0.0
  %2268 = vmatpush2.msra.mxu0 0.0
  %2269 = vmatprep.subr.mxu0 0.0
  %2270 = vmatpush2.msra.mxu0 0.0
  %2271 = vmatprep.subr.mxu0 0.0
  %2272 = vmatpush2.msra.mxu0 0.0
  %2273 = vmatprep.subr.mxu0 0.0
  %2274 = vmatpush2.msra.mxu0 0.0
  %2275 = vmatprep.subr.mxu0 0.0
  %2276 = vmatpush2.msra.mxu0 0.0
  %2277 = vmatprep.subr.mxu0 0.0
  %2278 = vmatpush2.msra.mxu0 0.0
  %2279 = vmatprep.subr.mxu0 0.0
  %2280 = vmatpush2.msra.mxu0 0.0
  %2281 = vmatprep.subr.mxu0 0.0
  %2282 = vmatpush2.msra.mxu0 0.0
  %2283 = vmatprep.subr.mxu0 0.0
  %2284 = vmatpush2.msra.mxu0 0.0
  %2285 = vmatprep.mubr.f32.mxu0 0.0
  %2286 = vmatmul.mubr.f32.gmra.mxu0 %v2219
  %v2287 = vpop.f32.mrf.mxu0
  %v2288 = vadd.f32 0.0, %v2287
  %v2289 = vpop.f32.mrf.mxu0
  %2290 = vdwg.mxu0
  %2291 = vrot.lane.b32.xlu0 %v1953, 120
  %v2292 = vpop.permute.xlu0 %2291
  %2293 = vrot.lane.b32.xlu0 %v1953, 88
  %v2294 = vpop.permute.xlu0 %2293
  %v2295 = vsel %vm127, %v2292, 0
  %v2297 = vsel %vm127, %v2294, 0
  %2299 = vmatprep.subr.mxu0 0.0
  %2300 = vmatpush1.xpose.msra.mxu0 0.0
  %2301 = vmatprep.subr.mxu0 0.0
  %2302 = vmatpush1.xpose.msra.mxu0 0.0
  %2303 = vmatprep.subr.mxu0 0.0
  %2304 = vmatpush1.xpose.msra.mxu0 0.0
  %2305 = vmatprep.subr.mxu0 0.0
  %2306 = vmatpush1.xpose.msra.mxu0 0.0
  %2307 = vmatprep.subr.mxu0 0.0
  %2308 = vmatpush1.xpose.msra.mxu0 0.0
  %2309 = vmatprep.subr.mxu0 0.0
  %2310 = vmatpush1.xpose.msra.mxu0 0.0
  %2311 = vmatprep.subr.mxu0 0.0
  %2312 = vmatpush1.xpose.msra.mxu0 0.0
  %2313 = vmatprep.subr.mxu0 0.0
  %2314 = vmatpush1.xpose.msra.mxu0 0.0
  %2315 = vmatprep.subr.mxu0 0.0
  %2316 = vmatpush1.xpose.msra.mxu0 0.0
  %2317 = vmatprep.subr.mxu0 0.0
  %2318 = vmatpush1.xpose.msra.mxu0 0.0
  %2319 = vmatprep.subr.mxu0 0.0
  %2320 = vmatpush1.xpose.msra.mxu0 0.0
  %2321 = vmatprep.subr.mxu0 0.0
  %2322 = vmatpush1.xpose.msra.mxu0 0.0
  %2323 = vmatprep.subr.mxu0 0.0
  %2324 = vmatpush1.xpose.msra.mxu0 0.0
  %2325 = vmatprep.subr.mxu0 0.0
  %2326 = vmatpush1.xpose.msra.mxu0 0.0
  %2327 = vmatprep.subr.mxu0 0.0
  %2328 = vmatpush1.xpose.msra.mxu0 0.0
  %2329 = vmatprep.subr.mxu0 0.0
  %2330 = vmatpush1.xpose.msra.mxu0 %v2297
  %2331 = vmatprep.subr.mxu0 0.0
  %2332 = vmatpush2.xpose.msra.mxu0 0.0
  %2333 = vmatprep.subr.mxu0 0.0
  %2334 = vmatpush2.xpose.msra.mxu0 0.0
  %2335 = vmatprep.subr.mxu0 0.0
  %2336 = vmatpush2.xpose.msra.mxu0 0.0
  %2337 = vmatprep.subr.mxu0 0.0
  %2338 = vmatpush2.xpose.msra.mxu0 0.0
  %2339 = vmatprep.subr.mxu0 0.0
  %2340 = vmatpush2.xpose.msra.mxu0 0.0
  %2341 = vmatprep.subr.mxu0 0.0
  %2342 = vmatpush2.xpose.msra.mxu0 0.0
  %2343 = vmatprep.subr.mxu0 0.0
  %2344 = vmatpush2.xpose.msra.mxu0 0.0
  %2345 = vmatprep.subr.mxu0 0.0
  %2346 = vmatpush2.xpose.msra.mxu0 0.0
  %2347 = vmatprep.subr.mxu0 0.0
  %2348 = vmatpush2.xpose.msra.mxu0 0.0
  %2349 = vmatprep.subr.mxu0 0.0
  %2350 = vmatpush2.xpose.msra.mxu0 0.0
  %2351 = vmatprep.subr.mxu0 0.0
  %2352 = vmatpush2.xpose.msra.mxu0 0.0
  %2353 = vmatprep.subr.mxu0 0.0
  %2354 = vmatpush2.xpose.msra.mxu0 0.0
  %2355 = vmatprep.subr.mxu0 0.0
  %2356 = vmatpush2.xpose.msra.mxu0 0.0
  %2357 = vmatprep.subr.mxu0 0.0
  %2358 = vmatpush2.xpose.msra.mxu0 0.0
  %2359 = vmatprep.subr.mxu0 0.0
  %2360 = vmatpush2.xpose.msra.mxu0 0.0
  %2361 = vmatprep.subr.mxu0 0.0
  %2362 = vmatpush2.xpose.msra.mxu0 0.0
  %2363 = vmatprep.mubr.f32.mxu0 0.0
  %2364 = vmatmul.mubr.f32.gmra.mxu0 %v2295
  %v2365 = vpop.f32.mrf.mxu0
  %v2366 = vadd.f32 0.0, %v2365
  %v2367 = vpop.f32.mrf.mxu0
  %2368 = vdwg.mxu0
  %2369 = vrot.lane.b32.xlu0 %v1958, 120
  %v2370 = vpop.permute.xlu0 %2369
  %2371 = vrot.lane.b32.xlu0 %v1958, 88
  %v2372 = vpop.permute.xlu0 %2371
  %v2373 = vsel %vm127, %v2370, 0
  %v2375 = vsel %vm127, %v2372, 0
  %2377 = vmatprep.subr.mxu0 0.0
  %2378 = vmatpush1.xpose.msra.mxu0 0.0
  %2379 = vmatprep.subr.mxu0 0.0
  %2380 = vmatpush1.xpose.msra.mxu0 0.0
  %2381 = vmatprep.subr.mxu0 0.0
  %2382 = vmatpush1.xpose.msra.mxu0 0.0
  %2383 = vmatprep.subr.mxu0 0.0
  %2384 = vmatpush1.xpose.msra.mxu0 0.0
  %2385 = vmatprep.subr.mxu0 0.0
  %2386 = vmatpush1.xpose.msra.mxu0 0.0
  %2387 = vmatprep.subr.mxu0 0.0
  %2388 = vmatpush1.xpose.msra.mxu0 0.0
  %2389 = vmatprep.subr.mxu0 0.0
  %2390 = vmatpush1.xpose.msra.mxu0 0.0
  %2391 = vmatprep.subr.mxu0 0.0
  %2392 = vmatpush1.xpose.msra.mxu0 0.0
  %2393 = vmatprep.subr.mxu0 0.0
  %2394 = vmatpush1.xpose.msra.mxu0 0.0
  %2395 = vmatprep.subr.mxu0 0.0
  %2396 = vmatpush1.xpose.msra.mxu0 0.0
  %2397 = vmatprep.subr.mxu0 0.0
  %2398 = vmatpush1.xpose.msra.mxu0 0.0
  %2399 = vmatprep.subr.mxu0 0.0
  %2400 = vmatpush1.xpose.msra.mxu0 0.0
  %2401 = vmatprep.subr.mxu0 0.0
  %2402 = vmatpush1.xpose.msra.mxu0 0.0
  %2403 = vmatprep.subr.mxu0 0.0
  %2404 = vmatpush1.xpose.msra.mxu0 0.0
  %2405 = vmatprep.subr.mxu0 0.0
  %2406 = vmatpush1.xpose.msra.mxu0 0.0
  %2407 = vmatprep.subr.mxu0 0.0
  %2408 = vmatpush1.xpose.msra.mxu0 %v2375
  %2409 = vmatprep.subr.mxu0 0.0
  %2410 = vmatpush2.xpose.msra.mxu0 0.0
  %2411 = vmatprep.subr.mxu0 0.0
  %2412 = vmatpush2.xpose.msra.mxu0 0.0
  %2413 = vmatprep.subr.mxu0 0.0
  %2414 = vmatpush2.xpose.msra.mxu0 0.0
  %2415 = vmatprep.subr.mxu0 0.0
  %2416 = vmatpush2.xpose.msra.mxu0 0.0
  %2417 = vmatprep.subr.mxu0 0.0
  %2418 = vmatpush2.xpose.msra.mxu0 0.0
  %2419 = vmatprep.subr.mxu0 0.0
  %2420 = vmatpush2.xpose.msra.mxu0 0.0
  %2421 = vmatprep.subr.mxu0 0.0
  %2422 = vmatpush2.xpose.msra.mxu0 0.0
  %2423 = vmatprep.subr.mxu0 0.0
  %2424 = vmatpush2.xpose.msra.mxu0 0.0
  %2425 = vmatprep.subr.mxu0 0.0
  %2426 = vmatpush2.xpose.msra.mxu0 0.0
  %2427 = vmatprep.subr.mxu0 0.0
  %2428 = vmatpush2.xpose.msra.mxu0 0.0
  %2429 = vmatprep.subr.mxu0 0.0
  %2430 = vmatpush2.xpose.msra.mxu0 0.0
  %2431 = vmatprep.subr.mxu0 0.0
  %2432 = vmatpush2.xpose.msra.mxu0 0.0
  %2433 = vmatprep.subr.mxu0 0.0
  %2434 = vmatpush2.xpose.msra.mxu0 0.0
  %2435 = vmatprep.subr.mxu0 0.0
  %2436 = vmatpush2.xpose.msra.mxu0 0.0
  %2437 = vmatprep.subr.mxu0 0.0
  %2438 = vmatpush2.xpose.msra.mxu0 0.0
  %2439 = vmatprep.subr.mxu0 0.0
  %2440 = vmatpush2.xpose.msra.mxu0 0.0
  %2441 = vmatprep.mubr.f32.mxu0 0.0
  %2442 = vmatmul.mubr.f32.gmra.mxu0 %v2373
  %v2443 = vpop.f32.mrf.mxu0
  %v2444 = vadd.f32 0.0, %v2443
  %v2445 = vpop.f32.mrf.mxu0
  %2446 = vdwg.mxu0
  %v2447 = vmul.f32 %v2366, 0.35355338
  %v2448 = vmul.f32 %v2444, 0.35355338
  %v2449 = vsel %vm127, %v2447, -inf
  %2450 = vmax.xlane.f32.xlu0 %v2449
  %v2451 = vpop.xlane.xlu0 %2450
  %v2452 = vsel %vm127, %v2448, -inf
  %2453 = vmax.xlane.f32.xlu0 %v2452
  %v2454 = vpop.xlane.xlu0 %2453
  %v2455 = vsub.f32 %v2447, %v2451
  %v2456 = vsub.f32 %v2448, %v2454
  %v2457 = vmul.f32 %v2455, 1.442695
  %v2458 = vpow.pop %v2457
  %v2459 = vmul.f32 %v2456, 1.442695
  %v2460 = vpow.pop %v2459
  %v2461 = vsel %vm127, %v2458, 0.0
  %2462 = vadd.xlane.f32.xlu0 %v2461
  %v2463 = vpop.xlane.xlu0 %2462
  %v2464 = vsel %vm127, %v2460, 0.0
  %2465 = vadd.xlane.f32.xlu0 %v2464
  %v2466 = vpop.xlane.xlu0 %2465
  %v2467 = vrcp.pop %v2463
  %v2468 = vmul.f32 %v2458, %v2467
  %v2469 = vrcp.pop %v2466
  %v2470 = vmul.f32 %v2460, %v2469
  %2471 = vrot.lane.b32.xlu0 %v1953, 56
  %v2472 = vpop.permute.xlu0 %2471
  %v2475 = vsel %vm127, %v2468, 0
  %2477 = vmatprep.subr.mxu0 0.0
  %2478 = vmatpush1.msra.mxu0 0.0
  %2479 = vmatprep.subr.mxu0 0.0
  %2480 = vmatpush1.msra.mxu0 0.0
  %2481 = vmatprep.subr.mxu0 0.0
  %2482 = vmatpush1.msra.mxu0 0.0
  %2483 = vmatprep.subr.mxu0 0.0
  %2484 = vmatpush1.msra.mxu0 0.0
  %2485 = vmatprep.subr.mxu0 0.0
  %2486 = vmatpush1.msra.mxu0 0.0
  %2487 = vmatprep.subr.mxu0 0.0
  %2488 = vmatpush1.msra.mxu0 0.0
  %2489 = vmatprep.subr.mxu0 0.0
  %2490 = vmatpush1.msra.mxu0 0.0
  %2491 = vmatprep.subr.mxu0 0.0
  %2492 = vmatpush1.msra.mxu0 0.0
  %2493 = vmatprep.subr.mxu0 0.0
  %2494 = vmatpush1.msra.mxu0 0.0
  %2495 = vmatprep.subr.mxu0 0.0
  %2496 = vmatpush1.msra.mxu0 0.0
  %2497 = vmatprep.subr.mxu0 0.0
  %2498 = vmatpush1.msra.mxu0 0.0
  %2499 = vmatprep.subr.mxu0 0.0
  %2500 = vmatpush1.msra.mxu0 0.0
  %2501 = vmatprep.subr.mxu0 0.0
  %2502 = vmatpush1.msra.mxu0 0.0
  %2503 = vmatprep.subr.mxu0 0.0
  %2504 = vmatpush1.msra.mxu0 0.0
  %2505 = vmatprep.subr.mxu0 0.0
  %2506 = vmatpush1.msra.mxu0 0.0
  %2507 = vmatprep.subr.mxu0 0.0
  %2508 = vmatpush1.msra.mxu0 %v2472
  %2509 = vmatprep.subr.mxu0 0.0
  %2510 = vmatpush2.msra.mxu0 0.0
  %2511 = vmatprep.subr.mxu0 0.0
  %2512 = vmatpush2.msra.mxu0 0.0
  %2513 = vmatprep.subr.mxu0 0.0
  %2514 = vmatpush2.msra.mxu0 0.0
  %2515 = vmatprep.subr.mxu0 0.0
  %2516 = vmatpush2.msra.mxu0 0.0
  %2517 = vmatprep.subr.mxu0 0.0
  %2518 = vmatpush2.msra.mxu0 0.0
  %2519 = vmatprep.subr.mxu0 0.0
  %2520 = vmatpush2.msra.mxu0 0.0
  %2521 = vmatprep.subr.mxu0 0.0
  %2522 = vmatpush2.msra.mxu0 0.0
  %2523 = vmatprep.subr.mxu0 0.0
  %2524 = vmatpush2.msra.mxu0 0.0
  %2525 = vmatprep.subr.mxu0 0.0
  %2526 = vmatpush2.msra.mxu0 0.0
  %2527 = vmatprep.subr.mxu0 0.0
  %2528 = vmatpush2.msra.mxu0 0.0
  %2529 = vmatprep.subr.mxu0 0.0
  %2530 = vmatpush2.msra.mxu0 0.0
  %2531 = vmatprep.subr.mxu0 0.0
  %2532 = vmatpush2.msra.mxu0 0.0
  %2533 = vmatprep.subr.mxu0 0.0
  %2534 = vmatpush2.msra.mxu0 0.0
  %2535 = vmatprep.subr.mxu0 0.0
  %2536 = vmatpush2.msra.mxu0 0.0
  %2537 = vmatprep.subr.mxu0 0.0
  %2538 = vmatpush2.msra.mxu0 0.0
  %2539 = vmatprep.subr.mxu0 0.0
  %2540 = vmatpush2.msra.mxu0 0.0
  %2541 = vmatprep.mubr.f32.mxu0 0.0
  %2542 = vmatmul.mubr.f32.gmra.mxu0 %v2475
  %v2543 = vpop.f32.mrf.mxu0
  %v2544 = vadd.f32 0.0, %v2543
  %v2545 = vpop.f32.mrf.mxu0
  %2546 = vdwg.mxu0
  %2547 = vrot.lane.b32.xlu0 %v1958, 56
  %v2548 = vpop.permute.xlu0 %2547
  %v2551 = vsel %vm127, %v2470, 0
  %2553 = vmatprep.subr.mxu0 0.0
  %2554 = vmatpush1.msra.mxu0 0.0
  %2555 = vmatprep.subr.mxu0 0.0
  %2556 = vmatpush1.msra.mxu0 0.0
  %2557 = vmatprep.subr.mxu0 0.0
  %2558 = vmatpush1.msra.mxu0 0.0
  %2559 = vmatprep.subr.mxu0 0.0
  %2560 = vmatpush1.msra.mxu0 0.0
  %2561 = vmatprep.subr.mxu0 0.0
  %2562 = vmatpush1.msra.mxu0 0.0
  %2563 = vmatprep.subr.mxu0 0.0
  %2564 = vmatpush1.msra.mxu0 0.0
  %2565 = vmatprep.subr.mxu0 0.0
  %2566 = vmatpush1.msra.mxu0 0.0
  %2567 = vmatprep.subr.mxu0 0.0
  %2568 = vmatpush1.msra.mxu0 0.0
  %2569 = vmatprep.subr.mxu0 0.0
  %2570 = vmatpush1.msra.mxu0 0.0
  %2571 = vmatprep.subr.mxu0 0.0
  %2572 = vmatpush1.msra.mxu0 0.0
  %2573 = vmatprep.subr.mxu0 0.0
  %2574 = vmatpush1.msra.mxu0 0.0
  %2575 = vmatprep.subr.mxu0 0.0
  %2576 = vmatpush1.msra.mxu0 0.0
  %2577 = vmatprep.subr.mxu0 0.0
  %2578 = vmatpush1.msra.mxu0 0.0
  %2579 = vmatprep.subr.mxu0 0.0
  %2580 = vmatpush1.msra.mxu0 0.0
  %2581 = vmatprep.subr.mxu0 0.0
  %2582 = vmatpush1.msra.mxu0 0.0
  %2583 = vmatprep.subr.mxu0 0.0
  %2584 = vmatpush1.msra.mxu0 %v2548
  %2585 = vmatprep.subr.mxu0 0.0
  %2586 = vmatpush2.msra.mxu0 0.0
  %2587 = vmatprep.subr.mxu0 0.0
  %2588 = vmatpush2.msra.mxu0 0.0
  %2589 = vmatprep.subr.mxu0 0.0
  %2590 = vmatpush2.msra.mxu0 0.0
  %2591 = vmatprep.subr.mxu0 0.0
  %2592 = vmatpush2.msra.mxu0 0.0
  %2593 = vmatprep.subr.mxu0 0.0
  %2594 = vmatpush2.msra.mxu0 0.0
  %2595 = vmatprep.subr.mxu0 0.0
  %2596 = vmatpush2.msra.mxu0 0.0
  %2597 = vmatprep.subr.mxu0 0.0
  %2598 = vmatpush2.msra.mxu0 0.0
  %2599 = vmatprep.subr.mxu0 0.0
  %2600 = vmatpush2.msra.mxu0 0.0
  %2601 = vmatprep.subr.mxu0 0.0
  %2602 = vmatpush2.msra.mxu0 0.0
  %2603 = vmatprep.subr.mxu0 0.0
  %2604 = vmatpush2.msra.mxu0 0.0
  %2605 = vmatprep.subr.mxu0 0.0
  %2606 = vmatpush2.msra.mxu0 0.0
  %2607 = vmatprep.subr.mxu0 0.0
  %2608 = vmatpush2.msra.mxu0 0.0
  %2609 = vmatprep.subr.mxu0 0.0
  %2610 = vmatpush2.msra.mxu0 0.0
  %2611 = vmatprep.subr.mxu0 0.0
  %2612 = vmatpush2.msra.mxu0 0.0
  %2613 = vmatprep.subr.mxu0 0.0
  %2614 = vmatpush2.msra.mxu0 0.0
  %2615 = vmatprep.subr.mxu0 0.0
  %2616 = vmatpush2.msra.mxu0 0.0
  %2617 = vmatprep.mubr.f32.mxu0 0.0
  %2618 = vmatmul.mubr.f32.gmra.mxu0 %v2551
  %v2619 = vpop.f32.mrf.mxu0
  %v2620 = vadd.f32 0.0, %v2619
  %v2621 = vpop.f32.mrf.mxu0
  %2622 = vdwg.mxu0
  %2623 = vrot.lane.b32.xlu0 %v1953, 112
  %v2624 = vpop.permute.xlu0 %2623
  %2625 = vrot.lane.b32.xlu0 %v1953, 80
  %v2626 = vpop.permute.xlu0 %2625
  %v2627 = vsel %vm127, %v2624, 0
  %v2629 = vsel %vm127, %v2626, 0
  %2631 = vmatprep.subr.mxu0 0.0
  %2632 = vmatpush1.xpose.msra.mxu0 0.0
  %2633 = vmatprep.subr.mxu0 0.0
  %2634 = vmatpush1.xpose.msra.mxu0 0.0
  %2635 = vmatprep.subr.mxu0 0.0
  %2636 = vmatpush1.xpose.msra.mxu0 0.0
  %2637 = vmatprep.subr.mxu0 0.0
  %2638 = vmatpush1.xpose.msra.mxu0 0.0
  %2639 = vmatprep.subr.mxu0 0.0
  %2640 = vmatpush1.xpose.msra.mxu0 0.0
  %2641 = vmatprep.subr.mxu0 0.0
  %2642 = vmatpush1.xpose.msra.mxu0 0.0
  %2643 = vmatprep.subr.mxu0 0.0
  %2644 = vmatpush1.xpose.msra.mxu0 0.0
  %2645 = vmatprep.subr.mxu0 0.0
  %2646 = vmatpush1.xpose.msra.mxu0 0.0
  %2647 = vmatprep.subr.mxu0 0.0
  %2648 = vmatpush1.xpose.msra.mxu0 0.0
  %2649 = vmatprep.subr.mxu0 0.0
  %2650 = vmatpush1.xpose.msra.mxu0 0.0
  %2651 = vmatprep.subr.mxu0 0.0
  %2652 = vmatpush1.xpose.msra.mxu0 0.0
  %2653 = vmatprep.subr.mxu0 0.0
  %2654 = vmatpush1.xpose.msra.mxu0 0.0
  %2655 = vmatprep.subr.mxu0 0.0
  %2656 = vmatpush1.xpose.msra.mxu0 0.0
  %2657 = vmatprep.subr.mxu0 0.0
  %2658 = vmatpush1.xpose.msra.mxu0 0.0
  %2659 = vmatprep.subr.mxu0 0.0
  %2660 = vmatpush1.xpose.msra.mxu0 0.0
  %2661 = vmatprep.subr.mxu0 0.0
  %2662 = vmatpush1.xpose.msra.mxu0 %v2629
  %2663 = vmatprep.subr.mxu0 0.0
  %2664 = vmatpush2.xpose.msra.mxu0 0.0
  %2665 = vmatprep.subr.mxu0 0.0
  %2666 = vmatpush2.xpose.msra.mxu0 0.0
  %2667 = vmatprep.subr.mxu0 0.0
  %2668 = vmatpush2.xpose.msra.mxu0 0.0
  %2669 = vmatprep.subr.mxu0 0.0
  %2670 = vmatpush2.xpose.msra.mxu0 0.0
  %2671 = vmatprep.subr.mxu0 0.0
  %2672 = vmatpush2.xpose.msra.mxu0 0.0
  %2673 = vmatprep.subr.mxu0 0.0
  %2674 = vmatpush2.xpose.msra.mxu0 0.0
  %2675 = vmatprep.subr.mxu0 0.0
  %2676 = vmatpush2.xpose.msra.mxu0 0.0
  %2677 = vmatprep.subr.mxu0 0.0
  %2678 = vmatpush2.xpose.msra.mxu0 0.0
  %2679 = vmatprep.subr.mxu0 0.0
  %2680 = vmatpush2.xpose.msra.mxu0 0.0
  %2681 = vmatprep.subr.mxu0 0.0
  %2682 = vmatpush2.xpose.msra.mxu0 0.0
  %2683 = vmatprep.subr.mxu0 0.0
  %2684 = vmatpush2.xpose.msra.mxu0 0.0
  %2685 = vmatprep.subr.mxu0 0.0
  %2686 = vmatpush2.xpose.msra.mxu0 0.0
  %2687 = vmatprep.subr.mxu0 0.0
  %2688 = vmatpush2.xpose.msra.mxu0 0.0
  %2689 = vmatprep.subr.mxu0 0.0
  %2690 = vmatpush2.xpose.msra.mxu0 0.0
  %2691 = vmatprep.subr.mxu0 0.0
  %2692 = vmatpush2.xpose.msra.mxu0 0.0
  %2693 = vmatprep.subr.mxu0 0.0
  %2694 = vmatpush2.xpose.msra.mxu0 0.0
  %2695 = vmatprep.mubr.f32.mxu0 0.0
  %2696 = vmatmul.mubr.f32.gmra.mxu0 %v2627
  %v2697 = vpop.f32.mrf.mxu0
  %v2698 = vadd.f32 0.0, %v2697
  %v2699 = vpop.f32.mrf.mxu0
  %2700 = vdwg.mxu0
  %2701 = vrot.lane.b32.xlu0 %v1958, 112
  %v2702 = vpop.permute.xlu0 %2701
  %2703 = vrot.lane.b32.xlu0 %v1958, 80
  %v2704 = vpop.permute.xlu0 %2703
  %v2705 = vsel %vm127, %v2702, 0
  %v2707 = vsel %vm127, %v2704, 0
  %2709 = vmatprep.subr.mxu0 0.0
  %2710 = vmatpush1.xpose.msra.mxu0 0.0
  %2711 = vmatprep.subr.mxu0 0.0
  %2712 = vmatpush1.xpose.msra.mxu0 0.0
  %2713 = vmatprep.subr.mxu0 0.0
  %2714 = vmatpush1.xpose.msra.mxu0 0.0
  %2715 = vmatprep.subr.mxu0 0.0
  %2716 = vmatpush1.xpose.msra.mxu0 0.0
  %2717 = vmatprep.subr.mxu0 0.0
  %2718 = vmatpush1.xpose.msra.mxu0 0.0
  %2719 = vmatprep.subr.mxu0 0.0
  %2720 = vmatpush1.xpose.msra.mxu0 0.0
  %2721 = vmatprep.subr.mxu0 0.0
  %2722 = vmatpush1.xpose.msra.mxu0 0.0
  %2723 = vmatprep.subr.mxu0 0.0
  %2724 = vmatpush1.xpose.msra.mxu0 0.0
  %2725 = vmatprep.subr.mxu0 0.0
  %2726 = vmatpush1.xpose.msra.mxu0 0.0
  %2727 = vmatprep.subr.mxu0 0.0
  %2728 = vmatpush1.xpose.msra.mxu0 0.0
  %2729 = vmatprep.subr.mxu0 0.0
  %2730 = vmatpush1.xpose.msra.mxu0 0.0
  %2731 = vmatprep.subr.mxu0 0.0
  %2732 = vmatpush1.xpose.msra.mxu0 0.0
  %2733 = vmatprep.subr.mxu0 0.0
  %2734 = vmatpush1.xpose.msra.mxu0 0.0
  %2735 = vmatprep.subr.mxu0 0.0
  %2736 = vmatpush1.xpose.msra.mxu0 0.0
  %2737 = vmatprep.subr.mxu0 0.0
  %2738 = vmatpush1.xpose.msra.mxu0 0.0
  %2739 = vmatprep.subr.mxu0 0.0
  %2740 = vmatpush1.xpose.msra.mxu0 %v2707
  %2741 = vmatprep.subr.mxu0 0.0
  %2742 = vmatpush2.xpose.msra.mxu0 0.0
  %2743 = vmatprep.subr.mxu0 0.0
  %2744 = vmatpush2.xpose.msra.mxu0 0.0
  %2745 = vmatprep.subr.mxu0 0.0
  %2746 = vmatpush2.xpose.msra.mxu0 0.0
  %2747 = vmatprep.subr.mxu0 0.0
  %2748 = vmatpush2.xpose.msra.mxu0 0.0
  %2749 = vmatprep.subr.mxu0 0.0
  %2750 = vmatpush2.xpose.msra.mxu0 0.0
  %2751 = vmatprep.subr.mxu0 0.0
  %2752 = vmatpush2.xpose.msra.mxu0 0.0
  %2753 = vmatprep.subr.mxu0 0.0
  %2754 = vmatpush2.xpose.msra.mxu0 0.0
  %2755 = vmatprep.subr.mxu0 0.0
  %2756 = vmatpush2.xpose.msra.mxu0 0.0
  %2757 = vmatprep.subr.mxu0 0.0
  %2758 = vmatpush2.xpose.msra.mxu0 0.0
  %2759 = vmatprep.subr.mxu0 0.0
  %2760 = vmatpush2.xpose.msra.mxu0 0.0
  %2761 = vmatprep.subr.mxu0 0.0
  %2762 = vmatpush2.xpose.msra.mxu0 0.0
  %2763 = vmatprep.subr.mxu0 0.0
  %2764 = vmatpush2.xpose.msra.mxu0 0.0
  %2765 = vmatprep.subr.mxu0 0.0
  %2766 = vmatpush2.xpose.msra.mxu0 0.0
  %2767 = vmatprep.subr.mxu0 0.0
  %2768 = vmatpush2.xpose.msra.mxu0 0.0
  %2769 = vmatprep.subr.mxu0 0.0
  %2770 = vmatpush2.xpose.msra.mxu0 0.0
  %2771 = vmatprep.subr.mxu0 0.0
  %2772 = vmatpush2.xpose.msra.mxu0 0.0
  %2773 = vmatprep.mubr.f32.mxu0 0.0
  %2774 = vmatmul.mubr.f32.gmra.mxu0 %v2705
  %v2775 = vpop.f32.mrf.mxu0
  %v2776 = vadd.f32 0.0, %v2775
  %v2777 = vpop.f32.mrf.mxu0
  %2778 = vdwg.mxu0
  %v2779 = vmul.f32 %v2698, 0.35355338
  %v2780 = vmul.f32 %v2776, 0.35355338
  %v2781 = vsel %vm127, %v2779, -inf
  %2782 = vmax.xlane.f32.xlu0 %v2781
  %v2783 = vpop.xlane.xlu0 %2782
  %v2784 = vsel %vm127, %v2780, -inf
  %2785 = vmax.xlane.f32.xlu0 %v2784
  %v2786 = vpop.xlane.xlu0 %2785
  %v2787 = vsub.f32 %v2779, %v2783
  %v2788 = vsub.f32 %v2780, %v2786
  %v2789 = vmul.f32 %v2787, 1.442695
  %v2790 = vpow.pop %v2789
  %v2791 = vmul.f32 %v2788, 1.442695
  %v2792 = vpow.pop %v2791
  %v2793 = vsel %vm127, %v2790, 0.0
  %2794 = vadd.xlane.f32.xlu0 %v2793
  %v2795 = vpop.xlane.xlu0 %2794
  %v2796 = vsel %vm127, %v2792, 0.0
  %2797 = vadd.xlane.f32.xlu0 %v2796
  %v2798 = vpop.xlane.xlu0 %2797
  %v2799 = vrcp.pop %v2795
  %v2800 = vmul.f32 %v2790, %v2799
  %v2801 = vrcp.pop %v2798
  %v2802 = vmul.f32 %v2792, %v2801
  %2803 = vrot.lane.b32.xlu0 %v1953, 48
  %v2804 = vpop.permute.xlu0 %2803
  %v2807 = vsel %vm127, %v2800, 0
  %2809 = vmatprep.subr.mxu0 0.0
  %2810 = vmatpush1.msra.mxu0 0.0
  %2811 = vmatprep.subr.mxu0 0.0
  %2812 = vmatpush1.msra.mxu0 0.0
  %2813 = vmatprep.subr.mxu0 0.0
  %2814 = vmatpush1.msra.mxu0 0.0
  %2815 = vmatprep.subr.mxu0 0.0
  %2816 = vmatpush1.msra.mxu0 0.0
  %2817 = vmatprep.subr.mxu0 0.0
  %2818 = vmatpush1.msra.mxu0 0.0
  %2819 = vmatprep.subr.mxu0 0.0
  %2820 = vmatpush1.msra.mxu0 0.0
  %2821 = vmatprep.subr.mxu0 0.0
  %2822 = vmatpush1.msra.mxu0 0.0
  %2823 = vmatprep.subr.mxu0 0.0
  %2824 = vmatpush1.msra.mxu0 0.0
  %2825 = vmatprep.subr.mxu0 0.0
  %2826 = vmatpush1.msra.mxu0 0.0
  %2827 = vmatprep.subr.mxu0 0.0
  %2828 = vmatpush1.msra.mxu0 0.0
  %2829 = vmatprep.subr.mxu0 0.0
  %2830 = vmatpush1.msra.mxu0 0.0
  %2831 = vmatprep.subr.mxu0 0.0
  %2832 = vmatpush1.msra.mxu0 0.0
  %2833 = vmatprep.subr.mxu0 0.0
  %2834 = vmatpush1.msra.mxu0 0.0
  %2835 = vmatprep.subr.mxu0 0.0
  %2836 = vmatpush1.msra.mxu0 0.0
  %2837 = vmatprep.subr.mxu0 0.0
  %2838 = vmatpush1.msra.mxu0 0.0
  %2839 = vmatprep.subr.mxu0 0.0
  %2840 = vmatpush1.msra.mxu0 %v2804
  %2841 = vmatprep.subr.mxu0 0.0
  %2842 = vmatpush2.msra.mxu0 0.0
  %2843 = vmatprep.subr.mxu0 0.0
  %2844 = vmatpush2.msra.mxu0 0.0
  %2845 = vmatprep.subr.mxu0 0.0
  %2846 = vmatpush2.msra.mxu0 0.0
  %2847 = vmatprep.subr.mxu0 0.0
  %2848 = vmatpush2.msra.mxu0 0.0
  %2849 = vmatprep.subr.mxu0 0.0
  %2850 = vmatpush2.msra.mxu0 0.0
  %2851 = vmatprep.subr.mxu0 0.0
  %2852 = vmatpush2.msra.mxu0 0.0
  %2853 = vmatprep.subr.mxu0 0.0
  %2854 = vmatpush2.msra.mxu0 0.0
  %2855 = vmatprep.subr.mxu0 0.0
  %2856 = vmatpush2.msra.mxu0 0.0
  %2857 = vmatprep.subr.mxu0 0.0
  %2858 = vmatpush2.msra.mxu0 0.0
  %2859 = vmatprep.subr.mxu0 0.0
  %2860 = vmatpush2.msra.mxu0 0.0
  %2861 = vmatprep.subr.mxu0 0.0
  %2862 = vmatpush2.msra.mxu0 0.0
  %2863 = vmatprep.subr.mxu0 0.0
  %2864 = vmatpush2.msra.mxu0 0.0
  %2865 = vmatprep.subr.mxu0 0.0
  %2866 = vmatpush2.msra.mxu0 0.0
  %2867 = vmatprep.subr.mxu0 0.0
  %2868 = vmatpush2.msra.mxu0 0.0
  %2869 = vmatprep.subr.mxu0 0.0
  %2870 = vmatpush2.msra.mxu0 0.0
  %2871 = vmatprep.subr.mxu0 0.0
  %2872 = vmatpush2.msra.mxu0 0.0
  %2873 = vmatprep.mubr.f32.mxu0 0.0
  %2874 = vmatmul.mubr.f32.gmra.mxu0 %v2807
  %v2875 = vpop.f32.mrf.mxu0
  %v2876 = vadd.f32 0.0, %v2875
  %v2877 = vpop.f32.mrf.mxu0
  %2878 = vdwg.mxu0
  %2879 = vrot.lane.b32.xlu0 %v1958, 48
  %v2880 = vpop.permute.xlu0 %2879
  %v2883 = vsel %vm127, %v2802, 0
  %2885 = vmatprep.subr.mxu0 0.0
  %2886 = vmatpush1.msra.mxu0 0.0
  %2887 = vmatprep.subr.mxu0 0.0
  %2888 = vmatpush1.msra.mxu0 0.0
  %2889 = vmatprep.subr.mxu0 0.0
  %2890 = vmatpush1.msra.mxu0 0.0
  %2891 = vmatprep.subr.mxu0 0.0
  %2892 = vmatpush1.msra.mxu0 0.0
  %2893 = vmatprep.subr.mxu0 0.0
  %2894 = vmatpush1.msra.mxu0 0.0
  %2895 = vmatprep.subr.mxu0 0.0
  %2896 = vmatpush1.msra.mxu0 0.0
  %2897 = vmatprep.subr.mxu0 0.0
  %2898 = vmatpush1.msra.mxu0 0.0
  %2899 = vmatprep.subr.mxu0 0.0
  %2900 = vmatpush1.msra.mxu0 0.0
  %2901 = vmatprep.subr.mxu0 0.0
  %2902 = vmatpush1.msra.mxu0 0.0
  %2903 = vmatprep.subr.mxu0 0.0
  %2904 = vmatpush1.msra.mxu0 0.0
  %2905 = vmatprep.subr.mxu0 0.0
  %2906 = vmatpush1.msra.mxu0 0.0
  %2907 = vmatprep.subr.mxu0 0.0
  %2908 = vmatpush1.msra.mxu0 0.0
  %2909 = vmatprep.subr.mxu0 0.0
  %2910 = vmatpush1.msra.mxu0 0.0
  %2911 = vmatprep.subr.mxu0 0.0
  %2912 = vmatpush1.msra.mxu0 0.0
  %2913 = vmatprep.subr.mxu0 0.0
  %2914 = vmatpush1.msra.mxu0 0.0
  %2915 = vmatprep.subr.mxu0 0.0
  %2916 = vmatpush1.msra.mxu0 %v2880
  %2917 = vmatprep.subr.mxu0 0.0
  %2918 = vmatpush2.msra.mxu0 0.0
  %2919 = vmatprep.subr.mxu0 0.0
  %2920 = vmatpush2.msra.mxu0 0.0
  %2921 = vmatprep.subr.mxu0 0.0
  %2922 = vmatpush2.msra.mxu0 0.0
  %2923 = vmatprep.subr.mxu0 0.0
  %2924 = vmatpush2.msra.mxu0 0.0
  %2925 = vmatprep.subr.mxu0 0.0
  %2926 = vmatpush2.msra.mxu0 0.0
  %2927 = vmatprep.subr.mxu0 0.0
  %2928 = vmatpush2.msra.mxu0 0.0
  %2929 = vmatprep.subr.mxu0 0.0
  %2930 = vmatpush2.msra.mxu0 0.0
  %2931 = vmatprep.subr.mxu0 0.0
  %2932 = vmatpush2.msra.mxu0 0.0
  %2933 = vmatprep.subr.mxu0 0.0
  %2934 = vmatpush2.msra.mxu0 0.0
  %2935 = vmatprep.subr.mxu0 0.0
  %2936 = vmatpush2.msra.mxu0 0.0
  %2937 = vmatprep.subr.mxu0 0.0
  %2938 = vmatpush2.msra.mxu0 0.0
  %2939 = vmatprep.subr.mxu0 0.0
  %2940 = vmatpush2.msra.mxu0 0.0
  %2941 = vmatprep.subr.mxu0 0.0
  %2942 = vmatpush2.msra.mxu0 0.0
  %2943 = vmatprep.subr.mxu0 0.0
  %2944 = vmatpush2.msra.mxu0 0.0
  %2945 = vmatprep.subr.mxu0 0.0
  %2946 = vmatpush2.msra.mxu0 0.0
  %2947 = vmatprep.subr.mxu0 0.0
  %2948 = vmatpush2.msra.mxu0 0.0
  %2949 = vmatprep.mubr.f32.mxu0 0.0
  %2950 = vmatmul.mubr.f32.gmra.mxu0 %v2883
  %v2951 = vpop.f32.mrf.mxu0
  %v2952 = vadd.f32 0.0, %v2951
  %v2953 = vpop.f32.mrf.mxu0
  %2954 = vdwg.mxu0
  %2955 = vrot.lane.b32.xlu0 %v1953, 104
  %v2956 = vpop.permute.xlu0 %2955
  %2957 = vrot.lane.b32.xlu0 %v1953, 72
  %v2958 = vpop.permute.xlu0 %2957
  %v2959 = vsel %vm127, %v2956, 0
  %v2961 = vsel %vm127, %v2958, 0
  %2963 = vmatprep.subr.mxu0 0.0
  %2964 = vmatpush1.xpose.msra.mxu0 0.0
  %2965 = vmatprep.subr.mxu0 0.0
  %2966 = vmatpush1.xpose.msra.mxu0 0.0
  %2967 = vmatprep.subr.mxu0 0.0
  %2968 = vmatpush1.xpose.msra.mxu0 0.0
  %2969 = vmatprep.subr.mxu0 0.0
  %2970 = vmatpush1.xpose.msra.mxu0 0.0
  %2971 = vmatprep.subr.mxu0 0.0
  %2972 = vmatpush1.xpose.msra.mxu0 0.0
  %2973 = vmatprep.subr.mxu0 0.0
  %2974 = vmatpush1.xpose.msra.mxu0 0.0
  %2975 = vmatprep.subr.mxu0 0.0
  %2976 = vmatpush1.xpose.msra.mxu0 0.0
  %2977 = vmatprep.subr.mxu0 0.0
  %2978 = vmatpush1.xpose.msra.mxu0 0.0
  %2979 = vmatprep.subr.mxu0 0.0
  %2980 = vmatpush1.xpose.msra.mxu0 0.0
  %2981 = vmatprep.subr.mxu0 0.0
  %2982 = vmatpush1.xpose.msra.mxu0 0.0
  %2983 = vmatprep.subr.mxu0 0.0
  %2984 = vmatpush1.xpose.msra.mxu0 0.0
  %2985 = vmatprep.subr.mxu0 0.0
  %2986 = vmatpush1.xpose.msra.mxu0 0.0
  %2987 = vmatprep.subr.mxu0 0.0
  %2988 = vmatpush1.xpose.msra.mxu0 0.0
  %2989 = vmatprep.subr.mxu0 0.0
  %2990 = vmatpush1.xpose.msra.mxu0 0.0
  %2991 = vmatprep.subr.mxu0 0.0
  %2992 = vmatpush1.xpose.msra.mxu0 0.0
  %2993 = vmatprep.subr.mxu0 0.0
  %2994 = vmatpush1.xpose.msra.mxu0 %v2961
  %2995 = vmatprep.subr.mxu0 0.0
  %2996 = vmatpush2.xpose.msra.mxu0 0.0
  %2997 = vmatprep.subr.mxu0 0.0
  %2998 = vmatpush2.xpose.msra.mxu0 0.0
  %2999 = vmatprep.subr.mxu0 0.0
  %3000 = vmatpush2.xpose.msra.mxu0 0.0
  %3001 = vmatprep.subr.mxu0 0.0
  %3002 = vmatpush2.xpose.msra.mxu0 0.0
  %3003 = vmatprep.subr.mxu0 0.0
  %3004 = vmatpush2.xpose.msra.mxu0 0.0
  %3005 = vmatprep.subr.mxu0 0.0
  %3006 = vmatpush2.xpose.msra.mxu0 0.0
  %3007 = vmatprep.subr.mxu0 0.0
  %3008 = vmatpush2.xpose.msra.mxu0 0.0
  %3009 = vmatprep.subr.mxu0 0.0
  %3010 = vmatpush2.xpose.msra.mxu0 0.0
  %3011 = vmatprep.subr.mxu0 0.0
  %3012 = vmatpush2.xpose.msra.mxu0 0.0
  %3013 = vmatprep.subr.mxu0 0.0
  %3014 = vmatpush2.xpose.msra.mxu0 0.0
  %3015 = vmatprep.subr.mxu0 0.0
  %3016 = vmatpush2.xpose.msra.mxu0 0.0
  %3017 = vmatprep.subr.mxu0 0.0
  %3018 = vmatpush2.xpose.msra.mxu0 0.0
  %3019 = vmatprep.subr.mxu0 0.0
  %3020 = vmatpush2.xpose.msra.mxu0 0.0
  %3021 = vmatprep.subr.mxu0 0.0
  %3022 = vmatpush2.xpose.msra.mxu0 0.0
  %3023 = vmatprep.subr.mxu0 0.0
  %3024 = vmatpush2.xpose.msra.mxu0 0.0
  %3025 = vmatprep.subr.mxu0 0.0
  %3026 = vmatpush2.xpose.msra.mxu0 0.0
  %3027 = vmatprep.mubr.f32.mxu0 0.0
  %3028 = vmatmul.mubr.f32.gmra.mxu0 %v2959
  %v3029 = vpop.f32.mrf.mxu0
  %v3030 = vadd.f32 0.0, %v3029
  %v3031 = vpop.f32.mrf.mxu0
  %3032 = vdwg.mxu0
  %3033 = vrot.lane.b32.xlu0 %v1958, 104
  %v3034 = vpop.permute.xlu0 %3033
  %3035 = vrot.lane.b32.xlu0 %v1958, 72
  %v3036 = vpop.permute.xlu0 %3035
  %v3037 = vsel %vm127, %v3034, 0
  %v3039 = vsel %vm127, %v3036, 0
  %3041 = vmatprep.subr.mxu0 0.0
  %3042 = vmatpush1.xpose.msra.mxu0 0.0
  %3043 = vmatprep.subr.mxu0 0.0
  %3044 = vmatpush1.xpose.msra.mxu0 0.0
  %3045 = vmatprep.subr.mxu0 0.0
  %3046 = vmatpush1.xpose.msra.mxu0 0.0
  %3047 = vmatprep.subr.mxu0 0.0
  %3048 = vmatpush1.xpose.msra.mxu0 0.0
  %3049 = vmatprep.subr.mxu0 0.0
  %3050 = vmatpush1.xpose.msra.mxu0 0.0
  %3051 = vmatprep.subr.mxu0 0.0
  %3052 = vmatpush1.xpose.msra.mxu0 0.0
  %3053 = vmatprep.subr.mxu0 0.0
  %3054 = vmatpush1.xpose.msra.mxu0 0.0
  %3055 = vmatprep.subr.mxu0 0.0
  %3056 = vmatpush1.xpose.msra.mxu0 0.0
  %3057 = vmatprep.subr.mxu0 0.0
  %3058 = vmatpush1.xpose.msra.mxu0 0.0
  %3059 = vmatprep.subr.mxu0 0.0
  %3060 = vmatpush1.xpose.msra.mxu0 0.0
  %3061 = vmatprep.subr.mxu0 0.0
  %3062 = vmatpush1.xpose.msra.mxu0 0.0
  %3063 = vmatprep.subr.mxu0 0.0
  %3064 = vmatpush1.xpose.msra.mxu0 0.0
  %3065 = vmatprep.subr.mxu0 0.0
  %3066 = vmatpush1.xpose.msra.mxu0 0.0
  %3067 = vmatprep.subr.mxu0 0.0
  %3068 = vmatpush1.xpose.msra.mxu0 0.0
  %3069 = vmatprep.subr.mxu0 0.0
  %3070 = vmatpush1.xpose.msra.mxu0 0.0
  %3071 = vmatprep.subr.mxu0 0.0
  %3072 = vmatpush1.xpose.msra.mxu0 %v3039
  %3073 = vmatprep.subr.mxu0 0.0
  %3074 = vmatpush2.xpose.msra.mxu0 0.0
  %3075 = vmatprep.subr.mxu0 0.0
  %3076 = vmatpush2.xpose.msra.mxu0 0.0
  %3077 = vmatprep.subr.mxu0 0.0
  %3078 = vmatpush2.xpose.msra.mxu0 0.0
  %3079 = vmatprep.subr.mxu0 0.0
  %3080 = vmatpush2.xpose.msra.mxu0 0.0
  %3081 = vmatprep.subr.mxu0 0.0
  %3082 = vmatpush2.xpose.msra.mxu0 0.0
  %3083 = vmatprep.subr.mxu0 0.0
  %3084 = vmatpush2.xpose.msra.mxu0 0.0
  %3085 = vmatprep.subr.mxu0 0.0
  %3086 = vmatpush2.xpose.msra.mxu0 0.0
  %3087 = vmatprep.subr.mxu0 0.0
  %3088 = vmatpush2.xpose.msra.mxu0 0.0
  %3089 = vmatprep.subr.mxu0 0.0
  %3090 = vmatpush2.xpose.msra.mxu0 0.0
  %3091 = vmatprep.subr.mxu0 0.0
  %3092 = vmatpush2.xpose.msra.mxu0 0.0
  %3093 = vmatprep.subr.mxu0 0.0
  %3094 = vmatpush2.xpose.msra.mxu0 0.0
  %3095 = vmatprep.subr.mxu0 0.0
  %3096 = vmatpush2.xpose.msra.mxu0 0.0
  %3097 = vmatprep.subr.mxu0 0.0
  %3098 = vmatpush2.xpose.msra.mxu0 0.0
  %3099 = vmatprep.subr.mxu0 0.0
  %3100 = vmatpush2.xpose.msra.mxu0 0.0
  %3101 = vmatprep.subr.mxu0 0.0
  %3102 = vmatpush2.xpose.msra.mxu0 0.0
  %3103 = vmatprep.subr.mxu0 0.0
  %3104 = vmatpush2.xpose.msra.mxu0 0.0
  %3105 = vmatprep.mubr.f32.mxu0 0.0
  %3106 = vmatmul.mubr.f32.gmra.mxu0 %v3037
  %v3107 = vpop.f32.mrf.mxu0
  %v3108 = vadd.f32 0.0, %v3107
  %v3109 = vpop.f32.mrf.mxu0
  %3110 = vdwg.mxu0
  %v3111 = vmul.f32 %v3030, 0.35355338
  %v3112 = vmul.f32 %v3108, 0.35355338
  %v3113 = vsel %vm127, %v3111, -inf
  %3114 = vmax.xlane.f32.xlu0 %v3113
  %v3115 = vpop.xlane.xlu0 %3114
  %v3116 = vsel %vm127, %v3112, -inf
  %3117 = vmax.xlane.f32.xlu0 %v3116
  %v3118 = vpop.xlane.xlu0 %3117
  %v3119 = vsub.f32 %v3111, %v3115
  %v3120 = vsub.f32 %v3112, %v3118
  %v3121 = vmul.f32 %v3119, 1.442695
  %v3122 = vpow.pop %v3121
  %v3123 = vmul.f32 %v3120, 1.442695
  %v3124 = vpow.pop %v3123
  %v3125 = vsel %vm127, %v3122, 0.0
  %3126 = vadd.xlane.f32.xlu0 %v3125
  %v3127 = vpop.xlane.xlu0 %3126
  %v3128 = vsel %vm127, %v3124, 0.0
  %3129 = vadd.xlane.f32.xlu0 %v3128
  %v3130 = vpop.xlane.xlu0 %3129
  %v3131 = vrcp.pop %v3127
  %v3132 = vmul.f32 %v3122, %v3131
  %v3133 = vrcp.pop %v3130
  %v3134 = vmul.f32 %v3124, %v3133
  %3135 = vrot.lane.b32.xlu0 %v1953, 40
  %v3136 = vpop.permute.xlu0 %3135
  %v3139 = vsel %vm127, %v3132, 0
  %3141 = vmatprep.subr.mxu0 0.0
  %3142 = vmatpush1.msra.mxu0 0.0
  %3143 = vmatprep.subr.mxu0 0.0
  %3144 = vmatpush1.msra.mxu0 0.0
  %3145 = vmatprep.subr.mxu0 0.0
  %3146 = vmatpush1.msra.mxu0 0.0
  %3147 = vmatprep.subr.mxu0 0.0
  %3148 = vmatpush1.msra.mxu0 0.0
  %3149 = vmatprep.subr.mxu0 0.0
  %3150 = vmatpush1.msra.mxu0 0.0
  %3151 = vmatprep.subr.mxu0 0.0
  %3152 = vmatpush1.msra.mxu0 0.0
  %3153 = vmatprep.subr.mxu0 0.0
  %3154 = vmatpush1.msra.mxu0 0.0
  %3155 = vmatprep.subr.mxu0 0.0
  %3156 = vmatpush1.msra.mxu0 0.0
  %3157 = vmatprep.subr.mxu0 0.0
  %3158 = vmatpush1.msra.mxu0 0.0
  %3159 = vmatprep.subr.mxu0 0.0
  %3160 = vmatpush1.msra.mxu0 0.0
  %3161 = vmatprep.subr.mxu0 0.0
  %3162 = vmatpush1.msra.mxu0 0.0
  %3163 = vmatprep.subr.mxu0 0.0
  %3164 = vmatpush1.msra.mxu0 0.0
  %3165 = vmatprep.subr.mxu0 0.0
  %3166 = vmatpush1.msra.mxu0 0.0
  %3167 = vmatprep.subr.mxu0 0.0
  %3168 = vmatpush1.msra.mxu0 0.0
  %3169 = vmatprep.subr.mxu0 0.0
  %3170 = vmatpush1.msra.mxu0 0.0
  %3171 = vmatprep.subr.mxu0 0.0
  %3172 = vmatpush1.msra.mxu0 %v3136
  %3173 = vmatprep.subr.mxu0 0.0
  %3174 = vmatpush2.msra.mxu0 0.0
  %3175 = vmatprep.subr.mxu0 0.0
  %3176 = vmatpush2.msra.mxu0 0.0
  %3177 = vmatprep.subr.mxu0 0.0
  %3178 = vmatpush2.msra.mxu0 0.0
  %3179 = vmatprep.subr.mxu0 0.0
  %3180 = vmatpush2.msra.mxu0 0.0
  %3181 = vmatprep.subr.mxu0 0.0
  %3182 = vmatpush2.msra.mxu0 0.0
  %3183 = vmatprep.subr.mxu0 0.0
  %3184 = vmatpush2.msra.mxu0 0.0
  %3185 = vmatprep.subr.mxu0 0.0
  %3186 = vmatpush2.msra.mxu0 0.0
  %3187 = vmatprep.subr.mxu0 0.0
  %3188 = vmatpush2.msra.mxu0 0.0
  %3189 = vmatprep.subr.mxu0 0.0
  %3190 = vmatpush2.msra.mxu0 0.0
  %3191 = vmatprep.subr.mxu0 0.0
  %3192 = vmatpush2.msra.mxu0 0.0
  %3193 = vmatprep.subr.mxu0 0.0
  %3194 = vmatpush2.msra.mxu0 0.0
  %3195 = vmatprep.subr.mxu0 0.0
  %3196 = vmatpush2.msra.mxu0 0.0
  %3197 = vmatprep.subr.mxu0 0.0
  %3198 = vmatpush2.msra.mxu0 0.0
  %3199 = vmatprep.subr.mxu0 0.0
  %3200 = vmatpush2.msra.mxu0 0.0
  %3201 = vmatprep.subr.mxu0 0.0
  %3202 = vmatpush2.msra.mxu0 0.0
  %3203 = vmatprep.subr.mxu0 0.0
  %3204 = vmatpush2.msra.mxu0 0.0
  %3205 = vmatprep.mubr.f32.mxu0 0.0
  %3206 = vmatmul.mubr.f32.gmra.mxu0 %v3139
  %v3207 = vpop.f32.mrf.mxu0
  %v3208 = vadd.f32 0.0, %v3207
  %v3209 = vpop.f32.mrf.mxu0
  %3210 = vdwg.mxu0
  %3211 = vrot.lane.b32.xlu0 %v1958, 40
  %v3212 = vpop.permute.xlu0 %3211
  %v3215 = vsel %vm127, %v3134, 0
  %3217 = vmatprep.subr.mxu0 0.0
  %3218 = vmatpush1.msra.mxu0 0.0
  %3219 = vmatprep.subr.mxu0 0.0
  %3220 = vmatpush1.msra.mxu0 0.0
  %3221 = vmatprep.subr.mxu0 0.0
  %3222 = vmatpush1.msra.mxu0 0.0
  %3223 = vmatprep.subr.mxu0 0.0
  %3224 = vmatpush1.msra.mxu0 0.0
  %3225 = vmatprep.subr.mxu0 0.0
  %3226 = vmatpush1.msra.mxu0 0.0
  %3227 = vmatprep.subr.mxu0 0.0
  %3228 = vmatpush1.msra.mxu0 0.0
  %3229 = vmatprep.subr.mxu0 0.0
  %3230 = vmatpush1.msra.mxu0 0.0
  %3231 = vmatprep.subr.mxu0 0.0
  %3232 = vmatpush1.msra.mxu0 0.0
  %3233 = vmatprep.subr.mxu0 0.0
  %3234 = vmatpush1.msra.mxu0 0.0
  %3235 = vmatprep.subr.mxu0 0.0
  %3236 = vmatpush1.msra.mxu0 0.0
  %3237 = vmatprep.subr.mxu0 0.0
  %3238 = vmatpush1.msra.mxu0 0.0
  %3239 = vmatprep.subr.mxu0 0.0
  %3240 = vmatpush1.msra.mxu0 0.0
  %3241 = vmatprep.subr.mxu0 0.0
  %3242 = vmatpush1.msra.mxu0 0.0
  %3243 = vmatprep.subr.mxu0 0.0
  %3244 = vmatpush1.msra.mxu0 0.0
  %3245 = vmatprep.subr.mxu0 0.0
  %3246 = vmatpush1.msra.mxu0 0.0
  %3247 = vmatprep.subr.mxu0 0.0
  %3248 = vmatpush1.msra.mxu0 %v3212
  %3249 = vmatprep.subr.mxu0 0.0
  %3250 = vmatpush2.msra.mxu0 0.0
  %3251 = vmatprep.subr.mxu0 0.0
  %3252 = vmatpush2.msra.mxu0 0.0
  %3253 = vmatprep.subr.mxu0 0.0
  %3254 = vmatpush2.msra.mxu0 0.0
  %3255 = vmatprep.subr.mxu0 0.0
  %3256 = vmatpush2.msra.mxu0 0.0
  %3257 = vmatprep.subr.mxu0 0.0
  %3258 = vmatpush2.msra.mxu0 0.0
  %3259 = vmatprep.subr.mxu0 0.0
  %3260 = vmatpush2.msra.mxu0 0.0
  %3261 = vmatprep.subr.mxu0 0.0
  %3262 = vmatpush2.msra.mxu0 0.0
  %3263 = vmatprep.subr.mxu0 0.0
  %3264 = vmatpush2.msra.mxu0 0.0
  %3265 = vmatprep.subr.mxu0 0.0
  %3266 = vmatpush2.msra.mxu0 0.0
  %3267 = vmatprep.subr.mxu0 0.0
  %3268 = vmatpush2.msra.mxu0 0.0
  %3269 = vmatprep.subr.mxu0 0.0
  %3270 = vmatpush2.msra.mxu0 0.0
  %3271 = vmatprep.subr.mxu0 0.0
  %3272 = vmatpush2.msra.mxu0 0.0
  %3273 = vmatprep.subr.mxu0 0.0
  %3274 = vmatpush2.msra.mxu0 0.0
  %3275 = vmatprep.subr.mxu0 0.0
  %3276 = vmatpush2.msra.mxu0 0.0
  %3277 = vmatprep.subr.mxu0 0.0
  %3278 = vmatpush2.msra.mxu0 0.0
  %3279 = vmatprep.subr.mxu0 0.0
  %3280 = vmatpush2.msra.mxu0 0.0
  %3281 = vmatprep.mubr.f32.mxu0 0.0
  %3282 = vmatmul.mubr.f32.gmra.mxu0 %v3215
  %v3283 = vpop.f32.mrf.mxu0
  %v3284 = vadd.f32 0.0, %v3283
  %v3285 = vpop.f32.mrf.mxu0
  %3286 = vdwg.mxu0
  %3289 = vrot.lane.b32.xlu0 %v2544, 8
  %v3290 = vpop.permute.xlu0 %3289
  %3291 = vrot.lane.b32.xlu0 %v2620, 8
  %v3292 = vpop.permute.xlu0 %3291
  %3297 = vrot.lane.b32.xlu0 %v2876, 16
  %v3298 = vpop.permute.xlu0 %3297
  %3299 = vrot.lane.b32.xlu0 %v2952, 16
  %v3300 = vpop.permute.xlu0 %3299
  %3305 = vrot.lane.b32.xlu0 %v3208, 24
  %v3306 = vpop.permute.xlu0 %3305
  %3307 = vrot.lane.b32.xlu0 %v3284, 24
  %v3308 = vpop.permute.xlu0 %3307
  %v3311 = vsel %vm127, %v2212, %v3290
  %v3312 = vsel %vm127, %v2288, %v3292
  %v3313 = vsel %vm1477, %v3311, %v3298
  %v3314 = vsel %vm1477, %v3312, %v3300
  %v3315 = vsel %vm1480, %v3313, %v3306
  %v3316 = vsel %vm1480, %v3314, %v3308
  %v3317 = vlaneseq
  %v3318 = vshrl.u32 %v3317, 7
  %v3319 = vsub.s32 2, %v3318
  %v3320 = vrot.slane %v1874, %v3319
  %v3322 = vsel %vm42, %v3315, 0
  %v3325 = vsel %vm42, %v3316, 0
  %3327 = vmatprep.subr.mxu0 0.0
  %3328 = vmatpush1.msra.mxu0 0.0
  %3329 = vmatprep.subr.mxu0 0.0
  %3330 = vmatpush1.msra.mxu0 0.0
  %3331 = vmatprep.subr.mxu0 0.0
  %3332 = vmatpush1.msra.mxu0 0.0
  %3333 = vmatprep.subr.mxu0 0.0
  %3334 = vmatpush1.msra.mxu0 0.0
  %3335 = vmatprep.subr.mxu0 0.0
  %3336 = vmatpush1.msra.mxu0 0.0
  %3337 = vmatprep.subr.mxu0 0.0
  %3338 = vmatpush1.msra.mxu0 0.0
  %3339 = vmatprep.subr.mxu0 0.0
  %3340 = vmatpush1.msra.mxu0 0.0
  %3341 = vmatprep.subr.mxu0 0.0
  %3342 = vmatpush1.msra.mxu0 0.0
  %3343 = vmatprep.subr.mxu0 0.0
  %3344 = vmatpush1.msra.mxu0 0.0
  %3345 = vmatprep.subr.mxu0 0.0
  %3346 = vmatpush1.msra.mxu0 0.0
  %3347 = vmatprep.subr.mxu0 0.0
  %3348 = vmatpush1.msra.mxu0 0.0
  %3349 = vmatprep.subr.mxu0 0.0
  %3350 = vmatpush1.msra.mxu0 0.0
  %3351 = vmatprep.subr.mxu0 0.0
  %3352 = vmatpush1.msra.mxu0 %v1872
  %3353 = vmatprep.subr.mxu0 0.0
  %3354 = vmatpush1.msra.mxu0 %v1871
  %3355 = vmatprep.subr.mxu0 0.0
  %3356 = vmatpush1.msra.mxu0 %v1870
  %3357 = vmatprep.subr.mxu0 0.0
  %3358 = vmatpush1.msra.mxu0 %v1869
  %3359 = vmatprep.subr.mxu0 0.0
  %3360 = vmatpush2.msra.mxu0 0.0
  %3361 = vmatprep.subr.mxu0 0.0
  %3362 = vmatpush2.msra.mxu0 0.0
  %3363 = vmatprep.subr.mxu0 0.0
  %3364 = vmatpush2.msra.mxu0 0.0
  %3365 = vmatprep.subr.mxu0 0.0
  %3366 = vmatpush2.msra.mxu0 0.0
  %3367 = vmatprep.subr.mxu0 0.0
  %3368 = vmatpush2.msra.mxu0 0.0
  %3369 = vmatprep.subr.mxu0 0.0
  %3370 = vmatpush2.msra.mxu0 0.0
  %3371 = vmatprep.subr.mxu0 0.0
  %3372 = vmatpush2.msra.mxu0 0.0
  %3373 = vmatprep.subr.mxu0 0.0
  %3374 = vmatpush2.msra.mxu0 0.0
  %3375 = vmatprep.subr.mxu0 0.0
  %3376 = vmatpush2.msra.mxu0 0.0
  %3377 = vmatprep.subr.mxu0 0.0
  %3378 = vmatpush2.msra.mxu0 0.0
  %3379 = vmatprep.subr.mxu0 0.0
  %3380 = vmatpush2.msra.mxu0 0.0
  %3381 = vmatprep.subr.mxu0 0.0
  %3382 = vmatpush2.msra.mxu0 0.0
  %3383 = vmatprep.subr.mxu0 0.0
  %3384 = vmatpush2.msra.mxu0 0.0
  %3385 = vmatprep.subr.mxu0 0.0
  %3386 = vmatpush2.msra.mxu0 0.0
  %3387 = vmatprep.subr.mxu0 0.0
  %3388 = vmatpush2.msra.mxu0 0.0
  %3389 = vmatprep.subr.mxu0 0.0
  %3390 = vmatpush2.msra.mxu0 0.0
  %3391 = vmatprep.mubr.f32.mxu0 0.0
  %3392 = vmatmul.mubr.f32.gmra.mxu0 %v3322
  %v3393 = vpop.f32.mrf.mxu0
  %v3394 = vadd.f32 %v3320, %v3393
  %v3395 = vpop.f32.mrf.mxu0
  %3396 = vmatprep.mubr.f32.mxu0 0.0
  %3397 = vmatmul.mubr.f32.gmra.mxu0 %v3325
  %v3398 = vpop.f32.mrf.mxu0
  %v3399 = vadd.f32 %v3320, %v3398
  %v3400 = vpop.f32.mrf.mxu0
  %3401 = vdwg.mxu0
  %v3402 = vadd.f32 %v1861, %v3394
  %v3403 = vadd.f32 %v1862, %v3399
  %v3404 = vsel %vm42, %v3402, 0.0
  %3405 = vadd.xlane.f32.xlu0 %v3404
  %v3406 = vpop.xlane.xlu0 %3405
  %v3407 = vsel %vm42, %v3403, 0.0
  %3408 = vadd.xlane.f32.xlu0 %v3407
  %v3409 = vpop.xlane.xlu0 %3408
  %v3410 = vmul.f32 %v3406, %v1576
  %v3411 = vmul.f32 %v3409, %v1576
  %v3412 = vsub.f32 %v3402, %v3410
  %v3413 = vsub.f32 %v3403, %v3411
  %v3414 = vmul.f32 %v3412, %v3412
  %v3415 = vmul.f32 %v3413, %v3413
  %v3416 = vsel %vm42, %v3414, 0.0
  %3417 = vadd.xlane.f32.xlu0 %v3416
  %v3418 = vpop.xlane.xlu0 %3417
  %v3419 = vsel %vm42, %v3415, 0.0
  %3420 = vadd.xlane.f32.xlu0 %v3419
  %v3421 = vpop.xlane.xlu0 %3420
  %v3422 = vmul.f32 %v3418, %v1576
  %v3423 = vmul.f32 %v3421, %v1576
  %v3424 = vadd.f32 %v3422, 1e-05
  %v3425 = vadd.f32 %v3423, 1e-05
  %v3426 = vrsqrt.pop %v3424
  %v3427 = vrsqrt.pop %v3425
  %v3428 = vmul.f32 %v3412, %v3426
  %v3429 = vmul.f32 %v3413, %v3427
  %v3430 = vlaneseq
  %v3431 = vshrl.u32 %v3430, 7
  %v3432 = vsub.s32 3, %v3431
  %v3433 = vrot.slane %v1874, %v3432
  %v3434 = vmul.f32 %v3428, %v3433
  %v3435 = vmul.f32 %v3429, %v3433
  %v3436 = vlaneseq
  %v3437 = vshrl.u32 %v3436, 7
  %v3438 = vsub.s32 4, %v3437
  %v3439 = vrot.slane %v1874, %v3438
  %v3440 = vadd.f32 %v3434, %v3439
  %v3441 = vadd.f32 %v3435, %v3439
  %s3442 = scalar_lea.vmem %s3, 64
  %v3443 = vld [vmem:[%s3442] sm:$0xff]
  %v3444 = vld [vmem:[%s3442 + $0x8] sm:$0xff]
  %v3445 = vld [vmem:[%s3442 + $0x10] sm:$0xff]
  %v3446 = vld [vmem:[%s3442 + $0x18] sm:$0xff]
  %v3447 = vld [vmem:[%s3442 + $0x20] sm:$0xff]
  %v3448 = vld [vmem:[%s3442 + $0x28] sm:$0xff]
  %v3449 = vld [vmem:[%s3442 + $0x30] sm:$0xff]
  %v3450 = vld [vmem:[%s3442 + $0x38] sm:$0xff]
  %v3451 = vlaneseq
  %v3452 = vshrl.u32 %v3451, 7
  %v3453 = vsub.s32 1, %v3452
  %v3454 = vrot.slane %v1874, %v3453
  %v3455 = vlaneseq
  %v3456 = vshrl.u32 %v3455, 7
  %v3457 = vsub.s32 1, %v3456
  %v3458 = vrot.slane %v1875, %v3457
  %v3460 = vsel %vm42, %v3440, 0
  %v3463 = vsel %vm42, %v3441, 0
  %3465 = vmatprep.subr.mxu0 0.0
  %3466 = vmatpush1.msra.mxu0 0.0
  %3467 = vmatprep.subr.mxu0 0.0
  %3468 = vmatpush1.msra.mxu0 0.0
  %3469 = vmatprep.subr.mxu0 0.0
  %3470 = vmatpush1.msra.mxu0 0.0
  %3471 = vmatprep.subr.mxu0 0.0
  %3472 = vmatpush1.msra.mxu0 0.0
  %3473 = vmatprep.subr.mxu0 0.0
  %3474 = vmatpush1.msra.mxu0 0.0
  %3475 = vmatprep.subr.mxu0 0.0
  %3476 = vmatpush1.msra.mxu0 0.0
  %3477 = vmatprep.subr.mxu0 0.0
  %3478 = vmatpush1.msra.mxu0 0.0
  %3479 = vmatprep.subr.mxu0 0.0
  %3480 = vmatpush1.msra.mxu0 0.0
  %3481 = vmatprep.subr.mxu0 0.0
  %3482 = vmatpush1.msra.mxu0 0.0
  %3483 = vmatprep.subr.mxu0 0.0
  %3484 = vmatpush1.msra.mxu0 0.0
  %3485 = vmatprep.subr.mxu0 0.0
  %3486 = vmatpush1.msra.mxu0 0.0
  %3487 = vmatprep.subr.mxu0 0.0
  %3488 = vmatpush1.msra.mxu0 0.0
  %3489 = vmatprep.subr.mxu0 %v3450
  %3490 = vmatpush1.msra.mxu0 %v3449
  %3491 = vmatprep.subr.mxu0 %v3448
  %3492 = vmatpush1.msra.mxu0 %v3447
  %3493 = vmatprep.subr.mxu0 %v3446
  %3494 = vmatpush1.msra.mxu0 %v3445
  %3495 = vmatprep.subr.mxu0 %v3444
  %3496 = vmatpush1.msra.mxu0 %v3443
  %3497 = vmatprep.subr.mxu0 0.0
  %3498 = vmatpush2.msra.mxu0 0.0
  %3499 = vmatprep.subr.mxu0 0.0
  %3500 = vmatpush2.msra.mxu0 0.0
  %3501 = vmatprep.subr.mxu0 0.0
  %3502 = vmatpush2.msra.mxu0 0.0
  %3503 = vmatprep.subr.mxu0 0.0
  %3504 = vmatpush2.msra.mxu0 0.0
  %3505 = vmatprep.subr.mxu0 0.0
  %3506 = vmatpush2.msra.mxu0 0.0
  %3507 = vmatprep.subr.mxu0 0.0
  %3508 = vmatpush2.msra.mxu0 0.0
  %3509 = vmatprep.subr.mxu0 0.0
  %3510 = vmatpush2.msra.mxu0 0.0
  %3511 = vmatprep.subr.mxu0 0.0
  %3512 = vmatpush2.msra.mxu0 0.0
  %3513 = vmatprep.subr.mxu0 0.0
  %3514 = vmatpush2.msra.mxu0 0.0
  %3515 = vmatprep.subr.mxu0 0.0
  %3516 = vmatpush2.msra.mxu0 0.0
  %3517 = vmatprep.subr.mxu0 0.0
  %3518 = vmatpush2.msra.mxu0 0.0
  %3519 = vmatprep.subr.mxu0 0.0
  %3520 = vmatpush2.msra.mxu0 0.0
  %3521 = vmatprep.subr.mxu0 0.0
  %3522 = vmatpush2.msra.mxu0 0.0
  %3523 = vmatprep.subr.mxu0 0.0
  %3524 = vmatpush2.msra.mxu0 0.0
  %3525 = vmatprep.subr.mxu0 0.0
  %3526 = vmatpush2.msra.mxu0 0.0
  %3527 = vmatprep.subr.mxu0 0.0
  %3528 = vmatpush2.msra.mxu0 0.0
  %3529 = vmatprep.mubr.f32.mxu0 0.0
  %3530 = vmatmul.mubr.f32.gmra.mxu0 %v3460
  %v3531 = vpop.f32.mrf.mxu0
  %v3532 = vadd.f32 %v3454, %v3531
  %v3533 = vpop.f32.mrf.mxu0
  %v3534 = vadd.f32 %v3458, %v3533
  %3535 = vmatprep.mubr.f32.mxu0 0.0
  %3536 = vmatmul.mubr.f32.gmra.mxu0 %v3463
  %v3537 = vpop.f32.mrf.mxu0
  %v3538 = vadd.f32 %v3454, %v3537
  %v3539 = vpop.f32.mrf.mxu0
  %v3540 = vadd.f32 %v3458, %v3539
  %3541 = vdwg.mxu0
  %v3542 = vmax.f32 %v3532, 0.0
  %v3543 = vmax.f32 %v3534, 0.0
  %v3544 = vmax.f32 %v3538, 0.0
  %v3545 = vmax.f32 %v3540, 0.0
  %s3546 = scalar_lea.vmem %s4, 256
  %v3547 = vld [vmem:[%s3546] sm:$0xff]
  %v3548 = vld [vmem:[%s3546 + $0x8] sm:$0xff]
  %v3549 = vld [vmem:[%s3546 + $0x10] sm:$0xff]
  %v3550 = vld [vmem:[%s3546 + $0x18] sm:$0xff]
  %v3551 = vld [vmem:[%s3546 + $0x20] sm:$0xff]
  %v3552 = vld [vmem:[%s3546 + $0x28] sm:$0xff]
  %v3553 = vld [vmem:[%s3546 + $0x30] sm:$0xff]
  %v3554 = vld [vmem:[%s3546 + $0x38] sm:$0xff]
  %v3555 = vld [vmem:[%s3546 + $0x40] sm:$0xff]
  %v3556 = vld [vmem:[%s3546 + $0x48] sm:$0xff]
  %v3557 = vld [vmem:[%s3546 + $0x50] sm:$0xff]
  %v3558 = vld [vmem:[%s3546 + $0x58] sm:$0xff]
  %v3559 = vld [vmem:[%s3546 + $0x60] sm:$0xff]
  %v3560 = vld [vmem:[%s3546 + $0x68] sm:$0xff]
  %v3561 = vld [vmem:[%s3546 + $0x70] sm:$0xff]
  %v3562 = vld [vmem:[%s3546 + $0x78] sm:$0xff]
  %v3563 = vld [vmem:[%s3546 + $0x80] sm:$0xff]
  %v3564 = vld [vmem:[%s3546 + $0x88] sm:$0xff]
  %v3565 = vld [vmem:[%s3546 + $0x90] sm:$0xff]
  %v3566 = vld [vmem:[%s3546 + $0x98] sm:$0xff]
  %v3567 = vld [vmem:[%s3546 + $0xa0] sm:$0xff]
  %v3568 = vld [vmem:[%s3546 + $0xa8] sm:$0xff]
  %v3569 = vld [vmem:[%s3546 + $0xb0] sm:$0xff]
  %v3570 = vld [vmem:[%s3546 + $0xb8] sm:$0xff]
  %v3571 = vld [vmem:[%s3546 + $0xc0] sm:$0xff]
  %v3572 = vld [vmem:[%s3546 + $0xc8] sm:$0xff]
  %v3573 = vld [vmem:[%s3546 + $0xd0] sm:$0xff]
  %v3574 = vld [vmem:[%s3546 + $0xd8] sm:$0xff]
  %v3575 = vld [vmem:[%s3546 + $0xe0] sm:$0xff]
  %v3576 = vld [vmem:[%s3546 + $0xe8] sm:$0xff]
  %v3577 = vld [vmem:[%s3546 + $0xf0] sm:$0xff]
  %v3578 = vld [vmem:[%s3546 + $0xf8] sm:$0xff]
  %v3579 = vlaneseq
  %v3580 = vshrl.u32 %v3579, 7
  %v3581 = vsub.s32 7, %v3580
  %v3582 = vrot.slane %v1874, %v3581
  %3583 = vmatprep.subr.mxu0 0.0
  %3584 = vmatpush1.msra.mxu0 %v3562
  %3585 = vmatprep.subr.mxu0 0.0
  %3586 = vmatpush1.msra.mxu0 %v3561
  %3587 = vmatprep.subr.mxu0 0.0
  %3588 = vmatpush1.msra.mxu0 %v3560
  %3589 = vmatprep.subr.mxu0 0.0
  %3590 = vmatpush1.msra.mxu0 %v3559
  %3591 = vmatprep.subr.mxu0 0.0
  %3592 = vmatpush1.msra.mxu0 %v3558
  %3593 = vmatprep.subr.mxu0 0.0
  %3594 = vmatpush1.msra.mxu0 %v3557
  %3595 = vmatprep.subr.mxu0 0.0
  %3596 = vmatpush1.msra.mxu0 %v3556
  %3597 = vmatprep.subr.mxu0 0.0
  %3598 = vmatpush1.msra.mxu0 %v3555
  %3599 = vmatprep.subr.mxu0 0.0
  %3600 = vmatpush1.msra.mxu0 %v3554
  %3601 = vmatprep.subr.mxu0 0.0
  %3602 = vmatpush1.msra.mxu0 %v3553
  %3603 = vmatprep.subr.mxu0 0.0
  %3604 = vmatpush1.msra.mxu0 %v3552
  %3605 = vmatprep.subr.mxu0 0.0
  %3606 = vmatpush1.msra.mxu0 %v3551
  %3607 = vmatprep.subr.mxu0 0.0
  %3608 = vmatpush1.msra.mxu0 %v3550
  %3609 = vmatprep.subr.mxu0 0.0
  %3610 = vmatpush1.msra.mxu0 %v3549
  %3611 = vmatprep.subr.mxu0 0.0
  %3612 = vmatpush1.msra.mxu0 %v3548
  %3613 = vmatprep.subr.mxu0 0.0
  %3614 = vmatpush1.msra.mxu0 %v3547
  %3615 = vmatprep.subr.mxu0 0.0
  %3616 = vmatpush2.msra.mxu0 %v3578
  %3617 = vmatprep.subr.mxu0 0.0
  %3618 = vmatpush2.msra.mxu0 %v3577
  %3619 = vmatprep.subr.mxu0 0.0
  %3620 = vmatpush2.msra.mxu0 %v3576
  %3621 = vmatprep.subr.mxu0 0.0
  %3622 = vmatpush2.msra.mxu0 %v3575
  %3623 = vmatprep.subr.mxu0 0.0
  %3624 = vmatpush2.msra.mxu0 %v3574
  %3625 = vmatprep.subr.mxu0 0.0
  %3626 = vmatpush2.msra.mxu0 %v3573
  %3627 = vmatprep.subr.mxu0 0.0
  %3628 = vmatpush2.msra.mxu0 %v3572
  %3629 = vmatprep.subr.mxu0 0.0
  %3630 = vmatpush2.msra.mxu0 %v3571
  %3631 = vmatprep.subr.mxu0 0.0
  %3632 = vmatpush2.msra.mxu0 %v3570
  %3633 = vmatprep.subr.mxu0 0.0
  %3634 = vmatpush2.msra.mxu0 %v3569
  %3635 = vmatprep.subr.mxu0 0.0
  %3636 = vmatpush2.msra.mxu0 %v3568
  %3637 = vmatprep.subr.mxu0 0.0
  %3638 = vmatpush2.msra.mxu0 %v3567
  %3639 = vmatprep.subr.mxu0 0.0
  %3640 = vmatpush2.msra.mxu0 %v3566
  %3641 = vmatprep.subr.mxu0 0.0
  %3642 = vmatpush2.msra.mxu0 %v3565
  %3643 = vmatprep.subr.mxu0 0.0
  %3644 = vmatpush2.msra.mxu0 %v3564
  %3645 = vmatprep.subr.mxu0 0.0
  %3646 = vmatpush2.msra.mxu0 %v3563
  %3647 = vmatprep.mubr.f32.mxu0 %v3543
  %3648 = vmatmul.mubr.f32.gmra.mxu0 %v3542
  %v3649 = vpop.f32.mrf.mxu0
  %v3650 = vadd.f32 %v3582, %v3649
  %v3651 = vpop.f32.mrf.mxu0
  %3652 = vmatprep.mubr.f32.mxu0 %v3545
  %3653 = vmatmul.mubr.f32.gmra.mxu0 %v3544
  %v3654 = vpop.f32.mrf.mxu0
  %v3655 = vadd.f32 %v3582, %v3654
  %v3656 = vpop.f32.mrf.mxu0
  %3657 = vdwg.mxu0
  %v3658 = vadd.f32 %v3440, %v3650
  %v3659 = vadd.f32 %v3441, %v3655
  %v3660 = vsel %vm42, %v3658, 0.0
  %3661 = vadd.xlane.f32.xlu0 %v3660
  %v3662 = vpop.xlane.xlu0 %3661
  %v3663 = vsel %vm42, %v3659, 0.0
  %3664 = vadd.xlane.f32.xlu0 %v3663
  %v3665 = vpop.xlane.xlu0 %3664
  %v3666 = vmul.f32 %v3662, %v1576
  %v3667 = vmul.f32 %v3665, %v1576
  %v3668 = vsub.f32 %v3658, %v3666
  %v3669 = vsub.f32 %v3659, %v3667
  %v3670 = vmul.f32 %v3668, %v3668
  %v3671 = vmul.f32 %v3669, %v3669
  %v3672 = vsel %vm42, %v3670, 0.0
  %3673 = vadd.xlane.f32.xlu0 %v3672
  %v3674 = vpop.xlane.xlu0 %3673
  %v3675 = vsel %vm42, %v3671, 0.0
  %3676 = vadd.xlane.f32.xlu0 %v3675
  %v3677 = vpop.xlane.xlu0 %3676
  %v3678 = vmul.f32 %v3674, %v1576
  %v3679 = vmul.f32 %v3677, %v1576
  %v3680 = vadd.f32 %v3678, 1e-05
  %v3681 = vadd.f32 %v3679, 1e-05
  %v3682 = vrsqrt.pop %v3680
  %v3683 = vrsqrt.pop %v3681
  %v3684 = vmul.f32 %v3668, %v3682
  %v3685 = vmul.f32 %v3669, %v3683
  %v3686 = vlaneseq
  %v3687 = vshrl.u32 %v3686, 7
  %v3688 = vsub.s32 5, %v3687
  %v3689 = vrot.slane %v1874, %v3688
  %v3690 = vmul.f32 %v3684, %v3689
  %v3691 = vmul.f32 %v3685, %v3689
  %v3692 = vlaneseq
  %v3693 = vshrl.u32 %v3692, 7
  %v3694 = vsub.s32 6, %v3693
  %v3695 = vrot.slane %v1874, %v3694
  %v3696 = vadd.f32 %v3690, %v3695
  %v3697 = vadd.f32 %v3691, %v3695
  %v3698 = vld [vmem:[%s6] sm:$0xff]
  %v3699 = vld [vmem:[%s6 + $0x8] sm:$0xff]
  %v3700 = vld [vmem:[%s6 + $0x10] sm:$0xff]
  %v3701 = vld [vmem:[%s6 + $0x18] sm:$0xff]
  %v3702 = vld [vmem:[%s6 + $0x20] sm:$0x1]
  %v3703 = vlaneseq
  %v3704 = vshrl.u32 %v3703, 7
  %v3705 = vsub.s32 0, %v3704
  %v3706 = vrot.slane %v3702, %v3705
  %v3708 = vsel %vm42, %v3696, 0
  %v3711 = vsel %vm42, %v3697, 0
  %3713 = vmatprep.subr.mxu0 0.0
  %3714 = vmatpush1.msra.mxu0 0.0
  %3715 = vmatprep.subr.mxu0 0.0
  %3716 = vmatpush1.msra.mxu0 0.0
  %3717 = vmatprep.subr.mxu0 0.0
  %3718 = vmatpush1.msra.mxu0 0.0
  %3719 = vmatprep.subr.mxu0 0.0
  %3720 = vmatpush1.msra.mxu0 0.0
  %3721 = vmatprep.subr.mxu0 0.0
  %3722 = vmatpush1.msra.mxu0 0.0
  %3723 = vmatprep.subr.mxu0 0.0
  %3724 = vmatpush1.msra.mxu0 0.0
  %3725 = vmatprep.subr.mxu0 0.0
  %3726 = vmatpush1.msra.mxu0 0.0
  %3727 = vmatprep.subr.mxu0 0.0
  %3728 = vmatpush1.msra.mxu0 0.0
  %3729 = vmatprep.subr.mxu0 0.0
  %3730 = vmatpush1.msra.mxu0 0.0
  %3731 = vmatprep.subr.mxu0 0.0
  %3732 = vmatpush1.msra.mxu0 0.0
  %3733 = vmatprep.subr.mxu0 0.0
  %3734 = vmatpush1.msra.mxu0 0.0
  %3735 = vmatprep.subr.mxu0 0.0
  %3736 = vmatpush1.msra.mxu0 0.0
  %3737 = vmatprep.subr.mxu0 0.0
  %3738 = vmatpush1.msra.mxu0 %v3701
  %3739 = vmatprep.subr.mxu0 0.0
  %3740 = vmatpush1.msra.mxu0 %v3700
  %3741 = vmatprep.subr.mxu0 0.0
  %3742 = vmatpush1.msra.mxu0 %v3699
  %3743 = vmatprep.subr.mxu0 0.0
  %3744 = vmatpush1.msra.mxu0 %v3698
  %3745 = vmatprep.subr.mxu0 0.0
  %3746 = vmatpush2.msra.mxu0 0.0
  %3747 = vmatprep.subr.mxu0 0.0
  %3748 = vmatpush2.msra.mxu0 0.0
  %3749 = vmatprep.subr.mxu0 0.0
  %3750 = vmatpush2.msra.mxu0 0.0
  %3751 = vmatprep.subr.mxu0 0.0
  %3752 = vmatpush2.msra.mxu0 0.0
  %3753 = vmatprep.subr.mxu0 0.0
  %3754 = vmatpush2.msra.mxu0 0.0
  %3755 = vmatprep.subr.mxu0 0.0
  %3756 = vmatpush2.msra.mxu0 0.0
  %3757 = vmatprep.subr.mxu0 0.0
  %3758 = vmatpush2.msra.mxu0 0.0
  %3759 = vmatprep.subr.mxu0 0.0
  %3760 = vmatpush2.msra.mxu0 0.0
  %3761 = vmatprep.subr.mxu0 0.0
  %3762 = vmatpush2.msra.mxu0 0.0
  %3763 = vmatprep.subr.mxu0 0.0
  %3764 = vmatpush2.msra.mxu0 0.0
  %3765 = vmatprep.subr.mxu0 0.0
  %3766 = vmatpush2.msra.mxu0 0.0
  %3767 = vmatprep.subr.mxu0 0.0
  %3768 = vmatpush2.msra.mxu0 0.0
  %3769 = vmatprep.subr.mxu0 0.0
  %3770 = vmatpush2.msra.mxu0 0.0
  %3771 = vmatprep.subr.mxu0 0.0
  %3772 = vmatpush2.msra.mxu0 0.0
  %3773 = vmatprep.subr.mxu0 0.0
  %3774 = vmatpush2.msra.mxu0 0.0
  %3775 = vmatprep.subr.mxu0 0.0
  %3776 = vmatpush2.msra.mxu0 0.0
  %3777 = vmatprep.mubr.f32.mxu0 0.0
  %3778 = vmatmul.mubr.f32.gmra.mxu0 %v3708
  %v3779 = vpop.f32.mrf.mxu0
  %v3780 = vadd.f32 %v3706, %v3779
  %v3781 = vpop.f32.mrf.mxu0
  %3782 = vmatprep.mubr.f32.mxu0 0.0
  %3783 = vmatmul.mubr.f32.gmra.mxu0 %v3711
  %v3784 = vpop.f32.mrf.mxu0
  %v3785 = vadd.f32 %v3706, %v3784
  %v3786 = vpop.f32.mrf.mxu0
  %3787 = vdwg.mxu0
  %v3788 = vadd.f32 %v3780, %v3785
  %v3789 = vmul.f32 %v3788, 0.5
  %v3790 = vsub.f32 0.0, %v3789
  %v3791 = vmul.f32 %v3790, 1.442695
  %v3792 = vpow.pop %v3791
  %v3793 = vadd.f32 %v3792, 1.0
  %v3794 = vrcp.pop %v3793
  %v3795 = vmul.f32 1.0, %v3794
  %vm3796 = vcmask 31744
  %3797 = vst.msk [vmem:[%s7] sm:$0xff] %vm3796, %v3795
  // Predicated region
  $region30: #{tpu_custom_call.1} parent=0 // pred_check
    _
  $region31: #{tpu_custom_call.1} parent=0 // pred_check_branch
    %3799 = sbr.rel (0) target = $region33
  $region32: #{tpu_custom_call.1} parent=0 // pred_region
    _
  $region33: #{tpu_custom_call.1} parent=0 // pred_fallthru
    _
  // Predicated region
  $region34: #{tpu_custom_call.1} parent=0 // pred_check
    _
  $region35: #{tpu_custom_call.1} parent=0 // pred_check_branch
    %3801 = sbr.rel (0) target = $region37
  $region36: #{tpu_custom_call.1} parent=0 // pred_region
    _
  $region37: #{tpu_custom_call.1} parent=0 // pred_fallthru
    _

</llo_original>
